<compile_context>
chip_gen: v5e
topology: v5e:2x2
jax: 0.10.0
libtpu: 0.0.40
codegen_flags: <defaults>
</compile_context>

<pallas_src>
import functools

import jax
import jax.numpy as jnp
from jax import lax
from jax.experimental import pallas as pl
from jax.experimental.pallas import tpu as pltpu


# ---------------------------------------------------------------------------
# Pass 1: tiled matmuls with the IN-reduction as the last grid axis.
# ---------------------------------------------------------------------------
def _pass1_kernel(x_ref, w_ref, qa_ref, qb_ref, topk_ref,
                  out_ref, adp_ref, abs_out_ref, abs_adp_ref,
                  *, batch_size):
    k = pl.program_id(2)

    @pl.when(k == 0)
    def _init():
        out_ref[...] = jnp.zeros_like(out_ref)
        adp_ref[...] = jnp.zeros_like(adp_ref)

    # Contract lhs dim 1 with rhs dim 0 everywhere -> feeds the MXU directly,
    # no in-kernel transposes.
    dn = (((1,), (0,)), ((), ()))
    x = x_ref[...]                                             # (TB, TI) bf16

    # Main fused linear: accumulate f32 directly in the resident output block.
    out_ref[...] += lax.dot_general(x, w_ref[...], dn,
                                    preferred_element_type=jnp.float32)

    # Mixture-of-LoRA as two stacked matmuls over the flattened K*R axis.
    xi = lax.dot_general(x, qa_ref[...], dn,
                         preferred_element_type=jnp.float32)   # (TB, K*R) f32
    # Fold top-k into the small (TB, K*R) intermediate (f32 VPU math), then back
    # to the streaming dtype for the second MXU pass.
    xi = (xi * topk_ref[...]).astype(qb_ref.dtype)
    adp_ref[...] += lax.dot_general(xi, qb_ref[...], dn,
                                    preferred_element_type=jnp.float32)

    @pl.when(k == pl.num_programs(2) - 1)
    def _finalize():
        # Per-B-tile contribution to the batch means. Spread the (1, TO) row over
        # 8 sublanes so the output block stays (8, 128)-aligned; pass 2 just sums
        # all rows to finish mean(|.|, axis=0) over the full batch.
        inv = 1.0 / (8.0 * batch_size)
        o_part = jnp.sum(jnp.abs(out_ref[...]), axis=0, keepdims=True) * inv
        a_part = jnp.sum(jnp.abs(adp_ref[...]), axis=0, keepdims=True) * inv
        abs_out_ref[...] = jnp.broadcast_to(o_part, abs_out_ref.shape)
        abs_adp_ref[...] = jnp.broadcast_to(a_part, abs_adp_ref.shape)


# ---------------------------------------------------------------------------
# Pass 2: finish the cross-B-tile reduction, form scaling, apply it.
# ---------------------------------------------------------------------------
def _pass2_kernel(out_lin_ref, adp_ref, abs_out_ref, abs_adp_ref,
                  out_ref, scale_ref):
    # abs_* blocks hold the full stack of per-B-tile partial means for this
    # OUT tile -> summing rows yields mean(|.|) over the whole batch.
    l1 = jnp.sum(abs_out_ref[...], axis=0, keepdims=True)      # (1, TO)
    al1 = jnp.sum(abs_adp_ref[...], axis=0, keepdims=True)     # (1, TO)
    # NOTE: with the module's zero-init qa/qb, al1 == 0 and scaling = l1/1e-8 is
    # huge (but multiplied by a zero adapter, so the output is still correct).
    scaling = l1 * pl.reciprocal(al1 + 1e-8, approx=True)      # divide on the EUP
    out_ref[...] = out_lin_ref[...] + scaling * adp_ref[...]
    scale_ref[...] = scaling                                   # lane-dense (1, TO)


# ---------------------------------------------------------------------------
# Wrapper: layout plumbing + two pallas_calls.
# ---------------------------------------------------------------------------
def fused_linear_forward(x, w, qa, qb, topk, *,
                         tile_b=128, tile_out=128, tile_in=256,
                         compute_dtype=jnp.bfloat16):
    B, IN = x.shape
    OUT, _ = w.shape
    K, R, _ = qa.shape
    KR = K * R

    tb = min(tile_b, B)
    to = min(tile_out, OUT)
    ti = min(tile_in, IN)
    assert B % tb == 0 and OUT % to == 0 and IN % ti == 0, \
        "B/OUT/IN must be divisible by the tile sizes"
    nb, no, ni = B // tb, OUT // to, IN // ti

    # One-time layout plumbing in XLA so every in-kernel contraction is on the
    # shared lhs-last / rhs-first axes (no XLU transposes inside the kernel).
    w_t = jnp.transpose(w)                                     # (IN, OUT)
    qa_all = jnp.transpose(qa.reshape(KR, IN))                 # (IN, K*R)
    qb_all = jnp.transpose(qb, (0, 2, 1)).reshape(KR, OUT)     # (K*R, OUT)
    topk_exp = jnp.repeat(topk, R, axis=1).astype(jnp.float32)  # (B, K*R), k-major

    # Stream activations / weights as bf16; accumulation stays f32 in-kernel.
    xc = x.astype(compute_dtype)
    wc = w_t.astype(compute_dtype)
    qac = qa_all.astype(compute_dtype)
    qbc = qb_all.astype(compute_dtype)

    elem = jnp.dtype(compute_dtype).itemsize
    pass1_cost = pl.CostEstimate(
        flops=2 * B * OUT * IN + 2 * B * KR * IN + 2 * B * KR * OUT,
        transcendentals=0,
        bytes_accessed=(xc.size + wc.size + qac.size + qbc.size) * elem
        + topk_exp.size * 4 + (2 * B * OUT + 2 * nb * 8 * OUT) * 4,
    )

    out_lin, adapter, abs_out, abs_adp = pl.pallas_call(
        functools.partial(_pass1_kernel, batch_size=B),
        out_shape=(
            jax.ShapeDtypeStruct((B, OUT), jnp.float32),        # out_lin
            jax.ShapeDtypeStruct((B, OUT), jnp.float32),        # adapter
            jax.ShapeDtypeStruct((nb * 8, OUT), jnp.float32),   # partial mean |out|
            jax.ShapeDtypeStruct((nb * 8, OUT), jnp.float32),   # partial mean |adapter|
        ),
        grid_spec=pltpu.PrefetchScalarGridSpec(
            num_scalar_prefetch=0,
            grid=(nb, no, ni),
            in_specs=[
                pl.BlockSpec((tb, ti), lambda i, j, k: (i, k)),   # x
                pl.BlockSpec((ti, to), lambda i, j, k: (k, j)),   # w^T
                pl.BlockSpec((ti, KR), lambda i, j, k: (k, 0)),   # qa^T (stacked K*R)
                pl.BlockSpec((KR, to), lambda i, j, k: (0, j)),   # qb   (stacked K*R)
                pl.BlockSpec((tb, KR), lambda i, j, k: (i, 0)),   # topk expanded
            ],
            out_specs=[
                pl.BlockSpec((tb, to), lambda i, j, k: (i, j)),   # resident accumulator
                pl.BlockSpec((tb, to), lambda i, j, k: (i, j)),   # resident accumulator
                pl.BlockSpec((8, to), lambda i, j, k: (i, j)),
                pl.BlockSpec((8, to), lambda i, j, k: (i, j)),
            ],
        ),
        compiler_params=pltpu.CompilerParams(
            dimension_semantics=("parallel", "parallel", "arbitrary"),
            vmem_limit_bytes=48 * 1024 * 1024,   # safe on v5e/v6e (128 MiB) and v7x (64 MiB)
        ),
        cost_estimate=pass1_cost,
    )(xc, wc, qac, qbc, topk_exp)

    out, scaling = pl.pallas_call(
        _pass2_kernel,
        out_shape=(
            jax.ShapeDtypeStruct((B, OUT), jnp.float32),
            jax.ShapeDtypeStruct((1, OUT), jnp.float32),
        ),
        grid_spec=pltpu.PrefetchScalarGridSpec(
            num_scalar_prefetch=0,
            grid=(no, nb),                                      # OUT tiles parallel, B tiles last
            in_specs=[
                pl.BlockSpec((tb, to), lambda j, i: (i, j)),        # out_lin
                pl.BlockSpec((tb, to), lambda j, i: (i, j)),        # adapter
                pl.BlockSpec((nb * 8, to), lambda j, i: (0, j)),    # partial |out| means
                pl.BlockSpec((nb * 8, to), lambda j, i: (0, j)),    # partial |adapter| means
            ],
            out_specs=[
                pl.BlockSpec((tb, to), lambda j, i: (i, j)),
                pl.BlockSpec((1, to), lambda j, i: (0, j)),         # lane-dense scaling
            ],
        ),
        compiler_params=pltpu.CompilerParams(
            dimension_semantics=("parallel", "arbitrary"),
        ),
    )(out_lin, adapter, abs_out, abs_adp)

    # TODO(synk): the module caches `scaling` into self.scaling_factor on the first
    # forward only (Python-side state); here it is always computed and returned.
    return out, scaling[0]


# ---------------------------------------------------------------------------
# Pure-JAX reference (f32) of the module's 'mixture' + first_forward path.
# ---------------------------------------------------------------------------
def fused_linear_reference(x, w, qa, qb, topk):
    out_lin = x @ w.T
    xi = jnp.einsum('bh,krh->bkr', x, qa)
    xi = jnp.einsum('bkr,khr->bkh', xi, qb)
    adapter = jnp.sum(jnp.einsum('bkh,bk->bkh', xi, topk), axis=1)
    l1 = jnp.mean(jnp.abs(out_lin), axis=0)
    al1 = jnp.mean(jnp.abs(adapter), axis=0)
    scaling = l1 / (al1 + 1e-8)
    return out_lin + scaling[None] * adapter, scaling


if __name__ == "__main__":
    # Small-but-tileable shapes (multiple B/OUT/IN tiles so the cross-tile
    # batch-mean reduction and the IN-reduction axis are actually exercised).
    B, IN, OUT, RANK, N_FUSED = 256, 512, 256, 8, 4

    key = jax.random.PRNGKey(0)
    k_x, k_w, k_qa, k_qb, k_t = jax.random.split(key, 5)

    x = jax.random.normal(k_x, (B, IN), dtype=jnp.float32)
    w = jax.random.uniform(k_w, (OUT, IN), dtype=jnp.float32,
                           minval=-1.0 / float(IN) ** 0.5,
                           maxval=1.0 / float(IN) ** 0.5)
    # The module zero-inits qa/qb for 'mixture' (adapter path trivially zero);
    # use small random values of the same shapes to exercise the full fused path.
    qa = 0.02 * jax.random.normal(k_qa, (N_FUSED, RANK, IN), dtype=jnp.float32)
    qb = 0.02 * jax.random.normal(k_qb, (N_FUSED, OUT, RANK), dtype=jnp.float32)
    topk = jax.nn.softmax(jax.random.normal(k_t, (B, N_FUSED), dtype=jnp.float32), axis=-1)

    fwd = jax.jit(fused_linear_forward)
    out, scale = fwd(x, w, qa, qb, topk)
    out = jax.block_until_ready(out)
    scale = jax.block_until_ready(scale)

    ref_out, ref_scale = fused_linear_reference(x, w, qa, qb, topk)

    assert out.shape == (B, OUT) and scale.shape == (OUT,)
    # bf16 streaming (f32 accumulation) => looser tolerance vs the f32 reference.
    assert jnp.allclose(out, ref_out, atol=3e-2, rtol=3e-2), "output mismatch vs reference"
    assert jnp.allclose(scale, ref_scale, rtol=3e-2, atol=1e-3), "scaling mismatch vs reference"

    print("KERNEL_OK")
</pallas_src>

<mosaic_0001>
module attributes {stable_mosaic.version = 11 : i64} {
  func.func @_pass1_kernel(%arg0: i32, %arg1: i32, %arg2: i32, %arg3: memref<128x256xbf16, #tpu.memory_space<vmem>>, %arg4: memref<256x128xbf16, #tpu.memory_space<vmem>>, %arg5: memref<256x32xbf16, #tpu.memory_space<vmem>>, %arg6: memref<32x128xbf16, #tpu.memory_space<vmem>>, %arg7: memref<128x32xf32, #tpu.memory_space<vmem>>, %arg8: memref<128x128xf32, #tpu.memory_space<vmem>>, %arg9: memref<128x128xf32, #tpu.memory_space<vmem>>, %arg10: memref<8x128xf32, #tpu.memory_space<vmem>>, %arg11: memref<8x128xf32, #tpu.memory_space<vmem>>) attributes {dimension_semantics = [#tpu.dimension_semantics<parallel>, #tpu.dimension_semantics<parallel>, #tpu.dimension_semantics<arbitrary>], iteration_bounds = array<i64: 2, 2, 2>, scalar_prefetch = 0 : i64, scratch_operands = 0 : i64, tpu.core_type = #tpu.core_type<tc>, window_params = [{transform_indices = @transform_0, window_bounds = array<i64: 128, 256>}, {transform_indices = @transform_1, window_bounds = array<i64: 256, 128>}, {transform_indices = @transform_2, window_bounds = array<i64: 256, 32>}, {transform_indices = @transform_3, window_bounds = array<i64: 32, 128>}, {transform_indices = @transform_4, window_bounds = array<i64: 128, 32>}, {transform_indices = @transform_5, window_bounds = array<i64: 128, 128>}, {transform_indices = @transform_6, window_bounds = array<i64: 128, 128>}, {transform_indices = @transform_7, window_bounds = array<i64: 8, 128>}, {transform_indices = @transform_8, window_bounds = array<i64: 8, 128>}]} {
    %c0_i32 = arith.constant 0 : i32
    %0 = arith.cmpi eq, %arg2, %c0_i32 : i32
    %1 = arith.extui %0 : i1 to i32
    %c0_i32_0 = arith.constant 0 : i32
    %2 = arith.cmpi ne, %1, %c0_i32_0 : i32
    scf.if %2 {
      %cst_21 = arith.constant 0.000000e+00 : f32
      %22 = vector.broadcast %cst_21 : f32 to vector<128x128xf32>
      %c0_22 = arith.constant 0 : index
      %c0_23 = arith.constant 0 : index
      %23 = vector.load %arg8[%c0_22, %c0_23] : memref<128x128xf32, #tpu.memory_space<vmem>>, vector<128x128xf32>
      tpu.vector_store %arg8[%c0_22, %c0_23], %22 {strides = array<i32>} : memref<128x128xf32, #tpu.memory_space<vmem>>, vector<128x128xf32>,
      %cst_24 = arith.constant 0.000000e+00 : f32
      %24 = vector.broadcast %cst_24 : f32 to vector<128x128xf32>
      %c0_25 = arith.constant 0 : index
      %c0_26 = arith.constant 0 : index
      %25 = vector.load %arg9[%c0_25, %c0_26] : memref<128x128xf32, #tpu.memory_space<vmem>>, vector<128x128xf32>
      tpu.vector_store %arg9[%c0_25, %c0_26], %24 {strides = array<i32>} : memref<128x128xf32, #tpu.memory_space<vmem>>, vector<128x128xf32>,
    } else {
    }
    %c0 = arith.constant 0 : index
    %c0_1 = arith.constant 0 : index
    %3 = vector.load %arg3[%c0, %c0_1] : memref<128x256xbf16, #tpu.memory_space<vmem>>, vector<128x256xbf16>
    %c0_2 = arith.constant 0 : index
    %c0_3 = arith.constant 0 : index
    %4 = vector.load %arg8[%c0_2, %c0_3] : memref<128x128xf32, #tpu.memory_space<vmem>>, vector<128x128xf32>
    %c0_4 = arith.constant 0 : index
    %c0_5 = arith.constant 0 : index
    %5 = vector.load %arg4[%c0_4, %c0_5] : memref<256x128xbf16, #tpu.memory_space<vmem>>, vector<256x128xbf16>
    %cst = arith.constant dense<0.000000e+00> : vector<128x128xf32>
    %6 = tpu.matmul %3, %5, %cst {dimension_numbers = #tpu.dot_dimension_numbers<[1], [0], [0], [1], [0, 0, 1, 1], [], []>} : vector<128x256xbf16>, vector<256x128xbf16>, vector<128x128xf32> -> vector<128x128xf32>
    %7 = arith.addf %4, %6 : vector<128x128xf32>
    %c0_6 = arith.constant 0 : index
    %c0_7 = arith.constant 0 : index
    %8 = vector.load %arg8[%c0_6, %c0_7] : memref<128x128xf32, #tpu.memory_space<vmem>>, vector<128x128xf32>
    tpu.vector_store %arg8[%c0_6, %c0_7], %7 {strides = array<i32>} : memref<128x128xf32, #tpu.memory_space<vmem>>, vector<128x128xf32>,
    %c0_8 = arith.constant 0 : index
    %c0_9 = arith.constant 0 : index
    %9 = vector.load %arg5[%c0_8, %c0_9] : memref<256x32xbf16, #tpu.memory_space<vmem>>, vector<256x32xbf16>
    %cst_10 = arith.constant dense<0.000000e+00> : vector<128x32xf32>
    %10 = tpu.matmul %3, %9, %cst_10 {dimension_numbers = #tpu.dot_dimension_numbers<[1], [0], [0], [1], [0, 0, 1, 1], [], []>} : vector<128x256xbf16>, vector<256x32xbf16>, vector<128x32xf32> -> vector<128x32xf32>
    %c0_11 = arith.constant 0 : index
    %c0_12 = arith.constant 0 : index
    %11 = vector.load %arg7[%c0_11, %c0_12] : memref<128x32xf32, #tpu.memory_space<vmem>>, vector<128x32xf32>
    %12 = arith.mulf %10, %11 : vector<128x32xf32>
    %13 = arith.truncf %12 : vector<128x32xf32> to vector<128x32xbf16>
    %c0_13 = arith.constant 0 : index
    %c0_14 = arith.constant 0 : index
    %14 = vector.load %arg9[%c0_13, %c0_14] : memref<128x128xf32, #tpu.memory_space<vmem>>, vector<128x128xf32>
    %c0_15 = arith.constant 0 : index
    %c0_16 = arith.constant 0 : index
    %15 = vector.load %arg6[%c0_15, %c0_16] : memref<32x128xbf16, #tpu.memory_space<vmem>>, vector<32x128xbf16>
    %cst_17 = arith.constant dense<0.000000e+00> : vector<128x128xf32>
    %16 = tpu.matmul %13, %15, %cst_17 {dimension_numbers = #tpu.dot_dimension_numbers<[1], [0], [0], [1], [0, 0, 1, 1], [], []>} : vector<128x32xbf16>, vector<32x128xbf16>, vector<128x128xf32> -> vector<128x128xf32>
    %17 = arith.addf %14, %16 : vector<128x128xf32>
    %c0_18 = arith.constant 0 : index
    %c0_19 = arith.constant 0 : index
    %18 = vector.load %arg9[%c0_18, %c0_19] : memref<128x128xf32, #tpu.memory_space<vmem>>, vector<128x128xf32>
    tpu.vector_store %arg9[%c0_18, %c0_19], %17 {strides = array<i32>} : memref<128x128xf32, #tpu.memory_space<vmem>>, vector<128x128xf32>,
    %c1_i32 = arith.constant 1 : i32
    %19 = arith.cmpi eq, %arg2, %c1_i32 : i32
    %20 = arith.extui %19 : i1 to i32
    %c0_i32_20 = arith.constant 0 : i32
    %21 = arith.cmpi ne, %20, %c0_i32_20 : i32
    scf.if %21 {
      %c0_21 = arith.constant 0 : index
      %c0_22 = arith.constant 0 : index
      %22 = vector.load %arg8[%c0_21, %c0_22] : memref<128x128xf32, #tpu.memory_space<vmem>>, vector<128x128xf32>
      %23 = math.absf %22 : vector<128x128xf32>
      %cst_23 = arith.constant dense<0.000000e+00> : vector<128xf32>
      %24 = vector.multi_reduction <add>, %23, %cst_23 [0] : vector<128x128xf32> to vector<128xf32>
      %25 = vector.shape_cast %24 : vector<128xf32> to vector<1x128xf32>
      %cst_24 = arith.constant 4.8828125E-4 : f32
      %26 = vector.broadcast %cst_24 : f32 to vector<1x128xf32>
      %27 = arith.mulf %25, %26 : vector<1x128xf32>
      %c0_25 = arith.constant 0 : index
      %c0_26 = arith.constant 0 : index
      %28 = vector.load %arg9[%c0_25, %c0_26] : memref<128x128xf32, #tpu.memory_space<vmem>>, vector<128x128xf32>
      %29 = math.absf %28 : vector<128x128xf32>
      %cst_27 = arith.constant dense<0.000000e+00> : vector<128xf32>
      %30 = vector.multi_reduction <add>, %29, %cst_27 [0] : vector<128x128xf32> to vector<128xf32>
      %31 = vector.shape_cast %30 : vector<128xf32> to vector<1x128xf32>
      %cst_28 = arith.constant 4.8828125E-4 : f32
      %32 = vector.broadcast %cst_28 : f32 to vector<1x128xf32>
      %33 = arith.mulf %31, %32 : vector<1x128xf32>
      %34 = vector.shape_cast %27 : vector<1x128xf32> to vector<1x128xf32>
      %35 = vector.broadcast %34 : vector<1x128xf32> to vector<8x128xf32>
      %c0_29 = arith.constant 0 : index
      %c0_30 = arith.constant 0 : index
      %36 = vector.load %arg10[%c0_29, %c0_30] : memref<8x128xf32, #tpu.memory_space<vmem>>, vector<8x128xf32>
      tpu.vector_store %arg10[%c0_29, %c0_30], %35 {strides = array<i32>} : memref<8x128xf32, #tpu.memory_space<vmem>>, vector<8x128xf32>,
      %37 = vector.shape_cast %33 : vector<1x128xf32> to vector<1x128xf32>
      %38 = vector.broadcast %37 : vector<1x128xf32> to vector<8x128xf32>
      %c0_31 = arith.constant 0 : index
      %c0_32 = arith.constant 0 : index
      %39 = vector.load %arg11[%c0_31, %c0_32] : memref<8x128xf32, #tpu.memory_space<vmem>>, vector<8x128xf32>
      tpu.vector_store %arg11[%c0_31, %c0_32], %38 {strides = array<i32>} : memref<8x128xf32, #tpu.memory_space<vmem>>, vector<8x128xf32>,
    } else {
    }
    return
  }
  func.func @transform_0(%arg0: i32, %arg1: i32, %arg2: i32) -> (i32, i32) {
    %c0_i32 = arith.constant 0 : i32
    return %arg0, %arg2 : i32, i32
  }
  func.func @transform_1(%arg0: i32, %arg1: i32, %arg2: i32) -> (i32, i32) {
    %c0_i32 = arith.constant 0 : i32
    return %arg2, %arg1 : i32, i32
  }
  func.func @transform_2(%arg0: i32, %arg1: i32, %arg2: i32) -> (i32, i32) {
    %c0_i32 = arith.constant 0 : i32
    %c0_i32_0 = arith.constant 0 : i32
    return %arg2, %c0_i32 : i32, i32
  }
  func.func @transform_3(%arg0: i32, %arg1: i32, %arg2: i32) -> (i32, i32) {
    %c0_i32 = arith.constant 0 : i32
    %c0_i32_0 = arith.constant 0 : i32
    return %c0_i32, %arg1 : i32, i32
  }
  func.func @transform_4(%arg0: i32, %arg1: i32, %arg2: i32) -> (i32, i32) {
    %c0_i32 = arith.constant 0 : i32
    %c0_i32_0 = arith.constant 0 : i32
    return %arg0, %c0_i32 : i32, i32
  }
  func.func @transform_5(%arg0: i32, %arg1: i32, %arg2: i32) -> (i32, i32) {
    %c0_i32 = arith.constant 0 : i32
    return %arg0, %arg1 : i32, i32
  }
  func.func @transform_6(%arg0: i32, %arg1: i32, %arg2: i32) -> (i32, i32) {
    %c0_i32 = arith.constant 0 : i32
    return %arg0, %arg1 : i32, i32
  }
  func.func @transform_7(%arg0: i32, %arg1: i32, %arg2: i32) -> (i32, i32) {
    %c0_i32 = arith.constant 0 : i32
    return %arg0, %arg1 : i32, i32
  }
  func.func @transform_8(%arg0: i32, %arg1: i32, %arg2: i32) -> (i32, i32) {
    %c0_i32 = arith.constant 0 : i32
    return %arg0, %arg1 : i32, i32
  }
}

module attributes {stable_mosaic.version = 11 : i64} {
  func.func @_pass2_kernel(%arg0: i32, %arg1: i32, %arg2: memref<128x128xf32, #tpu.memory_space<vmem>>, %arg3: memref<128x128xf32, #tpu.memory_space<vmem>>, %arg4: memref<16x128xf32, #tpu.memory_space<vmem>>, %arg5: memref<16x128xf32, #tpu.memory_space<vmem>>, %arg6: memref<128x128xf32, #tpu.memory_space<vmem>>, %arg7: memref<1x128xf32, #tpu.memory_space<vmem>>) attributes {dimension_semantics = [#tpu.dimension_semantics<parallel>, #tpu.dimension_semantics<arbitrary>], iteration_bounds = array<i64: 2, 2>, scalar_prefetch = 0 : i64, scratch_operands = 0 : i64, tpu.core_type = #tpu.core_type<tc>, window_params = [{transform_indices = @transform_0, window_bounds = array<i64: 128, 128>}, {transform_indices = @transform_1, window_bounds = array<i64: 128, 128>}, {transform_indices = @transform_2, window_bounds = array<i64: 16, 128>}, {transform_indices = @transform_3, window_bounds = array<i64: 16, 128>}, {transform_indices = @transform_4, window_bounds = array<i64: 128, 128>}, {transform_indices = @transform_5, window_bounds = array<i64: 1, 128>}]} {
    %c0 = arith.constant 0 : index
    %c0_0 = arith.constant 0 : index
    %0 = vector.load %arg4[%c0, %c0_0] : memref<16x128xf32, #tpu.memory_space<vmem>>, vector<16x128xf32>
    %cst = arith.constant dense<0.000000e+00> : vector<128xf32>
    %1 = vector.multi_reduction <add>, %0, %cst [0] : vector<16x128xf32> to vector<128xf32>
    %2 = vector.shape_cast %1 : vector<128xf32> to vector<1x128xf32>
    %c0_1 = arith.constant 0 : index
    %c0_2 = arith.constant 0 : index
    %3 = vector.load %arg5[%c0_1, %c0_2] : memref<16x128xf32, #tpu.memory_space<vmem>>, vector<16x128xf32>
    %cst_3 = arith.constant dense<0.000000e+00> : vector<128xf32>
    %4 = vector.multi_reduction <add>, %3, %cst_3 [0] : vector<16x128xf32> to vector<128xf32>
    %5 = vector.shape_cast %4 : vector<128xf32> to vector<1x128xf32>
    %cst_4 = arith.constant 9.99999993E-9 : f32
    %6 = vector.broadcast %cst_4 : f32 to vector<1x128xf32>
    %7 = arith.addf %5, %6 : vector<1x128xf32>
    %8 = tpu.reciprocal %7 {approx = true} : vector<1x128xf32> -> vector<1x128xf32>
    %9 = arith.mulf %2, %8 : vector<1x128xf32>
    %c0_5 = arith.constant 0 : index
    %c0_6 = arith.constant 0 : index
    %10 = vector.load %arg2[%c0_5, %c0_6] : memref<128x128xf32, #tpu.memory_space<vmem>>, vector<128x128xf32>
    %c0_7 = arith.constant 0 : index
    %c0_8 = arith.constant 0 : index
    %11 = vector.load %arg3[%c0_7, %c0_8] : memref<128x128xf32, #tpu.memory_space<vmem>>, vector<128x128xf32>
    %12 = vector.broadcast %9 : vector<1x128xf32> to vector<128x128xf32>
    %13 = arith.mulf %12, %11 : vector<128x128xf32>
    %14 = arith.addf %10, %13 : vector<128x128xf32>
    %c0_9 = arith.constant 0 : index
    %c0_10 = arith.constant 0 : index
    %15 = vector.load %arg6[%c0_9, %c0_10] : memref<128x128xf32, #tpu.memory_space<vmem>>, vector<128x128xf32>
    tpu.vector_store %arg6[%c0_9, %c0_10], %14 {strides = array<i32>} : memref<128x128xf32, #tpu.memory_space<vmem>>, vector<128x128xf32>,
    %c0_11 = arith.constant 0 : index
    %c0_12 = arith.constant 0 : index
    %16 = vector.load %arg7[%c0_11, %c0_12] : memref<1x128xf32, #tpu.memory_space<vmem>>, vector<1x128xf32>
    tpu.vector_store %arg7[%c0_11, %c0_12], %9 {strides = array<i32>} : memref<1x128xf32, #tpu.memory_space<vmem>>, vector<1x128xf32>,
    return
  }
  func.func @transform_0(%arg0: i32, %arg1: i32) -> (i32, i32) {
    %c0_i32 = arith.constant 0 : i32
    return %arg1, %arg0 : i32, i32
  }
  func.func @transform_1(%arg0: i32, %arg1: i32) -> (i32, i32) {
    %c0_i32 = arith.constant 0 : i32
    return %arg1, %arg0 : i32, i32
  }
  func.func @transform_2(%arg0: i32, %arg1: i32) -> (i32, i32) {
    %c0_i32 = arith.constant 0 : i32
    %c0_i32_0 = arith.constant 0 : i32
    return %c0_i32, %arg0 : i32, i32
  }
  func.func @transform_3(%arg0: i32, %arg1: i32) -> (i32, i32) {
    %c0_i32 = arith.constant 0 : i32
    %c0_i32_0 = arith.constant 0 : i32
    return %c0_i32, %arg0 : i32, i32
  }
  func.func @transform_4(%arg0: i32, %arg1: i32) -> (i32, i32) {
    %c0_i32 = arith.constant 0 : i32
    return %arg1, %arg0 : i32, i32
  }
  func.func @transform_5(%arg0: i32, %arg1: i32) -> (i32, i32) {
    %c0_i32 = arith.constant 0 : i32
    %c0_i32_0 = arith.constant 0 : i32
    return %c0_i32, %arg0 : i32, i32
  }
}

</mosaic_0001>

<llo_original>
// kernel: fused_linear_forward.3
$region0: #{fused_linear_forward.3}
  #allocation0 [shape = 'u32[]', space=smem, size = 0x4, offset = 0x4, fixed_abs, tag = 'smem constant byte address 0x4 - core index']
  #allocation1 [shape = 'u32[72,128]{1,0:T(1,128)}', space=vmem, size = 0x9000, scoped, tag = 'internal scratch']
  %s0 = inlined_call_operand.vmem [shape: f32[256,256], index: 0, kind: input, shape index: {}]
  %s1 = inlined_call_operand.vmem [shape: f32[256,256], index: 1, kind: input, shape index: {}]
  %s2 = inlined_call_operand.vmem [shape: f32[16,256], index: 2, kind: input, shape index: {}]
  %s3 = inlined_call_operand.vmem [shape: f32[16,256], index: 3, kind: input, shape index: {}]
  %s4 = inlined_call_operand.hbm [shape: f32[256,256], index: 4, kind: output, shape index: {0}]
  %s5 = inlined_call_operand.hbm [shape: f32[1,256], index: 5, kind: output, shape index: {1}]
  %6 = xla_tuple %s4, %s5
  %s7 = sld [smem:[#allocation0]]
  $region209: #{fused_linear_forward.3} parent=0
    _
  %s9 = ssub.s32 1, %s7
  %s10 = scalar_select 0, %s9, %s7
  $region1: #{fused_linear_forward.3} parent=0
    #allocation2 [shape = 'u8[131072]{0}', space=vmem, size = 0x20000, scoped, tag = 'input window, operand 0']
    #allocation3 [shape = 'u8[131072]{0}', space=vmem, size = 0x20000, scoped, tag = 'input window, operand 1']
    #allocation4 [shape = 'u8[16384]{0}', space=vmem, size = 0x4000, scoped, tag = 'input window, operand 2']
    #allocation5 [shape = 'u8[16384]{0}', space=vmem, size = 0x4000, scoped, tag = 'input window, operand 3']
    #allocation6 [shape = 'u8[131072]{0}', space=vmem, size = 0x20000, scoped, tag = 'output window, operand 0']
    #allocation7 [shape = 's32[2]{0}', space=sflag, size = 0x8, scoped, tag = 'scoped memory for fused_linear_forward.3']
    #allocation8 [shape = 'u8[1024]{0}', space=vmem, size = 0x400, scoped, tag = 'output window, operand 1']
    #allocation9 [shape = 's32[2]{0}', space=sflag, size = 0x8, scoped, tag = 'scoped memory for fused_linear_forward.3']
    %11 = vsyncpa [#allocation7], 0
    %s12 = scalar_lea.sflag [#allocation7], 1
    %13 = vsyncpa %s12, 0
    %14 = vsyncpa [#allocation9], 0
    %s15 = scalar_lea.sflag [#allocation9], 1
    %16 = vsyncpa %s15, 0
    loop: start=0, step=1, limit=6
    $region2: #{fused_linear_forward.3} parent=1 // loop_pre_header
      _
    $region3: #{fused_linear_forward.3} parent=1 // loop_header
      %s18 = sphi 0, %s22
      %p19 = scmp.ge.s32.totalorder %s18, 6
      %s25 = sphi 0, %s37
      %s26 = sphi 0, %s33
      %s27 = sphi 0, %s25
      %s28 = sphi 0, %s26
      %s29 = sphi 0, %s27
      %s30 = sphi 0, %s28
      %s42 = sphi 0, %s44
      %s45 = sphi 0, %s42
      %s46 = sphi 0, %s45
      %s62 = sphi 0, %s46
      %s70 = sphi 0, %s72
      %s73 = sphi 0, %s70
      %s74 = sphi 0, %s73
      %s90 = sphi 0, %s74
      %s96 = sphi 0, %s98
      %s99 = sphi 0, %s96
      %s100 = sphi 0, %s99
      %s116 = sphi 0, %s100
      %s122 = sphi 0, %s124
      %s125 = sphi 0, %s122
      %s126 = sphi 0, %s125
      %s142 = sphi 0, %s126
      %s150 = sphi 0, %s152
      %s153 = sphi 0, %s150
      %s154 = sphi 0, %s153
      %s170 = sphi 0, %s154
      %s176 = sphi 0, %s178
      %s179 = sphi 0, %s176
      %s180 = sphi 0, %s179
      %s196 = sphi 0, %s180
    $region4: #{fused_linear_forward.3} parent=1 // loop_header_branch
      %21 = sbr.rel (%p19) target = $region8
    $region5: #{fused_linear_forward.3} parent=1 // loop_body
      %s23 = ssub.s32 %s18, 1
      %s24 = ssub.s32 %s18, 2
      %s31 = sadd.s32 1, %s26
      %p32 = scmp.ge.s32.totalorder %s31, 2
      %s33 = scalar_select %p32, 0, %s31
      %s34 = sadd.s32 1, %s25
      %s35 = scalar_select %p32, %s34, %s25
      %p36 = scmp.ge.s32.totalorder %s35, 2
      %s37 = scalar_select %p36, 0, %s35
      %s38 = ssub.s32 %s26, %s33
      %s39 = ssub.s32 %s25, %s37
      %s40 = sor.u32 %s38, %s39
      %p41 = scmp.eq.s32.totalorder %s40, 0
      %s43 = sadd.s32 %s42, 1
      %s44 = scalar_select %p41, %s42, %s43
      %p47 = pneg %p41
      %p48 = scmp.eq.s32.totalorder %s18, 3
      %p49 = por %p47, %p48
      %p50 = scmp.ne.s32.totalorder %s42, %s45
      %p51 = scmp.eq.s32.totalorder %s18, 0
      %p52 = por %p50, %p51
      %p53 = scmp.ne.s32.totalorder %s42, %s45
      %p54 = scmp.eq.s32.totalorder %s23, 3
      %p55 = por %p53, %p54
      %p56 = scmp.ne.s32.totalorder %s45, %s46
      %p57 = scmp.eq.s32.totalorder %s23, 0
      %p58 = por %p56, %p57
      %p59 = scmp.ne.s32.totalorder %s45, %s46
      %p60 = scmp.eq.s32.totalorder %s24, 3
      %p61 = por %p59, %p60
      %p63 = scmp.ne.s32.totalorder %s46, %s62
      %p64 = scmp.eq.s32.totalorder %s24, 0
      %p65 = por %p63, %p64
      %s66 = ssub.s32 %s26, %s33
      %s67 = ssub.s32 %s25, %s37
      %s68 = sor.u32 %s66, %s67
      %p69 = scmp.eq.s32.totalorder %s68, 0
      %s71 = sadd.s32 %s70, 1
      %s72 = scalar_select %p69, %s70, %s71
      %p75 = pneg %p69
      %p76 = scmp.eq.s32.totalorder %s18, 3
      %p77 = por %p75, %p76
      %p78 = scmp.ne.s32.totalorder %s70, %s73
      %p79 = scmp.eq.s32.totalorder %s18, 0
      %p80 = por %p78, %p79
      %p81 = scmp.ne.s32.totalorder %s70, %s73
      %p82 = scmp.eq.s32.totalorder %s23, 3
      %p83 = por %p81, %p82
      %p84 = scmp.ne.s32.totalorder %s73, %s74
      %p85 = scmp.eq.s32.totalorder %s23, 0
      %p86 = por %p84, %p85
      %p87 = scmp.ne.s32.totalorder %s73, %s74
      %p88 = scmp.eq.s32.totalorder %s24, 3
      %p89 = por %p87, %p88
      %p91 = scmp.ne.s32.totalorder %s74, %s90
      %p92 = scmp.eq.s32.totalorder %s24, 0
      %p93 = por %p91, %p92
      %s94 = ssub.s32 %s25, %s37
      %p95 = scmp.eq.s32.totalorder %s94, 0
      %s97 = sadd.s32 %s96, 1
      %s98 = scalar_select %p95, %s96, %s97
      %p101 = pneg %p95
      %p102 = scmp.eq.s32.totalorder %s18, 3
      %p103 = por %p101, %p102
      %p104 = scmp.ne.s32.totalorder %s96, %s99
      %p105 = scmp.eq.s32.totalorder %s18, 0
      %p106 = por %p104, %p105
      %p107 = scmp.ne.s32.totalorder %s96, %s99
      %p108 = scmp.eq.s32.totalorder %s23, 3
      %p109 = por %p107, %p108
      %p110 = scmp.ne.s32.totalorder %s99, %s100
      %p111 = scmp.eq.s32.totalorder %s23, 0
      %p112 = por %p110, %p111
      %p113 = scmp.ne.s32.totalorder %s99, %s100
      %p114 = scmp.eq.s32.totalorder %s24, 3
      %p115 = por %p113, %p114
      %p117 = scmp.ne.s32.totalorder %s100, %s116
      %p118 = scmp.eq.s32.totalorder %s24, 0
      %p119 = por %p117, %p118
      %s120 = ssub.s32 %s25, %s37
      %p121 = scmp.eq.s32.totalorder %s120, 0
      %s123 = sadd.s32 %s122, 1
      %s124 = scalar_select %p121, %s122, %s123
      %p127 = pneg %p121
      %p128 = scmp.eq.s32.totalorder %s18, 3
      %p129 = por %p127, %p128
      %p130 = scmp.ne.s32.totalorder %s122, %s125
      %p131 = scmp.eq.s32.totalorder %s18, 0
      %p132 = por %p130, %p131
      %p133 = scmp.ne.s32.totalorder %s122, %s125
      %p134 = scmp.eq.s32.totalorder %s23, 3
      %p135 = por %p133, %p134
      %p136 = scmp.ne.s32.totalorder %s125, %s126
      %p137 = scmp.eq.s32.totalorder %s23, 0
      %p138 = por %p136, %p137
      %p139 = scmp.ne.s32.totalorder %s125, %s126
      %p140 = scmp.eq.s32.totalorder %s24, 3
      %p141 = por %p139, %p140
      %p143 = scmp.ne.s32.totalorder %s126, %s142
      %p144 = scmp.eq.s32.totalorder %s24, 0
      %p145 = por %p143, %p144
      %s146 = ssub.s32 %s26, %s33
      %s147 = ssub.s32 %s25, %s37
      %s148 = sor.u32 %s146, %s147
      %p149 = scmp.eq.s32.totalorder %s148, 0
      %s151 = sadd.s32 %s150, 1
      %s152 = scalar_select %p149, %s150, %s151
      %p155 = pneg %p149
      %p156 = scmp.eq.s32.totalorder %s18, 3
      %p157 = por %p155, %p156
      %p158 = scmp.ne.s32.totalorder %s150, %s153
      %p159 = scmp.eq.s32.totalorder %s18, 0
      %p160 = por %p158, %p159
      %p161 = scmp.ne.s32.totalorder %s150, %s153
      %p162 = scmp.eq.s32.totalorder %s23, 3
      %p163 = por %p161, %p162
      %p164 = scmp.ne.s32.totalorder %s153, %s154
      %p165 = scmp.eq.s32.totalorder %s23, 0
      %p166 = por %p164, %p165
      %p167 = scmp.ne.s32.totalorder %s153, %s154
      %p168 = scmp.eq.s32.totalorder %s24, 3
      %p169 = por %p167, %p168
      %p171 = scmp.ne.s32.totalorder %s154, %s170
      %p172 = scmp.eq.s32.totalorder %s24, 0
      %p173 = por %p171, %p172
      %s174 = ssub.s32 %s25, %s37
      %p175 = scmp.eq.s32.totalorder %s174, 0
      %s177 = sadd.s32 %s176, 1
      %s178 = scalar_select %p175, %s176, %s177
      %p181 = pneg %p175
      %p182 = scmp.eq.s32.totalorder %s18, 3
      %p183 = por %p181, %p182
      %p184 = scmp.ne.s32.totalorder %s176, %s179
      %p185 = scmp.eq.s32.totalorder %s18, 0
      %p186 = por %p184, %p185
      %p187 = scmp.ne.s32.totalorder %s176, %s179
      %p188 = scmp.eq.s32.totalorder %s23, 3
      %p189 = por %p187, %p188
      %p190 = scmp.ne.s32.totalorder %s179, %s180
      %p191 = scmp.eq.s32.totalorder %s23, 0
      %p192 = por %p190, %p191
      %p193 = scmp.ne.s32.totalorder %s179, %s180
      %p194 = scmp.eq.s32.totalorder %s24, 3
      %p195 = por %p193, %p194
      %p197 = scmp.ne.s32.totalorder %s180, %s196
      %p198 = scmp.eq.s32.totalorder %s24, 0
      %p199 = por %p197, %p198
      %p200 = scmp.le.s32.totalorder 1, %s18
      %p201 = scmp.lt.s32.totalorder %s18, 5
      %p202 = pnand %p200, %p201
      %p203 = pneg %p202
      // Predicated region
      $region9: #{fused_linear_forward.3} parent=5 // pred_check
        _
      $region10: #{fused_linear_forward.3} parent=5 // pred_check_branch
        %205 = sbr.rel (%p202) target = $region12
      $region11: #{fused_linear_forward.3} parent=5 // pred_region
        %s206 = ssub.s32 %s18, 1
      $region12: #{fused_linear_forward.3} parent=5 // pred_fallthru
        _
      %p207 = scmp.lt.s32.totalorder %s18, 4
      // Predicated region
      $region13: #{fused_linear_forward.3} parent=5 // pred_check
        %p208 = pneg %p207
      $region14: #{fused_linear_forward.3} parent=5 // pred_check_branch
        %210 = sbr.rel (%p208) target = $region16
      $region15: #{fused_linear_forward.3} parent=5 // pred_region
        // Predicated region
        $region17: #{fused_linear_forward.3} parent=15 // pred_check
          %p211 = pneg %p52
        $region18: #{fused_linear_forward.3} parent=15 // pred_check_branch
          %213 = sbr.rel (%p211) target = $region20
        $region19: #{fused_linear_forward.3} parent=15 // pred_region
          %s214 = sand.u32 %s42, 1
          %s215 = sand.u32 %s42, 1
          %s216 = smul.addr %s215, 128
          %s217 = scalar_lea.vmem [#allocation2], %s216
          %s218 = smul.u32 16, %s26
          %s219 = smul.addr %s218, 2
          %s220 = sadd.s32 %s25, %s219
          %s221 = smul.addr %s220, 8
          %s222 = scalar_lea.vmem %s0, %s221
          // Predicated region
          $region21: #{fused_linear_forward.3} parent=19 // pred_check
            _
          $region22: #{fused_linear_forward.3} parent=19 // pred_check_branch
            %224 = sbr.rel (0) target = $region24
          $region23: #{fused_linear_forward.3} parent=19 // pred_region
            // Predicated region
            $region25: #{fused_linear_forward.3} parent=23 // pred_check
              _
            $region26: #{fused_linear_forward.3} parent=23 // pred_check_branch
              %226 = sbr.rel (0) target = $region28
            $region27: #{fused_linear_forward.3} parent=23 // pred_region
              // Predicated region
              $region40: #{fused_linear_forward.3} parent=27 // pred_check
                _
              $region41: #{fused_linear_forward.3} parent=27 // pred_check_branch
                %272 = sbr.rel (0) target = $region43
              $region42: #{fused_linear_forward.3} parent=27 // pred_region
                loop: start=0, step=1, limit=1
                $region44: #{fused_linear_forward.3} parent=42 // loop_pre_header
                  _
                $region45: #{fused_linear_forward.3} parent=42 // loop_header
                  %s274 = sphi 0, %s278
                  %p275 = scmp.ge.s32.totalorder %s274, 1
                  %s279 = sphi %s222, %s222
                  %s280 = sphi %s217, %s217
                $region46: #{fused_linear_forward.3} parent=42 // loop_header_branch
                  %277 = sbr.rel (%p275) target = $region50
                $region47: #{fused_linear_forward.3} parent=42 // loop_body
                  %v281 = vld [vmem:[%s279] sm:$0xff]
                  %282 = vst [vmem:[%s280] sm:$0xff] %v281
                  %v283 = vld [vmem:[%s279 + $0x10] sm:$0xff]
                  %284 = vst [vmem:[%s280 + $0x8] sm:$0xff] %v283
                  %v285 = vld [vmem:[%s279 + $0x20] sm:$0xff]
                  %286 = vst [vmem:[%s280 + $0x10] sm:$0xff] %v285
                  %v287 = vld [vmem:[%s279 + $0x30] sm:$0xff]
                  %288 = vst [vmem:[%s280 + $0x18] sm:$0xff] %v287
                  %v289 = vld [vmem:[%s279 + $0x40] sm:$0xff]
                  %290 = vst [vmem:[%s280 + $0x20] sm:$0xff] %v289
                  %v291 = vld [vmem:[%s279 + $0x50] sm:$0xff]
                  %292 = vst [vmem:[%s280 + $0x28] sm:$0xff] %v291
                  %v293 = vld [vmem:[%s279 + $0x60] sm:$0xff]
                  %294 = vst [vmem:[%s280 + $0x30] sm:$0xff] %v293
                  %v295 = vld [vmem:[%s279 + $0x70] sm:$0xff]
                  %296 = vst [vmem:[%s280 + $0x38] sm:$0xff] %v295
                  %v297 = vld [vmem:[%s279 + $0x80] sm:$0xff]
                  %298 = vst [vmem:[%s280 + $0x40] sm:$0xff] %v297
                  %v299 = vld [vmem:[%s279 + $0x90] sm:$0xff]
                  %300 = vst [vmem:[%s280 + $0x48] sm:$0xff] %v299
                  %v301 = vld [vmem:[%s279 + $0xa0] sm:$0xff]
                  %302 = vst [vmem:[%s280 + $0x50] sm:$0xff] %v301
                  %v303 = vld [vmem:[%s279 + $0xb0] sm:$0xff]
                  %304 = vst [vmem:[%s280 + $0x58] sm:$0xff] %v303
                  %v305 = vld [vmem:[%s279 + $0xc0] sm:$0xff]
                  %306 = vst [vmem:[%s280 + $0x60] sm:$0xff] %v305
                  %v307 = vld [vmem:[%s279 + $0xd0] sm:$0xff]
                  %308 = vst [vmem:[%s280 + $0x68] sm:$0xff] %v307
                  %v309 = vld [vmem:[%s279 + $0xe0] sm:$0xff]
                  %310 = vst [vmem:[%s280 + $0x70] sm:$0xff] %v309
                  %v311 = vld [vmem:[%s279 + $0xf0] sm:$0xff]
                  %312 = vst [vmem:[%s280 + $0x78] sm:$0xff] %v311
                $region48: #{fused_linear_forward.3} parent=42 // loop_footer
                  %s278 = sadd.s32 1, %s274
                $region49: #{fused_linear_forward.3} parent=42 // loop_footer_branch
                  %273 = sbr.rel target = $region45
                $region50: #{fused_linear_forward.3} parent=42 // loop_exit
                  _
              $region43: #{fused_linear_forward.3} parent=27 // pred_fallthru
                _
              // Predicated region
              $region51: #{fused_linear_forward.3} parent=27 // pred_check
                _
              $region52: #{fused_linear_forward.3} parent=27 // pred_check_branch
                %314 = sbr.rel target = $region54
              $region53: #{fused_linear_forward.3} parent=27 // pred_region
                _
              $region54: #{fused_linear_forward.3} parent=27 // pred_fallthru
                _
            $region28: #{fused_linear_forward.3} parent=23 // pred_fallthru
              _
            // Predicated region
            $region29: #{fused_linear_forward.3} parent=23 // pred_check
              _
            $region30: #{fused_linear_forward.3} parent=23 // pred_check_branch
              %228 = sbr.rel target = $region32
            $region31: #{fused_linear_forward.3} parent=23 // pred_region
              %s230 = ssub.s32 256, 1
              loop: start=0, step=1, limit=1
              $region33: #{fused_linear_forward.3} parent=31 // loop_pre_header
                _
              $region34: #{fused_linear_forward.3} parent=31 // loop_header
                %s232 = sphi 0, %s236
                %p233 = scmp.ge.s32.totalorder %s232, 1
                %s237 = sphi %s222, %s222
                %s238 = sphi %s217, %s217
              $region35: #{fused_linear_forward.3} parent=31 // loop_header_branch
                %235 = sbr.rel (%p233) target = $region39
              $region36: #{fused_linear_forward.3} parent=31 // loop_body
                %v239 = vld [vmem:[%s237] sm:%s230]
                %240 = vst [vmem:[%s238] sm:%s230] %v239
                %v241 = vld [vmem:[%s237 + $0x10] sm:%s230]
                %242 = vst [vmem:[%s238 + $0x8] sm:%s230] %v241
                %v243 = vld [vmem:[%s237 + $0x20] sm:%s230]
                %244 = vst [vmem:[%s238 + $0x10] sm:%s230] %v243
                %v245 = vld [vmem:[%s237 + $0x30] sm:%s230]
                %246 = vst [vmem:[%s238 + $0x18] sm:%s230] %v245
                %v247 = vld [vmem:[%s237 + $0x40] sm:%s230]
                %248 = vst [vmem:[%s238 + $0x20] sm:%s230] %v247
                %v249 = vld [vmem:[%s237 + $0x50] sm:%s230]
                %250 = vst [vmem:[%s238 + $0x28] sm:%s230] %v249
                %v251 = vld [vmem:[%s237 + $0x60] sm:%s230]
                %252 = vst [vmem:[%s238 + $0x30] sm:%s230] %v251
                %v253 = vld [vmem:[%s237 + $0x70] sm:%s230]
                %254 = vst [vmem:[%s238 + $0x38] sm:%s230] %v253
                %v255 = vld [vmem:[%s237 + $0x80] sm:%s230]
                %256 = vst [vmem:[%s238 + $0x40] sm:%s230] %v255
                %v257 = vld [vmem:[%s237 + $0x90] sm:%s230]
                %258 = vst [vmem:[%s238 + $0x48] sm:%s230] %v257
                %v259 = vld [vmem:[%s237 + $0xa0] sm:%s230]
                %260 = vst [vmem:[%s238 + $0x50] sm:%s230] %v259
                %v261 = vld [vmem:[%s237 + $0xb0] sm:%s230]
                %262 = vst [vmem:[%s238 + $0x58] sm:%s230] %v261
                %v263 = vld [vmem:[%s237 + $0xc0] sm:%s230]
                %264 = vst [vmem:[%s238 + $0x60] sm:%s230] %v263
                %v265 = vld [vmem:[%s237 + $0xd0] sm:%s230]
                %266 = vst [vmem:[%s238 + $0x68] sm:%s230] %v265
                %v267 = vld [vmem:[%s237 + $0xe0] sm:%s230]
                %268 = vst [vmem:[%s238 + $0x70] sm:%s230] %v267
                %v269 = vld [vmem:[%s237 + $0xf0] sm:%s230]
                %270 = vst [vmem:[%s238 + $0x78] sm:%s230] %v269
              $region37: #{fused_linear_forward.3} parent=31 // loop_footer
                %s236 = sadd.s32 1, %s232
              $region38: #{fused_linear_forward.3} parent=31 // loop_footer_branch
                %231 = sbr.rel target = $region34
              $region39: #{fused_linear_forward.3} parent=31 // loop_exit
                _
            $region32: #{fused_linear_forward.3} parent=23 // pred_fallthru
              _
          $region24: #{fused_linear_forward.3} parent=19 // pred_fallthru
            _
          %315 = vnop
        $region20: #{fused_linear_forward.3} parent=15 // pred_fallthru
          _
        // Predicated region
        $region55: #{fused_linear_forward.3} parent=15 // pred_check
          %p316 = pneg %p80
        $region56: #{fused_linear_forward.3} parent=15 // pred_check_branch
          %318 = sbr.rel (%p316) target = $region58
        $region57: #{fused_linear_forward.3} parent=15 // pred_region
          %s319 = sand.u32 %s70, 1
          %s320 = sand.u32 %s70, 1
          %s321 = smul.addr %s320, 128
          %s322 = scalar_lea.vmem [#allocation3], %s321
          %s323 = smul.u32 16, %s26
          %s324 = smul.addr %s323, 2
          %s325 = sadd.s32 %s25, %s324
          %s326 = smul.addr %s325, 8
          %s327 = scalar_lea.vmem %s1, %s326
          // Predicated region
          $region59: #{fused_linear_forward.3} parent=57 // pred_check
            _
          $region60: #{fused_linear_forward.3} parent=57 // pred_check_branch
            %329 = sbr.rel (0) target = $region62
          $region61: #{fused_linear_forward.3} parent=57 // pred_region
            // Predicated region
            $region63: #{fused_linear_forward.3} parent=61 // pred_check
              _
            $region64: #{fused_linear_forward.3} parent=61 // pred_check_branch
              %331 = sbr.rel (0) target = $region66
            $region65: #{fused_linear_forward.3} parent=61 // pred_region
              // Predicated region
              $region78: #{fused_linear_forward.3} parent=65 // pred_check
                _
              $region79: #{fused_linear_forward.3} parent=65 // pred_check_branch
                %377 = sbr.rel (0) target = $region81
              $region80: #{fused_linear_forward.3} parent=65 // pred_region
                loop: start=0, step=1, limit=1
                $region82: #{fused_linear_forward.3} parent=80 // loop_pre_header
                  _
                $region83: #{fused_linear_forward.3} parent=80 // loop_header
                  %s379 = sphi 0, %s383
                  %p380 = scmp.ge.s32.totalorder %s379, 1
                  %s384 = sphi %s327, %s327
                  %s385 = sphi %s322, %s322
                $region84: #{fused_linear_forward.3} parent=80 // loop_header_branch
                  %382 = sbr.rel (%p380) target = $region88
                $region85: #{fused_linear_forward.3} parent=80 // loop_body
                  %v386 = vld [vmem:[%s384] sm:$0xff]
                  %387 = vst [vmem:[%s385] sm:$0xff] %v386
                  %v388 = vld [vmem:[%s384 + $0x10] sm:$0xff]
                  %389 = vst [vmem:[%s385 + $0x8] sm:$0xff] %v388
                  %v390 = vld [vmem:[%s384 + $0x20] sm:$0xff]
                  %391 = vst [vmem:[%s385 + $0x10] sm:$0xff] %v390
                  %v392 = vld [vmem:[%s384 + $0x30] sm:$0xff]
                  %393 = vst [vmem:[%s385 + $0x18] sm:$0xff] %v392
                  %v394 = vld [vmem:[%s384 + $0x40] sm:$0xff]
                  %395 = vst [vmem:[%s385 + $0x20] sm:$0xff] %v394
                  %v396 = vld [vmem:[%s384 + $0x50] sm:$0xff]
                  %397 = vst [vmem:[%s385 + $0x28] sm:$0xff] %v396
                  %v398 = vld [vmem:[%s384 + $0x60] sm:$0xff]
                  %399 = vst [vmem:[%s385 + $0x30] sm:$0xff] %v398
                  %v400 = vld [vmem:[%s384 + $0x70] sm:$0xff]
                  %401 = vst [vmem:[%s385 + $0x38] sm:$0xff] %v400
                  %v402 = vld [vmem:[%s384 + $0x80] sm:$0xff]
                  %403 = vst [vmem:[%s385 + $0x40] sm:$0xff] %v402
                  %v404 = vld [vmem:[%s384 + $0x90] sm:$0xff]
                  %405 = vst [vmem:[%s385 + $0x48] sm:$0xff] %v404
                  %v406 = vld [vmem:[%s384 + $0xa0] sm:$0xff]
                  %407 = vst [vmem:[%s385 + $0x50] sm:$0xff] %v406
                  %v408 = vld [vmem:[%s384 + $0xb0] sm:$0xff]
                  %409 = vst [vmem:[%s385 + $0x58] sm:$0xff] %v408
                  %v410 = vld [vmem:[%s384 + $0xc0] sm:$0xff]
                  %411 = vst [vmem:[%s385 + $0x60] sm:$0xff] %v410
                  %v412 = vld [vmem:[%s384 + $0xd0] sm:$0xff]
                  %413 = vst [vmem:[%s385 + $0x68] sm:$0xff] %v412
                  %v414 = vld [vmem:[%s384 + $0xe0] sm:$0xff]
                  %415 = vst [vmem:[%s385 + $0x70] sm:$0xff] %v414
                  %v416 = vld [vmem:[%s384 + $0xf0] sm:$0xff]
                  %417 = vst [vmem:[%s385 + $0x78] sm:$0xff] %v416
                $region86: #{fused_linear_forward.3} parent=80 // loop_footer
                  %s383 = sadd.s32 1, %s379
                $region87: #{fused_linear_forward.3} parent=80 // loop_footer_branch
                  %378 = sbr.rel target = $region83
                $region88: #{fused_linear_forward.3} parent=80 // loop_exit
                  _
              $region81: #{fused_linear_forward.3} parent=65 // pred_fallthru
                _
              // Predicated region
              $region89: #{fused_linear_forward.3} parent=65 // pred_check
                _
              $region90: #{fused_linear_forward.3} parent=65 // pred_check_branch
                %419 = sbr.rel target = $region92
              $region91: #{fused_linear_forward.3} parent=65 // pred_region
                _
              $region92: #{fused_linear_forward.3} parent=65 // pred_fallthru
                _
            $region66: #{fused_linear_forward.3} parent=61 // pred_fallthru
              _
            // Predicated region
            $region67: #{fused_linear_forward.3} parent=61 // pred_check
              _
            $region68: #{fused_linear_forward.3} parent=61 // pred_check_branch
              %333 = sbr.rel target = $region70
            $region69: #{fused_linear_forward.3} parent=61 // pred_region
              %s335 = ssub.s32 256, 1
              loop: start=0, step=1, limit=1
              $region71: #{fused_linear_forward.3} parent=69 // loop_pre_header
                _
              $region72: #{fused_linear_forward.3} parent=69 // loop_header
                %s337 = sphi 0, %s341
                %p338 = scmp.ge.s32.totalorder %s337, 1
                %s342 = sphi %s327, %s327
                %s343 = sphi %s322, %s322
              $region73: #{fused_linear_forward.3} parent=69 // loop_header_branch
                %340 = sbr.rel (%p338) target = $region77
              $region74: #{fused_linear_forward.3} parent=69 // loop_body
                %v344 = vld [vmem:[%s342] sm:%s335]
                %345 = vst [vmem:[%s343] sm:%s335] %v344
                %v346 = vld [vmem:[%s342 + $0x10] sm:%s335]
                %347 = vst [vmem:[%s343 + $0x8] sm:%s335] %v346
                %v348 = vld [vmem:[%s342 + $0x20] sm:%s335]
                %349 = vst [vmem:[%s343 + $0x10] sm:%s335] %v348
                %v350 = vld [vmem:[%s342 + $0x30] sm:%s335]
                %351 = vst [vmem:[%s343 + $0x18] sm:%s335] %v350
                %v352 = vld [vmem:[%s342 + $0x40] sm:%s335]
                %353 = vst [vmem:[%s343 + $0x20] sm:%s335] %v352
                %v354 = vld [vmem:[%s342 + $0x50] sm:%s335]
                %355 = vst [vmem:[%s343 + $0x28] sm:%s335] %v354
                %v356 = vld [vmem:[%s342 + $0x60] sm:%s335]
                %357 = vst [vmem:[%s343 + $0x30] sm:%s335] %v356
                %v358 = vld [vmem:[%s342 + $0x70] sm:%s335]
                %359 = vst [vmem:[%s343 + $0x38] sm:%s335] %v358
                %v360 = vld [vmem:[%s342 + $0x80] sm:%s335]
                %361 = vst [vmem:[%s343 + $0x40] sm:%s335] %v360
                %v362 = vld [vmem:[%s342 + $0x90] sm:%s335]
                %363 = vst [vmem:[%s343 + $0x48] sm:%s335] %v362
                %v364 = vld [vmem:[%s342 + $0xa0] sm:%s335]
                %365 = vst [vmem:[%s343 + $0x50] sm:%s335] %v364
                %v366 = vld [vmem:[%s342 + $0xb0] sm:%s335]
                %367 = vst [vmem:[%s343 + $0x58] sm:%s335] %v366
                %v368 = vld [vmem:[%s342 + $0xc0] sm:%s335]
                %369 = vst [vmem:[%s343 + $0x60] sm:%s335] %v368
                %v370 = vld [vmem:[%s342 + $0xd0] sm:%s335]
                %371 = vst [vmem:[%s343 + $0x68] sm:%s335] %v370
                %v372 = vld [vmem:[%s342 + $0xe0] sm:%s335]
                %373 = vst [vmem:[%s343 + $0x70] sm:%s335] %v372
                %v374 = vld [vmem:[%s342 + $0xf0] sm:%s335]
                %375 = vst [vmem:[%s343 + $0x78] sm:%s335] %v374
              $region75: #{fused_linear_forward.3} parent=69 // loop_footer
                %s341 = sadd.s32 1, %s337
              $region76: #{fused_linear_forward.3} parent=69 // loop_footer_branch
                %336 = sbr.rel target = $region72
              $region77: #{fused_linear_forward.3} parent=69 // loop_exit
                _
            $region70: #{fused_linear_forward.3} parent=61 // pred_fallthru
              _
          $region62: #{fused_linear_forward.3} parent=57 // pred_fallthru
            _
          %420 = vnop
        $region58: #{fused_linear_forward.3} parent=15 // pred_fallthru
          _
        // Predicated region
        $region93: #{fused_linear_forward.3} parent=15 // pred_check
          %p421 = pneg %p106
        $region94: #{fused_linear_forward.3} parent=15 // pred_check_branch
          %423 = sbr.rel (%p421) target = $region96
        $region95: #{fused_linear_forward.3} parent=15 // pred_region
          %s424 = sand.u32 %s96, 1
          %s425 = sand.u32 %s96, 1
          %s426 = smul.addr %s425, 16
          %s427 = scalar_lea.vmem [#allocation4], %s426
          %s428 = smul.addr %s25, 8
          %s429 = scalar_lea.vmem %s2, %s428
          // Predicated region
          $region97: #{fused_linear_forward.3} parent=95 // pred_check
            _
          $region98: #{fused_linear_forward.3} parent=95 // pred_check_branch
            %431 = sbr.rel (0) target = $region100
          $region99: #{fused_linear_forward.3} parent=95 // pred_region
            // Predicated region
            $region101: #{fused_linear_forward.3} parent=99 // pred_check
              _
            $region102: #{fused_linear_forward.3} parent=99 // pred_check_branch
              %433 = sbr.rel (0) target = $region104
            $region103: #{fused_linear_forward.3} parent=99 // pred_region
              // Predicated region
              $region116: #{fused_linear_forward.3} parent=103 // pred_check
                _
              $region117: #{fused_linear_forward.3} parent=103 // pred_check_branch
                %451 = sbr.rel (0) target = $region119
              $region118: #{fused_linear_forward.3} parent=103 // pred_region
                loop: start=0, step=1, limit=1
                $region120: #{fused_linear_forward.3} parent=118 // loop_pre_header
                  _
                $region121: #{fused_linear_forward.3} parent=118 // loop_header
                  %s453 = sphi 0, %s457
                  %p454 = scmp.ge.s32.totalorder %s453, 1
                  %s458 = sphi %s429, %s429
                  %s459 = sphi %s427, %s427
                $region122: #{fused_linear_forward.3} parent=118 // loop_header_branch
                  %456 = sbr.rel (%p454) target = $region126
                $region123: #{fused_linear_forward.3} parent=118 // loop_body
                  %v460 = vld [vmem:[%s458] sm:$0xff]
                  %461 = vst [vmem:[%s459] sm:$0xff] %v460
                  %v462 = vld [vmem:[%s458 + $0x10] sm:$0xff]
                  %463 = vst [vmem:[%s459 + $0x8] sm:$0xff] %v462
                $region124: #{fused_linear_forward.3} parent=118 // loop_footer
                  %s457 = sadd.s32 1, %s453
                $region125: #{fused_linear_forward.3} parent=118 // loop_footer_branch
                  %452 = sbr.rel target = $region121
                $region126: #{fused_linear_forward.3} parent=118 // loop_exit
                  _
              $region119: #{fused_linear_forward.3} parent=103 // pred_fallthru
                _
              // Predicated region
              $region127: #{fused_linear_forward.3} parent=103 // pred_check
                _
              $region128: #{fused_linear_forward.3} parent=103 // pred_check_branch
                %465 = sbr.rel target = $region130
              $region129: #{fused_linear_forward.3} parent=103 // pred_region
                _
              $region130: #{fused_linear_forward.3} parent=103 // pred_fallthru
                _
            $region104: #{fused_linear_forward.3} parent=99 // pred_fallthru
              _
            // Predicated region
            $region105: #{fused_linear_forward.3} parent=99 // pred_check
              _
            $region106: #{fused_linear_forward.3} parent=99 // pred_check_branch
              %435 = sbr.rel target = $region108
            $region107: #{fused_linear_forward.3} parent=99 // pred_region
              %s437 = ssub.s32 256, 1
              loop: start=0, step=1, limit=1
              $region109: #{fused_linear_forward.3} parent=107 // loop_pre_header
                _
              $region110: #{fused_linear_forward.3} parent=107 // loop_header
                %s439 = sphi 0, %s443
                %p440 = scmp.ge.s32.totalorder %s439, 1
                %s444 = sphi %s429, %s429
                %s445 = sphi %s427, %s427
              $region111: #{fused_linear_forward.3} parent=107 // loop_header_branch
                %442 = sbr.rel (%p440) target = $region115
              $region112: #{fused_linear_forward.3} parent=107 // loop_body
                %v446 = vld [vmem:[%s444] sm:%s437]
                %447 = vst [vmem:[%s445] sm:%s437] %v446
                %v448 = vld [vmem:[%s444 + $0x10] sm:%s437]
                %449 = vst [vmem:[%s445 + $0x8] sm:%s437] %v448
              $region113: #{fused_linear_forward.3} parent=107 // loop_footer
                %s443 = sadd.s32 1, %s439
              $region114: #{fused_linear_forward.3} parent=107 // loop_footer_branch
                %438 = sbr.rel target = $region110
              $region115: #{fused_linear_forward.3} parent=107 // loop_exit
                _
            $region108: #{fused_linear_forward.3} parent=99 // pred_fallthru
              _
          $region100: #{fused_linear_forward.3} parent=95 // pred_fallthru
            _
          %466 = vnop
        $region96: #{fused_linear_forward.3} parent=15 // pred_fallthru
          _
        // Predicated region
        $region131: #{fused_linear_forward.3} parent=15 // pred_check
          %p467 = pneg %p132
        $region132: #{fused_linear_forward.3} parent=15 // pred_check_branch
          %469 = sbr.rel (%p467) target = $region134
        $region133: #{fused_linear_forward.3} parent=15 // pred_region
          %s470 = sand.u32 %s122, 1
          %s471 = sand.u32 %s122, 1
          %s472 = smul.addr %s471, 16
          %s473 = scalar_lea.vmem [#allocation5], %s472
          %s474 = smul.addr %s25, 8
          %s475 = scalar_lea.vmem %s3, %s474
          // Predicated region
          $region135: #{fused_linear_forward.3} parent=133 // pred_check
            _
          $region136: #{fused_linear_forward.3} parent=133 // pred_check_branch
            %477 = sbr.rel (0) target = $region138
          $region137: #{fused_linear_forward.3} parent=133 // pred_region
            // Predicated region
            $region139: #{fused_linear_forward.3} parent=137 // pred_check
              _
            $region140: #{fused_linear_forward.3} parent=137 // pred_check_branch
              %479 = sbr.rel (0) target = $region142
            $region141: #{fused_linear_forward.3} parent=137 // pred_region
              // Predicated region
              $region154: #{fused_linear_forward.3} parent=141 // pred_check
                _
              $region155: #{fused_linear_forward.3} parent=141 // pred_check_branch
                %497 = sbr.rel (0) target = $region157
              $region156: #{fused_linear_forward.3} parent=141 // pred_region
                loop: start=0, step=1, limit=1
                $region158: #{fused_linear_forward.3} parent=156 // loop_pre_header
                  _
                $region159: #{fused_linear_forward.3} parent=156 // loop_header
                  %s499 = sphi 0, %s503
                  %p500 = scmp.ge.s32.totalorder %s499, 1
                  %s504 = sphi %s475, %s475
                  %s505 = sphi %s473, %s473
                $region160: #{fused_linear_forward.3} parent=156 // loop_header_branch
                  %502 = sbr.rel (%p500) target = $region164
                $region161: #{fused_linear_forward.3} parent=156 // loop_body
                  %v506 = vld [vmem:[%s504] sm:$0xff]
                  %507 = vst [vmem:[%s505] sm:$0xff] %v506
                  %v508 = vld [vmem:[%s504 + $0x10] sm:$0xff]
                  %509 = vst [vmem:[%s505 + $0x8] sm:$0xff] %v508
                $region162: #{fused_linear_forward.3} parent=156 // loop_footer
                  %s503 = sadd.s32 1, %s499
                $region163: #{fused_linear_forward.3} parent=156 // loop_footer_branch
                  %498 = sbr.rel target = $region159
                $region164: #{fused_linear_forward.3} parent=156 // loop_exit
                  _
              $region157: #{fused_linear_forward.3} parent=141 // pred_fallthru
                _
              // Predicated region
              $region165: #{fused_linear_forward.3} parent=141 // pred_check
                _
              $region166: #{fused_linear_forward.3} parent=141 // pred_check_branch
                %511 = sbr.rel target = $region168
              $region167: #{fused_linear_forward.3} parent=141 // pred_region
                _
              $region168: #{fused_linear_forward.3} parent=141 // pred_fallthru
                _
            $region142: #{fused_linear_forward.3} parent=137 // pred_fallthru
              _
            // Predicated region
            $region143: #{fused_linear_forward.3} parent=137 // pred_check
              _
            $region144: #{fused_linear_forward.3} parent=137 // pred_check_branch
              %481 = sbr.rel target = $region146
            $region145: #{fused_linear_forward.3} parent=137 // pred_region
              %s483 = ssub.s32 256, 1
              loop: start=0, step=1, limit=1
              $region147: #{fused_linear_forward.3} parent=145 // loop_pre_header
                _
              $region148: #{fused_linear_forward.3} parent=145 // loop_header
                %s485 = sphi 0, %s489
                %p486 = scmp.ge.s32.totalorder %s485, 1
                %s490 = sphi %s475, %s475
                %s491 = sphi %s473, %s473
              $region149: #{fused_linear_forward.3} parent=145 // loop_header_branch
                %488 = sbr.rel (%p486) target = $region153
              $region150: #{fused_linear_forward.3} parent=145 // loop_body
                %v492 = vld [vmem:[%s490] sm:%s483]
                %493 = vst [vmem:[%s491] sm:%s483] %v492
                %v494 = vld [vmem:[%s490 + $0x10] sm:%s483]
                %495 = vst [vmem:[%s491 + $0x8] sm:%s483] %v494
              $region151: #{fused_linear_forward.3} parent=145 // loop_footer
                %s489 = sadd.s32 1, %s485
              $region152: #{fused_linear_forward.3} parent=145 // loop_footer_branch
                %484 = sbr.rel target = $region148
              $region153: #{fused_linear_forward.3} parent=145 // loop_exit
                _
            $region146: #{fused_linear_forward.3} parent=137 // pred_fallthru
              _
          $region138: #{fused_linear_forward.3} parent=133 // pred_fallthru
            _
          %512 = vnop
        $region134: #{fused_linear_forward.3} parent=15 // pred_fallthru
          _
      $region16: #{fused_linear_forward.3} parent=5 // pred_fallthru
        _
      %p513 = scmp.le.s32.totalorder 1, %s18
      %p514 = scmp.lt.s32.totalorder %s18, 5
      %p515 = pnand %p513, %p514
      %p516 = pneg %p515
      // Predicated region
      $region169: #{fused_linear_forward.3} parent=5 // pred_check
        _
      $region170: #{fused_linear_forward.3} parent=5 // pred_check_branch
        %518 = sbr.rel (%p515) target = $region172
      $region171: #{fused_linear_forward.3} parent=5 // pred_region
        %s519 = ssub.s32 %s18, 1
        %s520 = sand.u32 %s45, 1
        %s521 = sand.u32 %s45, 1
        %s522 = smul.addr %s521, 128
        %s523 = scalar_lea.vmem [#allocation2], %s522
        // Predicated region
        $region173: #{fused_linear_forward.3} parent=171 // pred_check
          %p524 = pneg %p58
        $region174: #{fused_linear_forward.3} parent=171 // pred_check_branch
          %526 = sbr.rel (%p524) target = $region176
        $region175: #{fused_linear_forward.3} parent=171 // pred_region
          _
        $region176: #{fused_linear_forward.3} parent=171 // pred_fallthru
          _
        %s527 = sand.u32 %s73, 1
        %s528 = sand.u32 %s73, 1
        %s529 = smul.addr %s528, 128
        %s530 = scalar_lea.vmem [#allocation3], %s529
        // Predicated region
        $region177: #{fused_linear_forward.3} parent=171 // pred_check
          %p531 = pneg %p86
        $region178: #{fused_linear_forward.3} parent=171 // pred_check_branch
          %533 = sbr.rel (%p531) target = $region180
        $region179: #{fused_linear_forward.3} parent=171 // pred_region
          _
        $region180: #{fused_linear_forward.3} parent=171 // pred_fallthru
          _
        %s534 = sand.u32 %s99, 1
        %s535 = sand.u32 %s99, 1
        %s536 = smul.addr %s535, 16
        %s537 = scalar_lea.vmem [#allocation4], %s536
        // Predicated region
        $region181: #{fused_linear_forward.3} parent=171 // pred_check
          %p538 = pneg %p112
        $region182: #{fused_linear_forward.3} parent=171 // pred_check_branch
          %540 = sbr.rel (%p538) target = $region184
        $region183: #{fused_linear_forward.3} parent=171 // pred_region
          _
        $region184: #{fused_linear_forward.3} parent=171 // pred_fallthru
          _
        %s541 = sand.u32 %s125, 1
        %s542 = sand.u32 %s125, 1
        %s543 = smul.addr %s542, 16
        %s544 = scalar_lea.vmem [#allocation5], %s543
        // Predicated region
        $region185: #{fused_linear_forward.3} parent=171 // pred_check
          %p545 = pneg %p138
        $region186: #{fused_linear_forward.3} parent=171 // pred_check_branch
          %547 = sbr.rel (%p545) target = $region188
        $region187: #{fused_linear_forward.3} parent=171 // pred_region
          _
        $region188: #{fused_linear_forward.3} parent=171 // pred_fallthru
          _
        %s548 = sand.u32 %s45, 1
        %s549 = sand.u32 %s45, 1
        %s550 = smul.addr %s549, 128
        %s551 = scalar_lea.vmem [#allocation2], %s550
        %p552 = pneg %p58
        %p553 = pneg %p55
        %s554 = sand.u32 %s73, 1
        %s555 = sand.u32 %s73, 1
        %s556 = smul.addr %s555, 128
        %s557 = scalar_lea.vmem [#allocation3], %s556
        %p558 = pneg %p86
        %p559 = pneg %p83
        %s560 = sand.u32 %s99, 1
        %s561 = sand.u32 %s99, 1
        %s562 = smul.addr %s561, 16
        %s563 = scalar_lea.vmem [#allocation4], %s562
        %p564 = pneg %p112
        %p565 = pneg %p109
        %s566 = sand.u32 %s125, 1
        %s567 = sand.u32 %s125, 1
        %s568 = smul.addr %s567, 16
        %s569 = scalar_lea.vmem [#allocation5], %s568
        %p570 = pneg %p138
        %p571 = pneg %p135
        %p572 = pneg %p166
        %p573 = pneg %p163
        %s574 = sand.u32 %s153, 1
        %s575 = scalar_lea.sflag [#allocation7], %s574
        %s576 = sand.u32 %s153, 1
        %s577 = smul.addr %s576, 128
        %s578 = scalar_lea.vmem [#allocation6], %s577
        %p579 = pneg %p192
        %p580 = pneg %p189
        %s581 = sand.u32 %s179, 1
        %s582 = scalar_lea.sflag [#allocation9], %s581
        %s583 = sand.u32 %s179, 1
        %s584 = scalar_lea.vmem [#allocation8], %s583
        %s585 = smul.u32 16, %s28
        %s586 = smul.u32 16, %s28
        %s587 = smul.u32 16, %s28
        %v588 = vld [vmem:[%s537] sm:$0xff]
        %v589 = vld [vmem:[%s537 + $0x8] sm:$0xff]
        %v590 = vadd.f32 %v588, %v589
        %v591 = vrot.slane %v590, 4
        %v592 = vadd.f32 %v590, %v591
        %v593 = vrot.slane %v592, 2
        %v594 = vadd.f32 %v592, %v593
        %v595 = vrot.slane %v594, 1
        %v596 = vadd.f32 %v594, %v595
        %v597 = vld [vmem:[%s544] sm:$0xff]
        %v598 = vld [vmem:[%s544 + $0x8] sm:$0xff]
        %v599 = vadd.f32 %v597, %v598
        %v600 = vrot.slane %v599, 4
        %v601 = vadd.f32 %v599, %v600
        %v602 = vrot.slane %v601, 2
        %v603 = vadd.f32 %v601, %v602
        %v604 = vrot.slane %v603, 1
        %v605 = vadd.f32 %v603, %v604
        %v606 = vadd.f32 %v605, 1e-08
        %v607 = vrcp.pop %v606
        %v608 = vmul.f32 %v596, %v607
        %v609 = vld [vmem:[%s523] sm:$0xff]
        %v610 = vld [vmem:[%s523 + $0x8] sm:$0xff]
        %v611 = vld [vmem:[%s523 + $0x10] sm:$0xff]
        %v612 = vld [vmem:[%s523 + $0x18] sm:$0xff]
        %v613 = vld [vmem:[%s523 + $0x20] sm:$0xff]
        %v614 = vld [vmem:[%s523 + $0x28] sm:$0xff]
        %v615 = vld [vmem:[%s523 + $0x30] sm:$0xff]
        %v616 = vld [vmem:[%s523 + $0x38] sm:$0xff]
        %v617 = vld [vmem:[%s523 + $0x40] sm:$0xff]
        %v618 = vld [vmem:[%s523 + $0x48] sm:$0xff]
        %v619 = vld [vmem:[%s523 + $0x50] sm:$0xff]
        %v620 = vld [vmem:[%s523 + $0x58] sm:$0xff]
        %v621 = vld [vmem:[%s523 + $0x60] sm:$0xff]
        %v622 = vld [vmem:[%s523 + $0x68] sm:$0xff]
        %v623 = vld [vmem:[%s523 + $0x70] sm:$0xff]
        %v624 = vld [vmem:[%s523 + $0x78] sm:$0xff]
        %v625 = vld [vmem:[%s530] sm:$0xff]
        %v626 = vld [vmem:[%s530 + $0x8] sm:$0xff]
        %v627 = vld [vmem:[%s530 + $0x10] sm:$0xff]
        %v628 = vld [vmem:[%s530 + $0x18] sm:$0xff]
        %v629 = vld [vmem:[%s530 + $0x20] sm:$0xff]
        %v630 = vld [vmem:[%s530 + $0x28] sm:$0xff]
        %v631 = vld [vmem:[%s530 + $0x30] sm:$0xff]
        %v632 = vld [vmem:[%s530 + $0x38] sm:$0xff]
        %v633 = vld [vmem:[%s530 + $0x40] sm:$0xff]
        %v634 = vld [vmem:[%s530 + $0x48] sm:$0xff]
        %v635 = vld [vmem:[%s530 + $0x50] sm:$0xff]
        %v636 = vld [vmem:[%s530 + $0x58] sm:$0xff]
        %v637 = vld [vmem:[%s530 + $0x60] sm:$0xff]
        %v638 = vld [vmem:[%s530 + $0x68] sm:$0xff]
        %v639 = vld [vmem:[%s530 + $0x70] sm:$0xff]
        %v640 = vld [vmem:[%s530 + $0x78] sm:$0xff]
        %v641 = vmul.f32 %v608, %v625
        %v642 = vmul.f32 %v608, %v626
        %v643 = vmul.f32 %v608, %v627
        %v644 = vmul.f32 %v608, %v628
        %v645 = vmul.f32 %v608, %v629
        %v646 = vmul.f32 %v608, %v630
        %v647 = vmul.f32 %v608, %v631
        %v648 = vmul.f32 %v608, %v632
        %v649 = vmul.f32 %v608, %v633
        %v650 = vmul.f32 %v608, %v634
        %v651 = vmul.f32 %v608, %v635
        %v652 = vmul.f32 %v608, %v636
        %v653 = vmul.f32 %v608, %v637
        %v654 = vmul.f32 %v608, %v638
        %v655 = vmul.f32 %v608, %v639
        %v656 = vmul.f32 %v608, %v640
        %v657 = vadd.f32 %v609, %v641
        %v658 = vadd.f32 %v610, %v642
        %v659 = vadd.f32 %v611, %v643
        %v660 = vadd.f32 %v612, %v644
        %v661 = vadd.f32 %v613, %v645
        %v662 = vadd.f32 %v614, %v646
        %v663 = vadd.f32 %v615, %v647
        %v664 = vadd.f32 %v616, %v648
        %v665 = vadd.f32 %v617, %v649
        %v666 = vadd.f32 %v618, %v650
        %v667 = vadd.f32 %v619, %v651
        %v668 = vadd.f32 %v620, %v652
        %v669 = vadd.f32 %v621, %v653
        %v670 = vadd.f32 %v622, %v654
        %v671 = vadd.f32 %v623, %v655
        %v672 = vadd.f32 %v624, %v656
        %673 = vst [vmem:[%s578] sm:$0xff] %v657
        %674 = vst [vmem:[%s578 + $0x8] sm:$0xff] %v658
        %675 = vst [vmem:[%s578 + $0x10] sm:$0xff] %v659
        %676 = vst [vmem:[%s578 + $0x18] sm:$0xff] %v660
        %677 = vst [vmem:[%s578 + $0x20] sm:$0xff] %v661
        %678 = vst [vmem:[%s578 + $0x28] sm:$0xff] %v662
        %679 = vst [vmem:[%s578 + $0x30] sm:$0xff] %v663
        %680 = vst [vmem:[%s578 + $0x38] sm:$0xff] %v664
        %681 = vst [vmem:[%s578 + $0x40] sm:$0xff] %v665
        %682 = vst [vmem:[%s578 + $0x48] sm:$0xff] %v666
        %683 = vst [vmem:[%s578 + $0x50] sm:$0xff] %v667
        %684 = vst [vmem:[%s578 + $0x58] sm:$0xff] %v668
        %685 = vst [vmem:[%s578 + $0x60] sm:$0xff] %v669
        %686 = vst [vmem:[%s578 + $0x68] sm:$0xff] %v670
        %687 = vst [vmem:[%s578 + $0x70] sm:$0xff] %v671
        %688 = vst [vmem:[%s578 + $0x78] sm:$0xff] %v672
        %689 = vst [vmem:[%s584] sm:$0x1] %v608
        %s690 = sand.u32 %s153, 1
        %s691 = scalar_lea.sflag [#allocation7], %s690
        %s692 = sand.u32 %s153, 1
        %s693 = smul.addr %s692, 128
        %s694 = scalar_lea.vmem [#allocation6], %s693
        %s695 = sand.u32 %s179, 1
        %s696 = scalar_lea.sflag [#allocation9], %s695
        %s697 = sand.u32 %s179, 1
        %s698 = scalar_lea.vmem [#allocation8], %s697
        // Predicated region
        $region189: #{fused_linear_forward.3} parent=171 // pred_check
          %p699 = pneg %p163
        $region190: #{fused_linear_forward.3} parent=171 // pred_check_branch
          %701 = sbr.rel (%p699) target = $region192
        $region191: #{fused_linear_forward.3} parent=171 // pred_region
          %s702 = smul.u32 16, %s28
          %704 = vsyncadd %s691, 0
          %s705 = smul.addr %s702, 2
          %s706 = sadd.s32 %s27, %s705
          %s707 = smul.addr %s706, 8
          %s708 = scalar_lea.hbm %s4, %s707
          %s709 = sshll.u32 %s694, 4
          %s710 = int_to_ptr.vmem [resolvable:$true] %s709
          %s711 = sshll.u32 %s708, 4
          %s712 = int_to_ptr.hbm [resolvable:$true] %s711
          %717 = dma.vmem_to_hbm [thread:$0]  %s710, 2048, %s712, %s691, 128, 256, 8
        $region192: #{fused_linear_forward.3} parent=171 // pred_fallthru
          _
        // Predicated region
        $region193: #{fused_linear_forward.3} parent=171 // pred_check
          %p718 = pneg %p189
        $region194: #{fused_linear_forward.3} parent=171 // pred_check_branch
          %720 = sbr.rel (%p718) target = $region196
        $region195: #{fused_linear_forward.3} parent=171 // pred_region
          %722 = vsyncadd %s696, 0
          %s723 = scalar_lea.hbm %s5, %s27
          %s725 = sshll.u32 %s698, 4
          %s726 = int_to_ptr.vmem [resolvable:$true] %s725
          %s727 = sshll.u32 %s723, 4
          %s728 = int_to_ptr.hbm [resolvable:$true] %s727
          %730 = dma.vmem_to_hbm [thread:$0]  %s726, 16, %s728, %s696
        $region196: #{fused_linear_forward.3} parent=171 // pred_fallthru
          _
      $region172: #{fused_linear_forward.3} parent=5 // pred_fallthru
        _
      %p731 = scmp.le.s32.totalorder 2, %s18
      // Predicated region
      $region197: #{fused_linear_forward.3} parent=5 // pred_check
        %p732 = pneg %p731
      $region198: #{fused_linear_forward.3} parent=5 // pred_check_branch
        %734 = sbr.rel (%p732) target = $region200
      $region199: #{fused_linear_forward.3} parent=5 // pred_region
        %s735 = ssub.s32 %s18, 2
        // Predicated region
        $region201: #{fused_linear_forward.3} parent=199 // pred_check
          %p736 = pneg %p169
        $region202: #{fused_linear_forward.3} parent=199 // pred_check_branch
          %738 = sbr.rel (%p736) target = $region204
        $region203: #{fused_linear_forward.3} parent=199 // pred_region
          %s739 = sand.u32 %s154, 1
          %s740 = scalar_lea.sflag [#allocation7], %s739
          %s741 = sand.u32 %s154, 1
          %s742 = smul.addr %s741, 128
          %s743 = scalar_lea.vmem [#allocation6], %s742
          %745 = dma.done %s740, 2048
        $region204: #{fused_linear_forward.3} parent=199 // pred_fallthru
          _
        // Predicated region
        $region205: #{fused_linear_forward.3} parent=199 // pred_check
          %p746 = pneg %p195
        $region206: #{fused_linear_forward.3} parent=199 // pred_check_branch
          %748 = sbr.rel (%p746) target = $region208
        $region207: #{fused_linear_forward.3} parent=199 // pred_region
          %s749 = sand.u32 %s180, 1
          %s750 = scalar_lea.sflag [#allocation9], %s749
          %s751 = sand.u32 %s180, 1
          %s752 = scalar_lea.vmem [#allocation8], %s751
          %754 = dma.done %s750, 16
        $region208: #{fused_linear_forward.3} parent=199 // pred_fallthru
          _
      $region200: #{fused_linear_forward.3} parent=5 // pred_fallthru
        _
    $region6: #{fused_linear_forward.3} parent=1 // loop_footer
      %s22 = sadd.s32 1, %s18
    $region7: #{fused_linear_forward.3} parent=1 // loop_footer_branch
      %17 = sbr.rel target = $region3
    $region8: #{fused_linear_forward.3} parent=1 // loop_exit
      _
    %755 = vsyncpa [#allocation7], 1
    %s756 = scalar_lea.sflag [#allocation7], 1
    %757 = vsyncpa %s756, 1
    %758 = vsyncpa [#allocation9], 1
    %s759 = scalar_lea.sflag [#allocation9], 1
    %760 = vsyncpa %s759, 1

// kernel: fused_linear_forward.2
$region0: #{fused_linear_forward.2}
  #allocation0 [shape = 'u32[]', space=smem, size = 0x4, offset = 0x4, fixed_abs, tag = 'smem constant byte address 0x4 - core index']
  #allocation1 [shape = 'u32[72,128]{1,0:T(1,128)}', space=vmem, size = 0x9000, scoped, tag = 'internal scratch']
  %s0 = inlined_call_operand.vmem [shape: bf16[256,512], index: 0, kind: input, shape index: {}]
  %s1 = inlined_call_operand.vmem [shape: bf16[512,256], index: 1, kind: input, shape index: {}]
  %s2 = inlined_call_operand.vmem [shape: bf16[512,32], index: 2, kind: input, shape index: {}]
  %s3 = inlined_call_operand.vmem [shape: bf16[32,256], index: 3, kind: input, shape index: {}]
  %s4 = inlined_call_operand.vmem [shape: f32[256,32], index: 4, kind: input, shape index: {}]
  %s5 = inlined_call_operand.vmem [shape: f32[256,256], index: 5, kind: output, shape index: {0}]
  %s6 = inlined_call_operand.vmem [shape: f32[256,256], index: 6, kind: output, shape index: {1}]
  %s7 = inlined_call_operand.vmem [shape: f32[16,256], index: 7, kind: output, shape index: {2}]
  %s8 = inlined_call_operand.vmem [shape: f32[16,256], index: 8, kind: output, shape index: {3}]
  %9 = xla_tuple %s5, %s6, %s7, %s8
  %s10 = sld [smem:[#allocation0]]
  $region273: #{fused_linear_forward.2} parent=0
    _
  %s12 = ssub.s32 1, %s10
  %s13 = scalar_select 0, %s12, %s10
  $region1: #{fused_linear_forward.2} parent=0
    #allocation2 [shape = 'u8[131072]{0}', space=vmem, size = 0x20000, scoped, tag = 'input window, operand 0']
    #allocation3 [shape = 'u8[131072]{0}', space=vmem, size = 0x20000, scoped, tag = 'input window, operand 1']
    #allocation4 [shape = 'u8[16384]{0}', space=vmem, size = 0x4000, scoped, tag = 'input window, operand 3']
    #allocation5 [shape = 'u8[131072]{0}', space=vmem, size = 0x20000, scoped, tag = 'output window, operand 0']
    #allocation6 [shape = 'u8[131072]{0}', space=vmem, size = 0x20000, scoped, tag = 'output window, operand 1']
    loop: start=0, step=1, limit=10
    $region2: #{fused_linear_forward.2} parent=1 // loop_pre_header
      _
    $region3: #{fused_linear_forward.2} parent=1 // loop_header
      %s15 = sphi 0, %s19
      %p16 = scmp.ge.s32.totalorder %s15, 10
      %s22 = sphi 0, %s41
      %s23 = sphi 0, %s37
      %s24 = sphi 0, %s33
      %s25 = sphi 0, %s22
      %s26 = sphi 0, %s23
      %s27 = sphi 0, %s24
      %s28 = sphi 0, %s25
      %s29 = sphi 0, %s26
      %s30 = sphi 0, %s27
      %s46 = sphi 0, %s48
      %s49 = sphi 0, %s46
      %s50 = sphi 0, %s49
      %s66 = sphi 0, %s50
      %s74 = sphi 0, %s76
      %s77 = sphi 0, %s74
      %s78 = sphi 0, %s77
      %s94 = sphi 0, %s78
      %s100 = sphi 0, %s102
      %s103 = sphi 0, %s100
      %s104 = sphi 0, %s103
      %s120 = sphi 0, %s104
      %s126 = sphi 0, %s128
      %s129 = sphi 0, %s126
      %s130 = sphi 0, %s129
      %s146 = sphi 0, %s130
      %s152 = sphi 0, %s154
      %s155 = sphi 0, %s152
      %s156 = sphi 0, %s155
      %s172 = sphi 0, %s156
      %s180 = sphi 0, %s182
      %s183 = sphi 0, %s180
      %s184 = sphi 0, %s183
      %s200 = sphi 0, %s184
      %s208 = sphi 0, %s210
      %s211 = sphi 0, %s208
      %s212 = sphi 0, %s211
      %s228 = sphi 0, %s212
      %s236 = sphi 0, %s238
      %s239 = sphi 0, %s236
      %s240 = sphi 0, %s239
      %s256 = sphi 0, %s240
      %s264 = sphi 0, %s266
      %s267 = sphi 0, %s264
      %s268 = sphi 0, %s267
      %s284 = sphi 0, %s268
    $region4: #{fused_linear_forward.2} parent=1 // loop_header_branch
      %18 = sbr.rel (%p16) target = $region8
    $region5: #{fused_linear_forward.2} parent=1 // loop_body
      %s20 = ssub.s32 %s15, 1
      %s21 = ssub.s32 %s15, 2
      %s31 = sadd.s32 1, %s24
      %p32 = scmp.ge.s32.totalorder %s31, 2
      %s33 = scalar_select %p32, 0, %s31
      %s34 = sadd.s32 1, %s23
      %s35 = scalar_select %p32, %s34, %s23
      %p36 = scmp.ge.s32.totalorder %s35, 2
      %s37 = scalar_select %p36, 0, %s35
      %s38 = sadd.s32 1, %s22
      %s39 = scalar_select %p36, %s38, %s22
      %p40 = scmp.ge.s32.totalorder %s39, 2
      %s41 = scalar_select %p40, 0, %s39
      %s42 = ssub.s32 %s22, %s41
      %s43 = ssub.s32 %s24, %s33
      %s44 = sor.u32 %s42, %s43
      %p45 = scmp.eq.s32.totalorder %s44, 0
      %s47 = sadd.s32 %s46, 1
      %s48 = scalar_select %p45, %s46, %s47
      %p51 = pneg %p45
      %p52 = scmp.eq.s32.totalorder %s15, 7
      %p53 = por %p51, %p52
      %p54 = scmp.ne.s32.totalorder %s46, %s49
      %p55 = scmp.eq.s32.totalorder %s15, 0
      %p56 = por %p54, %p55
      %p57 = scmp.ne.s32.totalorder %s46, %s49
      %p58 = scmp.eq.s32.totalorder %s20, 7
      %p59 = por %p57, %p58
      %p60 = scmp.ne.s32.totalorder %s49, %s50
      %p61 = scmp.eq.s32.totalorder %s20, 0
      %p62 = por %p60, %p61
      %p63 = scmp.ne.s32.totalorder %s49, %s50
      %p64 = scmp.eq.s32.totalorder %s21, 7
      %p65 = por %p63, %p64
      %p67 = scmp.ne.s32.totalorder %s50, %s66
      %p68 = scmp.eq.s32.totalorder %s21, 0
      %p69 = por %p67, %p68
      %s70 = ssub.s32 %s24, %s33
      %s71 = ssub.s32 %s23, %s37
      %s72 = sor.u32 %s70, %s71
      %p73 = scmp.eq.s32.totalorder %s72, 0
      %s75 = sadd.s32 %s74, 1
      %s76 = scalar_select %p73, %s74, %s75
      %p79 = pneg %p73
      %p80 = scmp.eq.s32.totalorder %s15, 7
      %p81 = por %p79, %p80
      %p82 = scmp.ne.s32.totalorder %s74, %s77
      %p83 = scmp.eq.s32.totalorder %s15, 0
      %p84 = por %p82, %p83
      %p85 = scmp.ne.s32.totalorder %s74, %s77
      %p86 = scmp.eq.s32.totalorder %s20, 7
      %p87 = por %p85, %p86
      %p88 = scmp.ne.s32.totalorder %s77, %s78
      %p89 = scmp.eq.s32.totalorder %s20, 0
      %p90 = por %p88, %p89
      %p91 = scmp.ne.s32.totalorder %s77, %s78
      %p92 = scmp.eq.s32.totalorder %s21, 7
      %p93 = por %p91, %p92
      %p95 = scmp.ne.s32.totalorder %s78, %s94
      %p96 = scmp.eq.s32.totalorder %s21, 0
      %p97 = por %p95, %p96
      %s98 = ssub.s32 %s24, %s33
      %p99 = scmp.eq.s32.totalorder %s98, 0
      %s101 = sadd.s32 %s100, 1
      %s102 = scalar_select %p99, %s100, %s101
      %p105 = pneg %p99
      %p106 = scmp.eq.s32.totalorder %s15, 7
      %p107 = por %p105, %p106
      %p108 = scmp.ne.s32.totalorder %s100, %s103
      %p109 = scmp.eq.s32.totalorder %s15, 0
      %p110 = por %p108, %p109
      %p111 = scmp.ne.s32.totalorder %s100, %s103
      %p112 = scmp.eq.s32.totalorder %s20, 7
      %p113 = por %p111, %p112
      %p114 = scmp.ne.s32.totalorder %s103, %s104
      %p115 = scmp.eq.s32.totalorder %s20, 0
      %p116 = por %p114, %p115
      %p117 = scmp.ne.s32.totalorder %s103, %s104
      %p118 = scmp.eq.s32.totalorder %s21, 7
      %p119 = por %p117, %p118
      %p121 = scmp.ne.s32.totalorder %s104, %s120
      %p122 = scmp.eq.s32.totalorder %s21, 0
      %p123 = por %p121, %p122
      %s124 = ssub.s32 %s23, %s37
      %p125 = scmp.eq.s32.totalorder %s124, 0
      %s127 = sadd.s32 %s126, 1
      %s128 = scalar_select %p125, %s126, %s127
      %p131 = pneg %p125
      %p132 = scmp.eq.s32.totalorder %s15, 7
      %p133 = por %p131, %p132
      %p134 = scmp.ne.s32.totalorder %s126, %s129
      %p135 = scmp.eq.s32.totalorder %s15, 0
      %p136 = por %p134, %p135
      %p137 = scmp.ne.s32.totalorder %s126, %s129
      %p138 = scmp.eq.s32.totalorder %s20, 7
      %p139 = por %p137, %p138
      %p140 = scmp.ne.s32.totalorder %s129, %s130
      %p141 = scmp.eq.s32.totalorder %s20, 0
      %p142 = por %p140, %p141
      %p143 = scmp.ne.s32.totalorder %s129, %s130
      %p144 = scmp.eq.s32.totalorder %s21, 7
      %p145 = por %p143, %p144
      %p147 = scmp.ne.s32.totalorder %s130, %s146
      %p148 = scmp.eq.s32.totalorder %s21, 0
      %p149 = por %p147, %p148
      %s150 = ssub.s32 %s22, %s41
      %p151 = scmp.eq.s32.totalorder %s150, 0
      %s153 = sadd.s32 %s152, 1
      %s154 = scalar_select %p151, %s152, %s153
      %p157 = pneg %p151
      %p158 = scmp.eq.s32.totalorder %s15, 7
      %p159 = por %p157, %p158
      %p160 = scmp.ne.s32.totalorder %s152, %s155
      %p161 = scmp.eq.s32.totalorder %s15, 0
      %p162 = por %p160, %p161
      %p163 = scmp.ne.s32.totalorder %s152, %s155
      %p164 = scmp.eq.s32.totalorder %s20, 7
      %p165 = por %p163, %p164
      %p166 = scmp.ne.s32.totalorder %s155, %s156
      %p167 = scmp.eq.s32.totalorder %s20, 0
      %p168 = por %p166, %p167
      %p169 = scmp.ne.s32.totalorder %s155, %s156
      %p170 = scmp.eq.s32.totalorder %s21, 7
      %p171 = por %p169, %p170
      %p173 = scmp.ne.s32.totalorder %s156, %s172
      %p174 = scmp.eq.s32.totalorder %s21, 0
      %p175 = por %p173, %p174
      %s176 = ssub.s32 %s22, %s41
      %s177 = ssub.s32 %s23, %s37
      %s178 = sor.u32 %s176, %s177
      %p179 = scmp.eq.s32.totalorder %s178, 0
      %s181 = sadd.s32 %s180, 1
      %s182 = scalar_select %p179, %s180, %s181
      %p185 = pneg %p179
      %p186 = scmp.eq.s32.totalorder %s15, 7
      %p187 = por %p185, %p186
      %p188 = scmp.ne.s32.totalorder %s180, %s183
      %p189 = scmp.eq.s32.totalorder %s15, 0
      %p190 = por %p188, %p189
      %p191 = scmp.ne.s32.totalorder %s180, %s183
      %p192 = scmp.eq.s32.totalorder %s20, 7
      %p193 = por %p191, %p192
      %p194 = scmp.ne.s32.totalorder %s183, %s184
      %p195 = scmp.eq.s32.totalorder %s20, 0
      %p196 = por %p194, %p195
      %p197 = scmp.ne.s32.totalorder %s183, %s184
      %p198 = scmp.eq.s32.totalorder %s21, 7
      %p199 = por %p197, %p198
      %p201 = scmp.ne.s32.totalorder %s184, %s200
      %p202 = scmp.eq.s32.totalorder %s21, 0
      %p203 = por %p201, %p202
      %s204 = ssub.s32 %s22, %s41
      %s205 = ssub.s32 %s23, %s37
      %s206 = sor.u32 %s204, %s205
      %p207 = scmp.eq.s32.totalorder %s206, 0
      %s209 = sadd.s32 %s208, 1
      %s210 = scalar_select %p207, %s208, %s209
      %p213 = pneg %p207
      %p214 = scmp.eq.s32.totalorder %s15, 7
      %p215 = por %p213, %p214
      %p216 = scmp.ne.s32.totalorder %s208, %s211
      %p217 = scmp.eq.s32.totalorder %s15, 0
      %p218 = por %p216, %p217
      %p219 = scmp.ne.s32.totalorder %s208, %s211
      %p220 = scmp.eq.s32.totalorder %s20, 7
      %p221 = por %p219, %p220
      %p222 = scmp.ne.s32.totalorder %s211, %s212
      %p223 = scmp.eq.s32.totalorder %s20, 0
      %p224 = por %p222, %p223
      %p225 = scmp.ne.s32.totalorder %s211, %s212
      %p226 = scmp.eq.s32.totalorder %s21, 7
      %p227 = por %p225, %p226
      %p229 = scmp.ne.s32.totalorder %s212, %s228
      %p230 = scmp.eq.s32.totalorder %s21, 0
      %p231 = por %p229, %p230
      %s232 = ssub.s32 %s22, %s41
      %s233 = ssub.s32 %s23, %s37
      %s234 = sor.u32 %s232, %s233
      %p235 = scmp.eq.s32.totalorder %s234, 0
      %s237 = sadd.s32 %s236, 1
      %s238 = scalar_select %p235, %s236, %s237
      %p241 = pneg %p235
      %p242 = scmp.eq.s32.totalorder %s15, 7
      %p243 = por %p241, %p242
      %p244 = scmp.ne.s32.totalorder %s236, %s239
      %p245 = scmp.eq.s32.totalorder %s15, 0
      %p246 = por %p244, %p245
      %p247 = scmp.ne.s32.totalorder %s236, %s239
      %p248 = scmp.eq.s32.totalorder %s20, 7
      %p249 = por %p247, %p248
      %p250 = scmp.ne.s32.totalorder %s239, %s240
      %p251 = scmp.eq.s32.totalorder %s20, 0
      %p252 = por %p250, %p251
      %p253 = scmp.ne.s32.totalorder %s239, %s240
      %p254 = scmp.eq.s32.totalorder %s21, 7
      %p255 = por %p253, %p254
      %p257 = scmp.ne.s32.totalorder %s240, %s256
      %p258 = scmp.eq.s32.totalorder %s21, 0
      %p259 = por %p257, %p258
      %s260 = ssub.s32 %s22, %s41
      %s261 = ssub.s32 %s23, %s37
      %s262 = sor.u32 %s260, %s261
      %p263 = scmp.eq.s32.totalorder %s262, 0
      %s265 = sadd.s32 %s264, 1
      %s266 = scalar_select %p263, %s264, %s265
      %p269 = pneg %p263
      %p270 = scmp.eq.s32.totalorder %s15, 7
      %p271 = por %p269, %p270
      %p272 = scmp.ne.s32.totalorder %s264, %s267
      %p273 = scmp.eq.s32.totalorder %s15, 0
      %p274 = por %p272, %p273
      %p275 = scmp.ne.s32.totalorder %s264, %s267
      %p276 = scmp.eq.s32.totalorder %s20, 7
      %p277 = por %p275, %p276
      %p278 = scmp.ne.s32.totalorder %s267, %s268
      %p279 = scmp.eq.s32.totalorder %s20, 0
      %p280 = por %p278, %p279
      %p281 = scmp.ne.s32.totalorder %s267, %s268
      %p282 = scmp.eq.s32.totalorder %s21, 7
      %p283 = por %p281, %p282
      %p285 = scmp.ne.s32.totalorder %s268, %s284
      %p286 = scmp.eq.s32.totalorder %s21, 0
      %p287 = por %p285, %p286
      %p288 = scmp.le.s32.totalorder 1, %s15
      %p289 = scmp.lt.s32.totalorder %s15, 9
      %p290 = pnand %p288, %p289
      %p291 = pneg %p290
      // Predicated region
      $region9: #{fused_linear_forward.2} parent=5 // pred_check
        _
      $region10: #{fused_linear_forward.2} parent=5 // pred_check_branch
        %293 = sbr.rel (%p290) target = $region12
      $region11: #{fused_linear_forward.2} parent=5 // pred_region
        %s294 = ssub.s32 %s15, 1
      $region12: #{fused_linear_forward.2} parent=5 // pred_fallthru
        _
      %p295 = scmp.lt.s32.totalorder %s15, 8
      // Predicated region
      $region13: #{fused_linear_forward.2} parent=5 // pred_check
        %p296 = pneg %p295
      $region14: #{fused_linear_forward.2} parent=5 // pred_check_branch
        %298 = sbr.rel (%p296) target = $region16
      $region15: #{fused_linear_forward.2} parent=5 // pred_region
        // Predicated region
        $region17: #{fused_linear_forward.2} parent=15 // pred_check
          %p299 = pneg %p56
        $region18: #{fused_linear_forward.2} parent=15 // pred_check_branch
          %301 = sbr.rel (%p299) target = $region20
        $region19: #{fused_linear_forward.2} parent=15 // pred_region
          %s302 = sand.u32 %s46, 1
          %s303 = sand.u32 %s46, 1
          %s304 = smul.addr %s303, 128
          %s305 = scalar_lea.vmem [#allocation2], %s304
          %s306 = smul.u32 16, %s22
          %s307 = smul.u32 2, %s24
          %s308 = smul.addr %s306, 4
          %s309 = sadd.s32 %s307, %s308
          %s310 = smul.addr %s309, 4
          %s311 = scalar_lea.vmem %s0, %s310
          // Predicated region
          $region21: #{fused_linear_forward.2} parent=19 // pred_check
            _
          $region22: #{fused_linear_forward.2} parent=19 // pred_check_branch
            %313 = sbr.rel (0) target = $region24
          $region23: #{fused_linear_forward.2} parent=19 // pred_region
            // Predicated region
            $region25: #{fused_linear_forward.2} parent=23 // pred_check
              _
            $region26: #{fused_linear_forward.2} parent=23 // pred_check_branch
              %315 = sbr.rel (0) target = $region28
            $region27: #{fused_linear_forward.2} parent=23 // pred_region
              // Predicated region
              $region40: #{fused_linear_forward.2} parent=27 // pred_check
                _
              $region41: #{fused_linear_forward.2} parent=27 // pred_check_branch
                %361 = sbr.rel (0) target = $region43
              $region42: #{fused_linear_forward.2} parent=27 // pred_region
                loop: start=0, step=1, limit=1
                $region44: #{fused_linear_forward.2} parent=42 // loop_pre_header
                  _
                $region45: #{fused_linear_forward.2} parent=42 // loop_header
                  %s363 = sphi 0, %s367
                  %p364 = scmp.ge.s32.totalorder %s363, 1
                  %s368 = sphi %s311, %s311
                  %s369 = sphi %s305, %s305
                $region46: #{fused_linear_forward.2} parent=42 // loop_header_branch
                  %366 = sbr.rel (%p364) target = $region50
                $region47: #{fused_linear_forward.2} parent=42 // loop_body
                  %v370 = vld [vmem:[%s368] sm:$0xff]
                  %371 = vst [vmem:[%s369] sm:$0xff] %v370
                  %v372 = vld [vmem:[%s368 + $0x10] sm:$0xff]
                  %373 = vst [vmem:[%s369 + $0x8] sm:$0xff] %v372
                  %v374 = vld [vmem:[%s368 + $0x20] sm:$0xff]
                  %375 = vst [vmem:[%s369 + $0x10] sm:$0xff] %v374
                  %v376 = vld [vmem:[%s368 + $0x30] sm:$0xff]
                  %377 = vst [vmem:[%s369 + $0x18] sm:$0xff] %v376
                  %v378 = vld [vmem:[%s368 + $0x40] sm:$0xff]
                  %379 = vst [vmem:[%s369 + $0x20] sm:$0xff] %v378
                  %v380 = vld [vmem:[%s368 + $0x50] sm:$0xff]
                  %381 = vst [vmem:[%s369 + $0x28] sm:$0xff] %v380
                  %v382 = vld [vmem:[%s368 + $0x60] sm:$0xff]
                  %383 = vst [vmem:[%s369 + $0x30] sm:$0xff] %v382
                  %v384 = vld [vmem:[%s368 + $0x70] sm:$0xff]
                  %385 = vst [vmem:[%s369 + $0x38] sm:$0xff] %v384
                  %v386 = vld [vmem:[%s368 + $0x80] sm:$0xff]
                  %387 = vst [vmem:[%s369 + $0x40] sm:$0xff] %v386
                  %v388 = vld [vmem:[%s368 + $0x90] sm:$0xff]
                  %389 = vst [vmem:[%s369 + $0x48] sm:$0xff] %v388
                  %v390 = vld [vmem:[%s368 + $0xa0] sm:$0xff]
                  %391 = vst [vmem:[%s369 + $0x50] sm:$0xff] %v390
                  %v392 = vld [vmem:[%s368 + $0xb0] sm:$0xff]
                  %393 = vst [vmem:[%s369 + $0x58] sm:$0xff] %v392
                  %v394 = vld [vmem:[%s368 + $0xc0] sm:$0xff]
                  %395 = vst [vmem:[%s369 + $0x60] sm:$0xff] %v394
                  %v396 = vld [vmem:[%s368 + $0xd0] sm:$0xff]
                  %397 = vst [vmem:[%s369 + $0x68] sm:$0xff] %v396
                  %v398 = vld [vmem:[%s368 + $0xe0] sm:$0xff]
                  %399 = vst [vmem:[%s369 + $0x70] sm:$0xff] %v398
                  %v400 = vld [vmem:[%s368 + $0xf0] sm:$0xff]
                  %401 = vst [vmem:[%s369 + $0x78] sm:$0xff] %v400
                $region48: #{fused_linear_forward.2} parent=42 // loop_footer
                  %s367 = sadd.s32 1, %s363
                $region49: #{fused_linear_forward.2} parent=42 // loop_footer_branch
                  %362 = sbr.rel target = $region45
                $region50: #{fused_linear_forward.2} parent=42 // loop_exit
                  _
              $region43: #{fused_linear_forward.2} parent=27 // pred_fallthru
                _
              // Predicated region
              $region51: #{fused_linear_forward.2} parent=27 // pred_check
                _
              $region52: #{fused_linear_forward.2} parent=27 // pred_check_branch
                %403 = sbr.rel target = $region54
              $region53: #{fused_linear_forward.2} parent=27 // pred_region
                _
              $region54: #{fused_linear_forward.2} parent=27 // pred_fallthru
                _
            $region28: #{fused_linear_forward.2} parent=23 // pred_fallthru
              _
            // Predicated region
            $region29: #{fused_linear_forward.2} parent=23 // pred_check
              _
            $region30: #{fused_linear_forward.2} parent=23 // pred_check_branch
              %317 = sbr.rel target = $region32
            $region31: #{fused_linear_forward.2} parent=23 // pred_region
              %s319 = ssub.s32 256, 1
              loop: start=0, step=1, limit=1
              $region33: #{fused_linear_forward.2} parent=31 // loop_pre_header
                _
              $region34: #{fused_linear_forward.2} parent=31 // loop_header
                %s321 = sphi 0, %s325
                %p322 = scmp.ge.s32.totalorder %s321, 1
                %s326 = sphi %s311, %s311
                %s327 = sphi %s305, %s305
              $region35: #{fused_linear_forward.2} parent=31 // loop_header_branch
                %324 = sbr.rel (%p322) target = $region39
              $region36: #{fused_linear_forward.2} parent=31 // loop_body
                %v328 = vld [vmem:[%s326] sm:%s319]
                %329 = vst [vmem:[%s327] sm:%s319] %v328
                %v330 = vld [vmem:[%s326 + $0x10] sm:%s319]
                %331 = vst [vmem:[%s327 + $0x8] sm:%s319] %v330
                %v332 = vld [vmem:[%s326 + $0x20] sm:%s319]
                %333 = vst [vmem:[%s327 + $0x10] sm:%s319] %v332
                %v334 = vld [vmem:[%s326 + $0x30] sm:%s319]
                %335 = vst [vmem:[%s327 + $0x18] sm:%s319] %v334
                %v336 = vld [vmem:[%s326 + $0x40] sm:%s319]
                %337 = vst [vmem:[%s327 + $0x20] sm:%s319] %v336
                %v338 = vld [vmem:[%s326 + $0x50] sm:%s319]
                %339 = vst [vmem:[%s327 + $0x28] sm:%s319] %v338
                %v340 = vld [vmem:[%s326 + $0x60] sm:%s319]
                %341 = vst [vmem:[%s327 + $0x30] sm:%s319] %v340
                %v342 = vld [vmem:[%s326 + $0x70] sm:%s319]
                %343 = vst [vmem:[%s327 + $0x38] sm:%s319] %v342
                %v344 = vld [vmem:[%s326 + $0x80] sm:%s319]
                %345 = vst [vmem:[%s327 + $0x40] sm:%s319] %v344
                %v346 = vld [vmem:[%s326 + $0x90] sm:%s319]
                %347 = vst [vmem:[%s327 + $0x48] sm:%s319] %v346
                %v348 = vld [vmem:[%s326 + $0xa0] sm:%s319]
                %349 = vst [vmem:[%s327 + $0x50] sm:%s319] %v348
                %v350 = vld [vmem:[%s326 + $0xb0] sm:%s319]
                %351 = vst [vmem:[%s327 + $0x58] sm:%s319] %v350
                %v352 = vld [vmem:[%s326 + $0xc0] sm:%s319]
                %353 = vst [vmem:[%s327 + $0x60] sm:%s319] %v352
                %v354 = vld [vmem:[%s326 + $0xd0] sm:%s319]
                %355 = vst [vmem:[%s327 + $0x68] sm:%s319] %v354
                %v356 = vld [vmem:[%s326 + $0xe0] sm:%s319]
                %357 = vst [vmem:[%s327 + $0x70] sm:%s319] %v356
                %v358 = vld [vmem:[%s326 + $0xf0] sm:%s319]
                %359 = vst [vmem:[%s327 + $0x78] sm:%s319] %v358
              $region37: #{fused_linear_forward.2} parent=31 // loop_footer
                %s325 = sadd.s32 1, %s321
              $region38: #{fused_linear_forward.2} parent=31 // loop_footer_branch
                %320 = sbr.rel target = $region34
              $region39: #{fused_linear_forward.2} parent=31 // loop_exit
                _
            $region32: #{fused_linear_forward.2} parent=23 // pred_fallthru
              _
          $region24: #{fused_linear_forward.2} parent=19 // pred_fallthru
            _
          %404 = vnop
        $region20: #{fused_linear_forward.2} parent=15 // pred_fallthru
          _
        // Predicated region
        $region55: #{fused_linear_forward.2} parent=15 // pred_check
          %p405 = pneg %p84
        $region56: #{fused_linear_forward.2} parent=15 // pred_check_branch
          %407 = sbr.rel (%p405) target = $region58
        $region57: #{fused_linear_forward.2} parent=15 // pred_region
          %s408 = sand.u32 %s74, 1
          %s409 = sand.u32 %s74, 1
          %s410 = smul.addr %s409, 128
          %s411 = scalar_lea.vmem [#allocation3], %s410
          %s412 = smul.u32 32, %s24
          %s413 = smul.addr %s412, 2
          %s414 = sadd.s32 %s23, %s413
          %s415 = smul.addr %s414, 4
          %s416 = scalar_lea.vmem %s1, %s415
          // Predicated region
          $region59: #{fused_linear_forward.2} parent=57 // pred_check
            _
          $region60: #{fused_linear_forward.2} parent=57 // pred_check_branch
            %418 = sbr.rel (0) target = $region62
          $region61: #{fused_linear_forward.2} parent=57 // pred_region
            // Predicated region
            $region63: #{fused_linear_forward.2} parent=61 // pred_check
              _
            $region64: #{fused_linear_forward.2} parent=61 // pred_check_branch
              %420 = sbr.rel target = $region66
            $region65: #{fused_linear_forward.2} parent=61 // pred_region
              // Predicated region
              $region78: #{fused_linear_forward.2} parent=65 // pred_check
                _
              $region79: #{fused_linear_forward.2} parent=65 // pred_check_branch
                %498 = sbr.rel (0) target = $region81
              $region80: #{fused_linear_forward.2} parent=65 // pred_region
                loop: start=0, step=1, limit=1
                $region82: #{fused_linear_forward.2} parent=80 // loop_pre_header
                  _
                $region83: #{fused_linear_forward.2} parent=80 // loop_header
                  %s500 = sphi 0, %s504
                  %p501 = scmp.ge.s32.totalorder %s500, 1
                  %s505 = sphi %s416, %s416
                  %s506 = sphi %s411, %s411
                $region84: #{fused_linear_forward.2} parent=80 // loop_header_branch
                  %503 = sbr.rel (%p501) target = $region88
                $region85: #{fused_linear_forward.2} parent=80 // loop_body
                  _
                $region86: #{fused_linear_forward.2} parent=80 // loop_footer
                  %s504 = sadd.s32 1, %s500
                $region87: #{fused_linear_forward.2} parent=80 // loop_footer_branch
                  %499 = sbr.rel target = $region83
                $region88: #{fused_linear_forward.2} parent=80 // loop_exit
                  _
                %s508 = ssub.s32 16, 1
                loop: start=0, step=1, limit=1
                $region89: #{fused_linear_forward.2} parent=80 // loop_pre_header
                  _
                $region90: #{fused_linear_forward.2} parent=80 // loop_header
                  %s510 = sphi 0, %s514
                  %p511 = scmp.ge.s32.totalorder %s510, 1
                  %s515 = sphi %s416, %s416
                  %s516 = sphi %s411, %s411
                $region91: #{fused_linear_forward.2} parent=80 // loop_header_branch
                  %513 = sbr.rel (%p511) target = $region95
                $region92: #{fused_linear_forward.2} parent=80 // loop_body
                  %v517 = vld [vmem:[%s515] sm:%s508]
                  %518 = vst [vmem:[%s516] sm:%s508] %v517
                  %v519 = vld [vmem:[%s515 + $0x8] sm:%s508]
                  %520 = vst [vmem:[%s516 + $0x4] sm:%s508] %v519
                  %v521 = vld [vmem:[%s515 + $0x10] sm:%s508]
                  %522 = vst [vmem:[%s516 + $0x8] sm:%s508] %v521
                  %v523 = vld [vmem:[%s515 + $0x18] sm:%s508]
                  %524 = vst [vmem:[%s516 + $0xc] sm:%s508] %v523
                  %v525 = vld [vmem:[%s515 + $0x20] sm:%s508]
                  %526 = vst [vmem:[%s516 + $0x10] sm:%s508] %v525
                  %v527 = vld [vmem:[%s515 + $0x28] sm:%s508]
                  %528 = vst [vmem:[%s516 + $0x14] sm:%s508] %v527
                  %v529 = vld [vmem:[%s515 + $0x30] sm:%s508]
                  %530 = vst [vmem:[%s516 + $0x18] sm:%s508] %v529
                  %v531 = vld [vmem:[%s515 + $0x38] sm:%s508]
                  %532 = vst [vmem:[%s516 + $0x1c] sm:%s508] %v531
                  %v533 = vld [vmem:[%s515 + $0x40] sm:%s508]
                  %534 = vst [vmem:[%s516 + $0x20] sm:%s508] %v533
                  %v535 = vld [vmem:[%s515 + $0x48] sm:%s508]
                  %536 = vst [vmem:[%s516 + $0x24] sm:%s508] %v535
                  %v537 = vld [vmem:[%s515 + $0x50] sm:%s508]
                  %538 = vst [vmem:[%s516 + $0x28] sm:%s508] %v537
                  %v539 = vld [vmem:[%s515 + $0x58] sm:%s508]
                  %540 = vst [vmem:[%s516 + $0x2c] sm:%s508] %v539
                  %v541 = vld [vmem:[%s515 + $0x60] sm:%s508]
                  %542 = vst [vmem:[%s516 + $0x30] sm:%s508] %v541
                  %v543 = vld [vmem:[%s515 + $0x68] sm:%s508]
                  %544 = vst [vmem:[%s516 + $0x34] sm:%s508] %v543
                  %v545 = vld [vmem:[%s515 + $0x70] sm:%s508]
                  %546 = vst [vmem:[%s516 + $0x38] sm:%s508] %v545
                  %v547 = vld [vmem:[%s515 + $0x78] sm:%s508]
                  %548 = vst [vmem:[%s516 + $0x3c] sm:%s508] %v547
                  %v549 = vld [vmem:[%s515 + $0x80] sm:%s508]
                  %550 = vst [vmem:[%s516 + $0x40] sm:%s508] %v549
                  %v551 = vld [vmem:[%s515 + $0x88] sm:%s508]
                  %552 = vst [vmem:[%s516 + $0x44] sm:%s508] %v551
                  %v553 = vld [vmem:[%s515 + $0x90] sm:%s508]
                  %554 = vst [vmem:[%s516 + $0x48] sm:%s508] %v553
                  %v555 = vld [vmem:[%s515 + $0x98] sm:%s508]
                  %556 = vst [vmem:[%s516 + $0x4c] sm:%s508] %v555
                  %v557 = vld [vmem:[%s515 + $0xa0] sm:%s508]
                  %558 = vst [vmem:[%s516 + $0x50] sm:%s508] %v557
                  %v559 = vld [vmem:[%s515 + $0xa8] sm:%s508]
                  %560 = vst [vmem:[%s516 + $0x54] sm:%s508] %v559
                  %v561 = vld [vmem:[%s515 + $0xb0] sm:%s508]
                  %562 = vst [vmem:[%s516 + $0x58] sm:%s508] %v561
                  %v563 = vld [vmem:[%s515 + $0xb8] sm:%s508]
                  %564 = vst [vmem:[%s516 + $0x5c] sm:%s508] %v563
                  %v565 = vld [vmem:[%s515 + $0xc0] sm:%s508]
                  %566 = vst [vmem:[%s516 + $0x60] sm:%s508] %v565
                  %v567 = vld [vmem:[%s515 + $0xc8] sm:%s508]
                  %568 = vst [vmem:[%s516 + $0x64] sm:%s508] %v567
                  %v569 = vld [vmem:[%s515 + $0xd0] sm:%s508]
                  %570 = vst [vmem:[%s516 + $0x68] sm:%s508] %v569
                  %v571 = vld [vmem:[%s515 + $0xd8] sm:%s508]
                  %572 = vst [vmem:[%s516 + $0x6c] sm:%s508] %v571
                  %v573 = vld [vmem:[%s515 + $0xe0] sm:%s508]
                  %574 = vst [vmem:[%s516 + $0x70] sm:%s508] %v573
                  %v575 = vld [vmem:[%s515 + $0xe8] sm:%s508]
                  %576 = vst [vmem:[%s516 + $0x74] sm:%s508] %v575
                  %v577 = vld [vmem:[%s515 + $0xf0] sm:%s508]
                  %578 = vst [vmem:[%s516 + $0x78] sm:%s508] %v577
                  %v579 = vld [vmem:[%s515 + $0xf8] sm:%s508]
                  %580 = vst [vmem:[%s516 + $0x7c] sm:%s508] %v579
                $region93: #{fused_linear_forward.2} parent=80 // loop_footer
                  %s514 = sadd.s32 1, %s510
                $region94: #{fused_linear_forward.2} parent=80 // loop_footer_branch
                  %509 = sbr.rel target = $region90
                $region95: #{fused_linear_forward.2} parent=80 // loop_exit
                  _
              $region81: #{fused_linear_forward.2} parent=65 // pred_fallthru
                _
            $region66: #{fused_linear_forward.2} parent=61 // pred_fallthru
              _
            // Predicated region
            $region67: #{fused_linear_forward.2} parent=61 // pred_check
              _
            $region68: #{fused_linear_forward.2} parent=61 // pred_check_branch
              %422 = sbr.rel (0) target = $region70
            $region69: #{fused_linear_forward.2} parent=61 // pred_region
              %s424 = ssub.s32 16, 1
              loop: start=0, step=1, limit=1
              $region71: #{fused_linear_forward.2} parent=69 // loop_pre_header
                _
              $region72: #{fused_linear_forward.2} parent=69 // loop_header
                %s426 = sphi 0, %s430
                %p427 = scmp.ge.s32.totalorder %s426, 1
                %s431 = sphi %s416, %s416
                %s432 = sphi %s411, %s411
              $region73: #{fused_linear_forward.2} parent=69 // loop_header_branch
                %429 = sbr.rel (%p427) target = $region77
              $region74: #{fused_linear_forward.2} parent=69 // loop_body
                %v433 = vld [vmem:[%s431] sm:%s424]
                %434 = vst [vmem:[%s432] sm:%s424] %v433
                %v435 = vld [vmem:[%s431 + $0x8] sm:%s424]
                %436 = vst [vmem:[%s432 + $0x4] sm:%s424] %v435
                %v437 = vld [vmem:[%s431 + $0x10] sm:%s424]
                %438 = vst [vmem:[%s432 + $0x8] sm:%s424] %v437
                %v439 = vld [vmem:[%s431 + $0x18] sm:%s424]
                %440 = vst [vmem:[%s432 + $0xc] sm:%s424] %v439
                %v441 = vld [vmem:[%s431 + $0x20] sm:%s424]
                %442 = vst [vmem:[%s432 + $0x10] sm:%s424] %v441
                %v443 = vld [vmem:[%s431 + $0x28] sm:%s424]
                %444 = vst [vmem:[%s432 + $0x14] sm:%s424] %v443
                %v445 = vld [vmem:[%s431 + $0x30] sm:%s424]
                %446 = vst [vmem:[%s432 + $0x18] sm:%s424] %v445
                %v447 = vld [vmem:[%s431 + $0x38] sm:%s424]
                %448 = vst [vmem:[%s432 + $0x1c] sm:%s424] %v447
                %v449 = vld [vmem:[%s431 + $0x40] sm:%s424]
                %450 = vst [vmem:[%s432 + $0x20] sm:%s424] %v449
                %v451 = vld [vmem:[%s431 + $0x48] sm:%s424]
                %452 = vst [vmem:[%s432 + $0x24] sm:%s424] %v451
                %v453 = vld [vmem:[%s431 + $0x50] sm:%s424]
                %454 = vst [vmem:[%s432 + $0x28] sm:%s424] %v453
                %v455 = vld [vmem:[%s431 + $0x58] sm:%s424]
                %456 = vst [vmem:[%s432 + $0x2c] sm:%s424] %v455
                %v457 = vld [vmem:[%s431 + $0x60] sm:%s424]
                %458 = vst [vmem:[%s432 + $0x30] sm:%s424] %v457
                %v459 = vld [vmem:[%s431 + $0x68] sm:%s424]
                %460 = vst [vmem:[%s432 + $0x34] sm:%s424] %v459
                %v461 = vld [vmem:[%s431 + $0x70] sm:%s424]
                %462 = vst [vmem:[%s432 + $0x38] sm:%s424] %v461
                %v463 = vld [vmem:[%s431 + $0x78] sm:%s424]
                %464 = vst [vmem:[%s432 + $0x3c] sm:%s424] %v463
                %v465 = vld [vmem:[%s431 + $0x80] sm:%s424]
                %466 = vst [vmem:[%s432 + $0x40] sm:%s424] %v465
                %v467 = vld [vmem:[%s431 + $0x88] sm:%s424]
                %468 = vst [vmem:[%s432 + $0x44] sm:%s424] %v467
                %v469 = vld [vmem:[%s431 + $0x90] sm:%s424]
                %470 = vst [vmem:[%s432 + $0x48] sm:%s424] %v469
                %v471 = vld [vmem:[%s431 + $0x98] sm:%s424]
                %472 = vst [vmem:[%s432 + $0x4c] sm:%s424] %v471
                %v473 = vld [vmem:[%s431 + $0xa0] sm:%s424]
                %474 = vst [vmem:[%s432 + $0x50] sm:%s424] %v473
                %v475 = vld [vmem:[%s431 + $0xa8] sm:%s424]
                %476 = vst [vmem:[%s432 + $0x54] sm:%s424] %v475
                %v477 = vld [vmem:[%s431 + $0xb0] sm:%s424]
                %478 = vst [vmem:[%s432 + $0x58] sm:%s424] %v477
                %v479 = vld [vmem:[%s431 + $0xb8] sm:%s424]
                %480 = vst [vmem:[%s432 + $0x5c] sm:%s424] %v479
                %v481 = vld [vmem:[%s431 + $0xc0] sm:%s424]
                %482 = vst [vmem:[%s432 + $0x60] sm:%s424] %v481
                %v483 = vld [vmem:[%s431 + $0xc8] sm:%s424]
                %484 = vst [vmem:[%s432 + $0x64] sm:%s424] %v483
                %v485 = vld [vmem:[%s431 + $0xd0] sm:%s424]
                %486 = vst [vmem:[%s432 + $0x68] sm:%s424] %v485
                %v487 = vld [vmem:[%s431 + $0xd8] sm:%s424]
                %488 = vst [vmem:[%s432 + $0x6c] sm:%s424] %v487
                %v489 = vld [vmem:[%s431 + $0xe0] sm:%s424]
                %490 = vst [vmem:[%s432 + $0x70] sm:%s424] %v489
                %v491 = vld [vmem:[%s431 + $0xe8] sm:%s424]
                %492 = vst [vmem:[%s432 + $0x74] sm:%s424] %v491
                %v493 = vld [vmem:[%s431 + $0xf0] sm:%s424]
                %494 = vst [vmem:[%s432 + $0x78] sm:%s424] %v493
                %v495 = vld [vmem:[%s431 + $0xf8] sm:%s424]
                %496 = vst [vmem:[%s432 + $0x7c] sm:%s424] %v495
              $region75: #{fused_linear_forward.2} parent=69 // loop_footer
                %s430 = sadd.s32 1, %s426
              $region76: #{fused_linear_forward.2} parent=69 // loop_footer_branch
                %425 = sbr.rel target = $region72
              $region77: #{fused_linear_forward.2} parent=69 // loop_exit
                _
            $region70: #{fused_linear_forward.2} parent=61 // pred_fallthru
              _
          $region62: #{fused_linear_forward.2} parent=57 // pred_fallthru
            _
          %581 = vnop
        $region58: #{fused_linear_forward.2} parent=15 // pred_fallthru
          _
        // Predicated region
        $region96: #{fused_linear_forward.2} parent=15 // pred_check
          %p582 = pneg %p110
        $region97: #{fused_linear_forward.2} parent=15 // pred_check_branch
          %584 = sbr.rel (%p582) target = $region99
        $region98: #{fused_linear_forward.2} parent=15 // pred_region
          %s585 = smul.u32 32, %s24
          %p586 = scmp.lt.s32.totalorder %s585, 63
          %s587 = scalar_select %p586, %s585, 63
          %s588 = smul.addr %s587, 4
          %s589 = scalar_lea.vmem %s2, %s588
          %s590 = smul.u32 32, %s24
        $region99: #{fused_linear_forward.2} parent=15 // pred_fallthru
          _
        // Predicated region
        $region100: #{fused_linear_forward.2} parent=15 // pred_check
          %p591 = pneg %p136
        $region101: #{fused_linear_forward.2} parent=15 // pred_check_branch
          %593 = sbr.rel (%p591) target = $region103
        $region102: #{fused_linear_forward.2} parent=15 // pred_region
          %s594 = sand.u32 %s126, 1
          %s595 = sand.u32 %s126, 1
          %s596 = smul.addr %s595, 16
          %s597 = scalar_lea.vmem [#allocation4], %s596
          %s598 = smul.addr %s23, 4
          %s599 = scalar_lea.vmem %s3, %s598
          // Predicated region
          $region104: #{fused_linear_forward.2} parent=102 // pred_check
            _
          $region105: #{fused_linear_forward.2} parent=102 // pred_check_branch
            %601 = sbr.rel (0) target = $region107
          $region106: #{fused_linear_forward.2} parent=102 // pred_region
            // Predicated region
            $region108: #{fused_linear_forward.2} parent=106 // pred_check
              _
            $region109: #{fused_linear_forward.2} parent=106 // pred_check_branch
              %603 = sbr.rel target = $region111
            $region110: #{fused_linear_forward.2} parent=106 // pred_region
              // Predicated region
              $region123: #{fused_linear_forward.2} parent=110 // pred_check
                _
              $region124: #{fused_linear_forward.2} parent=110 // pred_check_branch
                %625 = sbr.rel (0) target = $region126
              $region125: #{fused_linear_forward.2} parent=110 // pred_region
                loop: start=0, step=1, limit=1
                $region127: #{fused_linear_forward.2} parent=125 // loop_pre_header
                  _
                $region128: #{fused_linear_forward.2} parent=125 // loop_header
                  %s627 = sphi 0, %s631
                  %p628 = scmp.ge.s32.totalorder %s627, 1
                  %s632 = sphi %s599, %s599
                  %s633 = sphi %s597, %s597
                $region129: #{fused_linear_forward.2} parent=125 // loop_header_branch
                  %630 = sbr.rel (%p628) target = $region133
                $region130: #{fused_linear_forward.2} parent=125 // loop_body
                  _
                $region131: #{fused_linear_forward.2} parent=125 // loop_footer
                  %s631 = sadd.s32 1, %s627
                $region132: #{fused_linear_forward.2} parent=125 // loop_footer_branch
                  %626 = sbr.rel target = $region128
                $region133: #{fused_linear_forward.2} parent=125 // loop_exit
                  _
                %s635 = ssub.s32 16, 1
                loop: start=0, step=1, limit=1
                $region134: #{fused_linear_forward.2} parent=125 // loop_pre_header
                  _
                $region135: #{fused_linear_forward.2} parent=125 // loop_header
                  %s637 = sphi 0, %s641
                  %p638 = scmp.ge.s32.totalorder %s637, 1
                  %s642 = sphi %s599, %s599
                  %s643 = sphi %s597, %s597
                $region136: #{fused_linear_forward.2} parent=125 // loop_header_branch
                  %640 = sbr.rel (%p638) target = $region140
                $region137: #{fused_linear_forward.2} parent=125 // loop_body
                  %v644 = vld [vmem:[%s642] sm:%s635]
                  %645 = vst [vmem:[%s643] sm:%s635] %v644
                  %v646 = vld [vmem:[%s642 + $0x8] sm:%s635]
                  %647 = vst [vmem:[%s643 + $0x4] sm:%s635] %v646
                  %v648 = vld [vmem:[%s642 + $0x10] sm:%s635]
                  %649 = vst [vmem:[%s643 + $0x8] sm:%s635] %v648
                  %v650 = vld [vmem:[%s642 + $0x18] sm:%s635]
                  %651 = vst [vmem:[%s643 + $0xc] sm:%s635] %v650
                $region138: #{fused_linear_forward.2} parent=125 // loop_footer
                  %s641 = sadd.s32 1, %s637
                $region139: #{fused_linear_forward.2} parent=125 // loop_footer_branch
                  %636 = sbr.rel target = $region135
                $region140: #{fused_linear_forward.2} parent=125 // loop_exit
                  _
              $region126: #{fused_linear_forward.2} parent=110 // pred_fallthru
                _
            $region111: #{fused_linear_forward.2} parent=106 // pred_fallthru
              _
            // Predicated region
            $region112: #{fused_linear_forward.2} parent=106 // pred_check
              _
            $region113: #{fused_linear_forward.2} parent=106 // pred_check_branch
              %605 = sbr.rel (0) target = $region115
            $region114: #{fused_linear_forward.2} parent=106 // pred_region
              %s607 = ssub.s32 16, 1
              loop: start=0, step=1, limit=1
              $region116: #{fused_linear_forward.2} parent=114 // loop_pre_header
                _
              $region117: #{fused_linear_forward.2} parent=114 // loop_header
                %s609 = sphi 0, %s613
                %p610 = scmp.ge.s32.totalorder %s609, 1
                %s614 = sphi %s599, %s599
                %s615 = sphi %s597, %s597
              $region118: #{fused_linear_forward.2} parent=114 // loop_header_branch
                %612 = sbr.rel (%p610) target = $region122
              $region119: #{fused_linear_forward.2} parent=114 // loop_body
                %v616 = vld [vmem:[%s614] sm:%s607]
                %617 = vst [vmem:[%s615] sm:%s607] %v616
                %v618 = vld [vmem:[%s614 + $0x8] sm:%s607]
                %619 = vst [vmem:[%s615 + $0x4] sm:%s607] %v618
                %v620 = vld [vmem:[%s614 + $0x10] sm:%s607]
                %621 = vst [vmem:[%s615 + $0x8] sm:%s607] %v620
                %v622 = vld [vmem:[%s614 + $0x18] sm:%s607]
                %623 = vst [vmem:[%s615 + $0xc] sm:%s607] %v622
              $region120: #{fused_linear_forward.2} parent=114 // loop_footer
                %s613 = sadd.s32 1, %s609
              $region121: #{fused_linear_forward.2} parent=114 // loop_footer_branch
                %608 = sbr.rel target = $region117
              $region122: #{fused_linear_forward.2} parent=114 // loop_exit
                _
            $region115: #{fused_linear_forward.2} parent=106 // pred_fallthru
              _
          $region107: #{fused_linear_forward.2} parent=102 // pred_fallthru
            _
          %652 = vnop
        $region103: #{fused_linear_forward.2} parent=15 // pred_fallthru
          _
        // Predicated region
        $region141: #{fused_linear_forward.2} parent=15 // pred_check
          %p653 = pneg %p162
        $region142: #{fused_linear_forward.2} parent=15 // pred_check_branch
          %655 = sbr.rel (%p653) target = $region144
        $region143: #{fused_linear_forward.2} parent=15 // pred_region
          %s656 = smul.u32 16, %s22
          %p657 = scmp.lt.s32.totalorder %s656, 31
          %s658 = scalar_select %p657, %s656, 31
          %s659 = smul.addr %s658, 8
          %s660 = scalar_lea.vmem %s4, %s659
          %s661 = smul.u32 16, %s22
        $region144: #{fused_linear_forward.2} parent=15 // pred_fallthru
          _
      $region16: #{fused_linear_forward.2} parent=5 // pred_fallthru
        _
      %p662 = scmp.le.s32.totalorder 1, %s15
      %p663 = scmp.lt.s32.totalorder %s15, 9
      %p664 = pnand %p662, %p663
      %p665 = pneg %p664
      // Predicated region
      $region145: #{fused_linear_forward.2} parent=5 // pred_check
        _
      $region146: #{fused_linear_forward.2} parent=5 // pred_check_branch
        %667 = sbr.rel (%p664) target = $region148
      $region147: #{fused_linear_forward.2} parent=5 // pred_region
        %s668 = ssub.s32 %s15, 1
        %s669 = sand.u32 %s49, 1
        %s670 = sand.u32 %s49, 1
        %s671 = smul.addr %s670, 128
        %s672 = scalar_lea.vmem [#allocation2], %s671
        // Predicated region
        $region149: #{fused_linear_forward.2} parent=147 // pred_check
          %p673 = pneg %p62
        $region150: #{fused_linear_forward.2} parent=147 // pred_check_branch
          %675 = sbr.rel (%p673) target = $region152
        $region151: #{fused_linear_forward.2} parent=147 // pred_region
          _
        $region152: #{fused_linear_forward.2} parent=147 // pred_fallthru
          _
        %s676 = sand.u32 %s77, 1
        %s677 = sand.u32 %s77, 1
        %s678 = smul.addr %s677, 128
        %s679 = scalar_lea.vmem [#allocation3], %s678
        // Predicated region
        $region153: #{fused_linear_forward.2} parent=147 // pred_check
          %p680 = pneg %p90
        $region154: #{fused_linear_forward.2} parent=147 // pred_check_branch
          %682 = sbr.rel (%p680) target = $region156
        $region155: #{fused_linear_forward.2} parent=147 // pred_region
          _
        $region156: #{fused_linear_forward.2} parent=147 // pred_fallthru
          _
        %s683 = sand.u32 %s129, 1
        %s684 = sand.u32 %s129, 1
        %s685 = smul.addr %s684, 16
        %s686 = scalar_lea.vmem [#allocation4], %s685
        // Predicated region
        $region157: #{fused_linear_forward.2} parent=147 // pred_check
          %p687 = pneg %p142
        $region158: #{fused_linear_forward.2} parent=147 // pred_check_branch
          %689 = sbr.rel (%p687) target = $region160
        $region159: #{fused_linear_forward.2} parent=147 // pred_region
          _
        $region160: #{fused_linear_forward.2} parent=147 // pred_fallthru
          _
        %s690 = sand.u32 %s49, 1
        %s691 = sand.u32 %s49, 1
        %s692 = smul.addr %s691, 128
        %s693 = scalar_lea.vmem [#allocation2], %s692
        %p694 = pneg %p62
        %p695 = pneg %p59
        %s696 = sand.u32 %s77, 1
        %s697 = sand.u32 %s77, 1
        %s698 = smul.addr %s697, 128
        %s699 = scalar_lea.vmem [#allocation3], %s698
        %p700 = pneg %p90
        %p701 = pneg %p87
        %s702 = smul.u32 32, %s27
        %p703 = scmp.lt.s32.totalorder %s702, 63
        %s704 = scalar_select %p703, %s702, 63
        %s705 = smul.addr %s704, 4
        %s706 = scalar_lea.vmem %s2, %s705
        %p707 = pneg %p116
        %p708 = pneg %p113
        %s709 = sand.u32 %s129, 1
        %s710 = sand.u32 %s129, 1
        %s711 = smul.addr %s710, 16
        %s712 = scalar_lea.vmem [#allocation4], %s711
        %p713 = pneg %p142
        %p714 = pneg %p139
        %s715 = smul.u32 16, %s25
        %p716 = scmp.lt.s32.totalorder %s715, 31
        %s717 = scalar_select %p716, %s715, 31
        %s718 = smul.addr %s717, 8
        %s719 = scalar_lea.vmem %s4, %s718
        %p720 = pneg %p168
        %p721 = pneg %p165
        %p722 = pneg %p196
        %p723 = pneg %p193
        %s724 = sand.u32 %s183, 1
        %s725 = sand.u32 %s183, 1
        %s726 = smul.addr %s725, 128
        %s727 = scalar_lea.vmem [#allocation5], %s726
        %p728 = pneg %p224
        %p729 = pneg %p221
        %s730 = sand.u32 %s211, 1
        %s731 = sand.u32 %s211, 1
        %s732 = smul.addr %s731, 128
        %s733 = scalar_lea.vmem [#allocation6], %s732
        %p734 = pneg %p252
        %p735 = pneg %p249
        %p736 = scmp.lt.s32.totalorder %s25, 1
        %s737 = scalar_select %p736, %s25, 1
        %p738 = scmp.lt.s32.totalorder %s26, 1
        %s739 = scalar_select %p738, %s26, 1
        %s740 = smul.addr %s737, 2
        %s741 = sadd.s32 %s739, %s740
        %s742 = smul.addr %s741, 8
        %s743 = scalar_lea.vmem %s7, %s742
        %p744 = pneg %p280
        %p745 = pneg %p277
        %p746 = scmp.lt.s32.totalorder %s25, 1
        %s747 = scalar_select %p746, %s25, 1
        %p748 = scmp.lt.s32.totalorder %s26, 1
        %s749 = scalar_select %p748, %s26, 1
        %s750 = smul.addr %s747, 2
        %s751 = sadd.s32 %s749, %s750
        %s752 = smul.addr %s751, 8
        %s753 = scalar_lea.vmem %s8, %s752
        %s754 = smul.u32 16, %s25
        %s755 = smul.u32 2, %s27
        %s756 = smul.u32 32, %s27
        %s757 = smul.u32 32, %s27
        %p758 = scmp.lt.s32.totalorder %s757, 63
        %s759 = scalar_select %p758, %s757, 63
        %s760 = smul.addr %s759, 4
        %s761 = scalar_lea.vmem %s2, %s760
        %s762 = smul.u32 32, %s27
        %s763 = smul.u32 16, %s25
        %p764 = scmp.lt.s32.totalorder %s763, 31
        %s765 = scalar_select %p764, %s763, 31
        %s766 = smul.addr %s765, 8
        %s767 = scalar_lea.vmem %s4, %s766
        %s768 = smul.u32 16, %s25
        %s769 = smul.u32 16, %s25
        %s770 = smul.u32 16, %s25
        %p771 = scmp.lt.s32.totalorder %s25, 1
        %s772 = scalar_select %p771, %s25, 1
        %p773 = scmp.lt.s32.totalorder %s26, 1
        %s774 = scalar_select %p773, %s26, 1
        %s775 = smul.addr %s772, 2
        %s776 = sadd.s32 %s774, %s775
        %s777 = smul.addr %s776, 8
        %s778 = scalar_lea.vmem %s7, %s777
        %p779 = scmp.lt.s32.totalorder %s25, 1
        %s780 = scalar_select %p779, %s25, 1
        %p781 = scmp.lt.s32.totalorder %s26, 1
        %s782 = scalar_select %p781, %s26, 1
        %s783 = smul.addr %s780, 2
        %s784 = sadd.s32 %s782, %s783
        %s785 = smul.addr %s784, 8
        %s786 = scalar_lea.vmem %s8, %s785
        %p788 = scmp.eq.s32.totalorder %s27, 0
        // Predicated region
        $region161: #{fused_linear_forward.2} parent=147 // pred_check
          %p789 = pneg %p788
        $region162: #{fused_linear_forward.2} parent=147 // pred_check_branch
          %791 = sbr.rel (%p789) target = $region164
        $region163: #{fused_linear_forward.2} parent=147 // pred_region
          %792 = vst [vmem:[%s727] sm:$0xff] 0.0
          %793 = vst [vmem:[%s727 + $0x8] sm:$0xff] 0.0
          %794 = vst [vmem:[%s727 + $0x10] sm:$0xff] 0.0
          %795 = vst [vmem:[%s727 + $0x18] sm:$0xff] 0.0
          %796 = vst [vmem:[%s727 + $0x20] sm:$0xff] 0.0
          %797 = vst [vmem:[%s727 + $0x28] sm:$0xff] 0.0
          %798 = vst [vmem:[%s727 + $0x30] sm:$0xff] 0.0
          %799 = vst [vmem:[%s727 + $0x38] sm:$0xff] 0.0
          %800 = vst [vmem:[%s727 + $0x40] sm:$0xff] 0.0
          %801 = vst [vmem:[%s727 + $0x48] sm:$0xff] 0.0
          %802 = vst [vmem:[%s727 + $0x50] sm:$0xff] 0.0
          %803 = vst [vmem:[%s727 + $0x58] sm:$0xff] 0.0
          %804 = vst [vmem:[%s727 + $0x60] sm:$0xff] 0.0
          %805 = vst [vmem:[%s727 + $0x68] sm:$0xff] 0.0
          %806 = vst [vmem:[%s727 + $0x70] sm:$0xff] 0.0
          %807 = vst [vmem:[%s727 + $0x78] sm:$0xff] 0.0
          %808 = vst [vmem:[%s733] sm:$0xff] 0.0
          %809 = vst [vmem:[%s733 + $0x8] sm:$0xff] 0.0
          %810 = vst [vmem:[%s733 + $0x10] sm:$0xff] 0.0
          %811 = vst [vmem:[%s733 + $0x18] sm:$0xff] 0.0
          %812 = vst [vmem:[%s733 + $0x20] sm:$0xff] 0.0
          %813 = vst [vmem:[%s733 + $0x28] sm:$0xff] 0.0
          %814 = vst [vmem:[%s733 + $0x30] sm:$0xff] 0.0
          %815 = vst [vmem:[%s733 + $0x38] sm:$0xff] 0.0
          %816 = vst [vmem:[%s733 + $0x40] sm:$0xff] 0.0
          %817 = vst [vmem:[%s733 + $0x48] sm:$0xff] 0.0
          %818 = vst [vmem:[%s733 + $0x50] sm:$0xff] 0.0
          %819 = vst [vmem:[%s733 + $0x58] sm:$0xff] 0.0
          %820 = vst [vmem:[%s733 + $0x60] sm:$0xff] 0.0
          %821 = vst [vmem:[%s733 + $0x68] sm:$0xff] 0.0
          %822 = vst [vmem:[%s733 + $0x70] sm:$0xff] 0.0
          %823 = vst [vmem:[%s733 + $0x78] sm:$0xff] 0.0
        $region164: #{fused_linear_forward.2} parent=147 // pred_fallthru
          _
        %v824 = vld [vmem:[%s672] sm:$0xff]
        %v825 = vld [vmem:[%s672 + $0x8] sm:$0xff]
        %v826 = vld [vmem:[%s672 + $0x10] sm:$0xff]
        %v827 = vld [vmem:[%s672 + $0x18] sm:$0xff]
        %v828 = vld [vmem:[%s672 + $0x20] sm:$0xff]
        %v829 = vld [vmem:[%s672 + $0x28] sm:$0xff]
        %v830 = vld [vmem:[%s672 + $0x30] sm:$0xff]
        %v831 = vld [vmem:[%s672 + $0x38] sm:$0xff]
        %v832 = vld [vmem:[%s672 + $0x40] sm:$0xff]
        %v833 = vld [vmem:[%s672 + $0x48] sm:$0xff]
        %v834 = vld [vmem:[%s672 + $0x50] sm:$0xff]
        %v835 = vld [vmem:[%s672 + $0x58] sm:$0xff]
        %v836 = vld [vmem:[%s672 + $0x60] sm:$0xff]
        %v837 = vld [vmem:[%s672 + $0x68] sm:$0xff]
        %v838 = vld [vmem:[%s672 + $0x70] sm:$0xff]
        %v839 = vld [vmem:[%s672 + $0x78] sm:$0xff]
        %v840 = vld [vmem:[%s727] sm:$0xff]
        %v841 = vld [vmem:[%s727 + $0x8] sm:$0xff]
        %v842 = vld [vmem:[%s727 + $0x10] sm:$0xff]
        %v843 = vld [vmem:[%s727 + $0x18] sm:$0xff]
        %v844 = vld [vmem:[%s727 + $0x20] sm:$0xff]
        %v845 = vld [vmem:[%s727 + $0x28] sm:$0xff]
        %v846 = vld [vmem:[%s727 + $0x30] sm:$0xff]
        %v847 = vld [vmem:[%s727 + $0x38] sm:$0xff]
        %v848 = vld [vmem:[%s727 + $0x40] sm:$0xff]
        %v849 = vld [vmem:[%s727 + $0x48] sm:$0xff]
        %v850 = vld [vmem:[%s727 + $0x50] sm:$0xff]
        %v851 = vld [vmem:[%s727 + $0x58] sm:$0xff]
        %v852 = vld [vmem:[%s727 + $0x60] sm:$0xff]
        %v853 = vld [vmem:[%s727 + $0x68] sm:$0xff]
        %v854 = vld [vmem:[%s727 + $0x70] sm:$0xff]
        %v855 = vld [vmem:[%s727 + $0x78] sm:$0xff]
        %v856 = vld [vmem:[%s679] sm:$0xf]
        %v857 = vld [vmem:[%s679 + $0x4] sm:$0xf]
        %v858 = vld [vmem:[%s679 + $0x8] sm:$0xf]
        %v859 = vld [vmem:[%s679 + $0xc] sm:$0xf]
        %v860 = vld [vmem:[%s679 + $0x10] sm:$0xf]
        %v861 = vld [vmem:[%s679 + $0x14] sm:$0xf]
        %v862 = vld [vmem:[%s679 + $0x18] sm:$0xf]
        %v863 = vld [vmem:[%s679 + $0x1c] sm:$0xf]
        %v864 = vld [vmem:[%s679 + $0x20] sm:$0xf]
        %v865 = vld [vmem:[%s679 + $0x24] sm:$0xf]
        %v866 = vld [vmem:[%s679 + $0x28] sm:$0xf]
        %v867 = vld [vmem:[%s679 + $0x2c] sm:$0xf]
        %v868 = vld [vmem:[%s679 + $0x30] sm:$0xf]
        %v869 = vld [vmem:[%s679 + $0x34] sm:$0xf]
        %v870 = vld [vmem:[%s679 + $0x38] sm:$0xf]
        %v871 = vld [vmem:[%s679 + $0x3c] sm:$0xf]
        %v872 = vld [vmem:[%s679 + $0x40] sm:$0xf]
        %v873 = vld [vmem:[%s679 + $0x44] sm:$0xf]
        %v874 = vld [vmem:[%s679 + $0x48] sm:$0xf]
        %v875 = vld [vmem:[%s679 + $0x4c] sm:$0xf]
        %v876 = vld [vmem:[%s679 + $0x50] sm:$0xf]
        %v877 = vld [vmem:[%s679 + $0x54] sm:$0xf]
        %v878 = vld [vmem:[%s679 + $0x58] sm:$0xf]
        %v879 = vld [vmem:[%s679 + $0x5c] sm:$0xf]
        %v880 = vld [vmem:[%s679 + $0x60] sm:$0xf]
        %v881 = vld [vmem:[%s679 + $0x64] sm:$0xf]
        %v882 = vld [vmem:[%s679 + $0x68] sm:$0xf]
        %v883 = vld [vmem:[%s679 + $0x6c] sm:$0xf]
        %v884 = vld [vmem:[%s679 + $0x70] sm:$0xf]
        %v885 = vld [vmem:[%s679 + $0x74] sm:$0xf]
        %v886 = vld [vmem:[%s679 + $0x78] sm:$0xf]
        %v887 = vld [vmem:[%s679 + $0x7c] sm:$0xf]
        %v904 = vunpack.c.l.b16 %v824
        %v905 = vunpack.c.h.b16 %v824
        %v906 = vunpack.c.l.b16 %v825
        %v907 = vunpack.c.h.b16 %v825
        %v908 = vunpack.c.l.b16 %v826
        %v909 = vunpack.c.h.b16 %v826
        %v910 = vunpack.c.l.b16 %v827
        %v911 = vunpack.c.h.b16 %v827
        %v912 = vunpack.c.l.b16 %v828
        %v913 = vunpack.c.h.b16 %v828
        %v914 = vunpack.c.l.b16 %v829
        %v915 = vunpack.c.h.b16 %v829
        %v916 = vunpack.c.l.b16 %v830
        %v917 = vunpack.c.h.b16 %v830
        %v918 = vunpack.c.l.b16 %v831
        %v919 = vunpack.c.h.b16 %v831
        %v920 = vunpack.c.l.b16 %v832
        %v921 = vunpack.c.h.b16 %v832
        %v922 = vunpack.c.l.b16 %v833
        %v923 = vunpack.c.h.b16 %v833
        %v924 = vunpack.c.l.b16 %v834
        %v925 = vunpack.c.h.b16 %v834
        %v926 = vunpack.c.l.b16 %v835
        %v927 = vunpack.c.h.b16 %v835
        %v928 = vunpack.c.l.b16 %v836
        %v929 = vunpack.c.h.b16 %v836
        %v930 = vunpack.c.l.b16 %v837
        %v931 = vunpack.c.h.b16 %v837
        %v932 = vunpack.c.l.b16 %v838
        %v933 = vunpack.c.h.b16 %v838
        %v934 = vunpack.c.l.b16 %v839
        %v935 = vunpack.c.h.b16 %v839
        %v936 = vpack.c.b16 %v906, %v904
        %v937 = vpack.c.b16 %v907, %v905
        %v938 = vpack.c.b16 %v910, %v908
        %v939 = vpack.c.b16 %v911, %v909
        %v940 = vpack.c.b16 %v914, %v912
        %v941 = vpack.c.b16 %v915, %v913
        %v942 = vpack.c.b16 %v918, %v916
        %v943 = vpack.c.b16 %v919, %v917
        %v944 = vpack.c.b16 %v922, %v920
        %v945 = vpack.c.b16 %v923, %v921
        %v946 = vpack.c.b16 %v926, %v924
        %v947 = vpack.c.b16 %v927, %v925
        %v948 = vpack.c.b16 %v930, %v928
        %v949 = vpack.c.b16 %v931, %v929
        %v950 = vpack.c.b16 %v934, %v932
        %v951 = vpack.c.b16 %v935, %v933
        %v1000 = vunpack.c.l.b16 %v856
        %v1001 = vunpack.c.l.b16 %v857
        %v1002 = vunpack.c.l.b16 %v858
        %v1003 = vunpack.c.l.b16 %v859
        %v1004 = vunpack.c.l.b16 %v860
        %v1005 = vunpack.c.l.b16 %v861
        %v1006 = vunpack.c.l.b16 %v862
        %v1007 = vunpack.c.l.b16 %v863
        %v1008 = vunpack.c.l.b16 %v864
        %v1009 = vunpack.c.l.b16 %v865
        %v1010 = vunpack.c.l.b16 %v866
        %v1011 = vunpack.c.l.b16 %v867
        %v1012 = vunpack.c.l.b16 %v868
        %v1013 = vunpack.c.l.b16 %v869
        %v1014 = vunpack.c.l.b16 %v870
        %v1015 = vunpack.c.l.b16 %v871
        %v1016 = vunpack.c.l.b16 %v872
        %v1017 = vunpack.c.l.b16 %v873
        %v1018 = vunpack.c.l.b16 %v874
        %v1019 = vunpack.c.l.b16 %v875
        %v1020 = vunpack.c.l.b16 %v876
        %v1021 = vunpack.c.l.b16 %v877
        %v1022 = vunpack.c.l.b16 %v878
        %v1023 = vunpack.c.l.b16 %v879
        %v1024 = vunpack.c.l.b16 %v880
        %v1025 = vunpack.c.l.b16 %v881
        %v1026 = vunpack.c.l.b16 %v882
        %v1027 = vunpack.c.l.b16 %v883
        %v1028 = vunpack.c.l.b16 %v884
        %v1029 = vunpack.c.l.b16 %v885
        %v1030 = vunpack.c.l.b16 %v886
        %v1031 = vunpack.c.l.b16 %v887
        %v1032 = vpack.c.b16 %v1001, %v1000
        %v1033 = vpack.c.b16 %v1003, %v1002
        %v1034 = vpack.c.b16 %v1005, %v1004
        %v1035 = vpack.c.b16 %v1007, %v1006
        %v1036 = vpack.c.b16 %v1009, %v1008
        %v1037 = vpack.c.b16 %v1011, %v1010
        %v1038 = vpack.c.b16 %v1013, %v1012
        %v1039 = vpack.c.b16 %v1015, %v1014
        %v1040 = vpack.c.b16 %v1017, %v1016
        %v1041 = vpack.c.b16 %v1019, %v1018
        %v1042 = vpack.c.b16 %v1021, %v1020
        %v1043 = vpack.c.b16 %v1023, %v1022
        %v1044 = vpack.c.b16 %v1025, %v1024
        %v1045 = vpack.c.b16 %v1027, %v1026
        %v1046 = vpack.c.b16 %v1029, %v1028
        %v1047 = vpack.c.b16 %v1031, %v1030
        %1064 = vmatpush.bf16.msra.mxu0 %v1039
        %1065 = vmatpush.bf16.msra.mxu0 %v1038
        %1066 = vmatpush.bf16.msra.mxu0 %v1037
        %1067 = vmatpush.bf16.msra.mxu0 %v1036
        %1068 = vmatpush.bf16.msra.mxu0 %v1035
        %1069 = vmatpush.bf16.msra.mxu0 %v1034
        %1070 = vmatpush.bf16.msra.mxu0 %v1033
        %1071 = vmatpush.bf16.msra.mxu0 %v1032
        %1072 = vmatmul.bf16.gmra.mxu0 %v936
        %v1073 = vpop.f32.mrf.mxu0
        %v1074 = vadd.f32 0.0, %v1073
        %v1075 = vpop.f32.mrf.mxu0
        %v1076 = vadd.f32 0.0, %v1075
        %1077 = vmatmul.bf16.gmra.mxu0 %v938
        %v1078 = vpop.f32.mrf.mxu0
        %v1079 = vadd.f32 0.0, %v1078
        %v1080 = vpop.f32.mrf.mxu0
        %v1081 = vadd.f32 0.0, %v1080
        %1082 = vmatmul.bf16.gmra.mxu0 %v940
        %v1083 = vpop.f32.mrf.mxu0
        %v1084 = vadd.f32 0.0, %v1083
        %v1085 = vpop.f32.mrf.mxu0
        %v1086 = vadd.f32 0.0, %v1085
        %1087 = vmatmul.bf16.gmra.mxu0 %v942
        %v1088 = vpop.f32.mrf.mxu0
        %v1089 = vadd.f32 0.0, %v1088
        %v1090 = vpop.f32.mrf.mxu0
        %v1091 = vadd.f32 0.0, %v1090
        %1092 = vmatmul.bf16.gmra.mxu0 %v944
        %v1093 = vpop.f32.mrf.mxu0
        %v1094 = vadd.f32 0.0, %v1093
        %v1095 = vpop.f32.mrf.mxu0
        %v1096 = vadd.f32 0.0, %v1095
        %1097 = vmatmul.bf16.gmra.mxu0 %v946
        %v1098 = vpop.f32.mrf.mxu0
        %v1099 = vadd.f32 0.0, %v1098
        %v1100 = vpop.f32.mrf.mxu0
        %v1101 = vadd.f32 0.0, %v1100
        %1102 = vmatmul.bf16.gmra.mxu0 %v948
        %v1103 = vpop.f32.mrf.mxu0
        %v1104 = vadd.f32 0.0, %v1103
        %v1105 = vpop.f32.mrf.mxu0
        %v1106 = vadd.f32 0.0, %v1105
        %1107 = vmatmul.bf16.gmra.mxu0 %v950
        %v1108 = vpop.f32.mrf.mxu0
        %v1109 = vadd.f32 0.0, %v1108
        %v1110 = vpop.f32.mrf.mxu0
        %v1111 = vadd.f32 0.0, %v1110
        %1112 = vdwg.mxu0
        %1113 = vmatpush.bf16.msra.mxu0 %v1047
        %1114 = vmatpush.bf16.msra.mxu0 %v1046
        %1115 = vmatpush.bf16.msra.mxu0 %v1045
        %1116 = vmatpush.bf16.msra.mxu0 %v1044
        %1117 = vmatpush.bf16.msra.mxu0 %v1043
        %1118 = vmatpush.bf16.msra.mxu0 %v1042
        %1119 = vmatpush.bf16.msra.mxu0 %v1041
        %1120 = vmatpush.bf16.msra.mxu0 %v1040
        %1121 = vmatmul.bf16.gmra.mxu0 %v937
        %v1122 = vpop.f32.mrf.mxu0
        %v1123 = vadd.f32 %v1074, %v1122
        %v1124 = vpop.f32.mrf.mxu0
        %v1125 = vadd.f32 %v1076, %v1124
        %1126 = vmatmul.bf16.gmra.mxu0 %v939
        %v1127 = vpop.f32.mrf.mxu0
        %v1128 = vadd.f32 %v1079, %v1127
        %v1129 = vpop.f32.mrf.mxu0
        %v1130 = vadd.f32 %v1081, %v1129
        %1131 = vmatmul.bf16.gmra.mxu0 %v941
        %v1132 = vpop.f32.mrf.mxu0
        %v1133 = vadd.f32 %v1084, %v1132
        %v1134 = vpop.f32.mrf.mxu0
        %v1135 = vadd.f32 %v1086, %v1134
        %1136 = vmatmul.bf16.gmra.mxu0 %v943
        %v1137 = vpop.f32.mrf.mxu0
        %v1138 = vadd.f32 %v1089, %v1137
        %v1139 = vpop.f32.mrf.mxu0
        %v1140 = vadd.f32 %v1091, %v1139
        %1141 = vmatmul.bf16.gmra.mxu0 %v945
        %v1142 = vpop.f32.mrf.mxu0
        %v1143 = vadd.f32 %v1094, %v1142
        %v1144 = vpop.f32.mrf.mxu0
        %v1145 = vadd.f32 %v1096, %v1144
        %1146 = vmatmul.bf16.gmra.mxu0 %v947
        %v1147 = vpop.f32.mrf.mxu0
        %v1148 = vadd.f32 %v1099, %v1147
        %v1149 = vpop.f32.mrf.mxu0
        %v1150 = vadd.f32 %v1101, %v1149
        %1151 = vmatmul.bf16.gmra.mxu0 %v949
        %v1152 = vpop.f32.mrf.mxu0
        %v1153 = vadd.f32 %v1104, %v1152
        %v1154 = vpop.f32.mrf.mxu0
        %v1155 = vadd.f32 %v1106, %v1154
        %1156 = vmatmul.bf16.gmra.mxu0 %v951
        %v1157 = vpop.f32.mrf.mxu0
        %v1158 = vadd.f32 %v1109, %v1157
        %v1159 = vpop.f32.mrf.mxu0
        %v1160 = vadd.f32 %v1111, %v1159
        %1161 = vdwg.mxu0
        %v1162 = vadd.f32 %v840, %v1123
        %v1163 = vadd.f32 %v841, %v1125
        %v1164 = vadd.f32 %v842, %v1128
        %v1165 = vadd.f32 %v843, %v1130
        %v1166 = vadd.f32 %v844, %v1133
        %v1167 = vadd.f32 %v845, %v1135
        %v1168 = vadd.f32 %v846, %v1138
        %v1169 = vadd.f32 %v847, %v1140
        %v1170 = vadd.f32 %v848, %v1143
        %v1171 = vadd.f32 %v849, %v1145
        %v1172 = vadd.f32 %v850, %v1148
        %v1173 = vadd.f32 %v851, %v1150
        %v1174 = vadd.f32 %v852, %v1153
        %v1175 = vadd.f32 %v853, %v1155
        %v1176 = vadd.f32 %v854, %v1158
        %v1177 = vadd.f32 %v855, %v1160
        %1178 = vst [vmem:[%s727] sm:$0xff] %v1162
        %1179 = vst [vmem:[%s727 + $0x8] sm:$0xff] %v1163
        %1180 = vst [vmem:[%s727 + $0x10] sm:$0xff] %v1164
        %1181 = vst [vmem:[%s727 + $0x18] sm:$0xff] %v1165
        %1182 = vst [vmem:[%s727 + $0x20] sm:$0xff] %v1166
        %1183 = vst [vmem:[%s727 + $0x28] sm:$0xff] %v1167
        %1184 = vst [vmem:[%s727 + $0x30] sm:$0xff] %v1168
        %1185 = vst [vmem:[%s727 + $0x38] sm:$0xff] %v1169
        %1186 = vst [vmem:[%s727 + $0x40] sm:$0xff] %v1170
        %1187 = vst [vmem:[%s727 + $0x48] sm:$0xff] %v1171
        %1188 = vst [vmem:[%s727 + $0x50] sm:$0xff] %v1172
        %1189 = vst [vmem:[%s727 + $0x58] sm:$0xff] %v1173
        %1190 = vst [vmem:[%s727 + $0x60] sm:$0xff] %v1174
        %1191 = vst [vmem:[%s727 + $0x68] sm:$0xff] %v1175
        %1192 = vst [vmem:[%s727 + $0x70] sm:$0xff] %v1176
        %1193 = vst [vmem:[%s727 + $0x78] sm:$0xff] %v1177
        %v1194 = vld [vmem:[%s761] sm:$0xf]
        %v1195 = vld [vmem:[%s761 + $0x4] sm:$0xf]
        %v1196 = vld [vmem:[%s761 + $0x8] sm:$0xf]
        %v1197 = vld [vmem:[%s761 + $0xc] sm:$0xf]
        %v1198 = vld [vmem:[%s761 + $0x10] sm:$0xf]
        %v1199 = vld [vmem:[%s761 + $0x14] sm:$0xf]
        %v1200 = vld [vmem:[%s761 + $0x18] sm:$0xf]
        %v1201 = vld [vmem:[%s761 + $0x1c] sm:$0xf]
        %v1202 = vld [vmem:[%s761 + $0x20] sm:$0xf]
        %v1203 = vld [vmem:[%s761 + $0x24] sm:$0xf]
        %v1204 = vld [vmem:[%s761 + $0x28] sm:$0xf]
        %v1205 = vld [vmem:[%s761 + $0x2c] sm:$0xf]
        %v1206 = vld [vmem:[%s761 + $0x30] sm:$0xf]
        %v1207 = vld [vmem:[%s761 + $0x34] sm:$0xf]
        %v1208 = vld [vmem:[%s761 + $0x38] sm:$0xf]
        %v1209 = vld [vmem:[%s761 + $0x3c] sm:$0xf]
        %v1210 = vld [vmem:[%s761 + $0x40] sm:$0xf]
        %v1211 = vld [vmem:[%s761 + $0x44] sm:$0xf]
        %v1212 = vld [vmem:[%s761 + $0x48] sm:$0xf]
        %v1213 = vld [vmem:[%s761 + $0x4c] sm:$0xf]
        %v1214 = vld [vmem:[%s761 + $0x50] sm:$0xf]
        %v1215 = vld [vmem:[%s761 + $0x54] sm:$0xf]
        %v1216 = vld [vmem:[%s761 + $0x58] sm:$0xf]
        %v1217 = vld [vmem:[%s761 + $0x5c] sm:$0xf]
        %v1218 = vld [vmem:[%s761 + $0x60] sm:$0xf]
        %v1219 = vld [vmem:[%s761 + $0x64] sm:$0xf]
        %v1220 = vld [vmem:[%s761 + $0x68] sm:$0xf]
        %v1221 = vld [vmem:[%s761 + $0x6c] sm:$0xf]
        %v1222 = vld [vmem:[%s761 + $0x70] sm:$0xf]
        %v1223 = vld [vmem:[%s761 + $0x74] sm:$0xf]
        %v1224 = vld [vmem:[%s761 + $0x78] sm:$0xf]
        %v1225 = vld [vmem:[%s761 + $0x7c] sm:$0xf]
        %v1258 = vunpack.c.l.b16 %v1194
        %v1259 = vunpack.c.l.b16 %v1195
        %v1260 = vunpack.c.l.b16 %v1196
        %v1261 = vunpack.c.l.b16 %v1197
        %v1262 = vunpack.c.l.b16 %v1198
        %v1263 = vunpack.c.l.b16 %v1199
        %v1264 = vunpack.c.l.b16 %v1200
        %v1265 = vunpack.c.l.b16 %v1201
        %v1266 = vunpack.c.l.b16 %v1202
        %v1267 = vunpack.c.l.b16 %v1203
        %v1268 = vunpack.c.l.b16 %v1204
        %v1269 = vunpack.c.l.b16 %v1205
        %v1270 = vunpack.c.l.b16 %v1206
        %v1271 = vunpack.c.l.b16 %v1207
        %v1272 = vunpack.c.l.b16 %v1208
        %v1273 = vunpack.c.l.b16 %v1209
        %v1274 = vunpack.c.l.b16 %v1210
        %v1275 = vunpack.c.l.b16 %v1211
        %v1276 = vunpack.c.l.b16 %v1212
        %v1277 = vunpack.c.l.b16 %v1213
        %v1278 = vunpack.c.l.b16 %v1214
        %v1279 = vunpack.c.l.b16 %v1215
        %v1280 = vunpack.c.l.b16 %v1216
        %v1281 = vunpack.c.l.b16 %v1217
        %v1282 = vunpack.c.l.b16 %v1218
        %v1283 = vunpack.c.l.b16 %v1219
        %v1284 = vunpack.c.l.b16 %v1220
        %v1285 = vunpack.c.l.b16 %v1221
        %v1286 = vunpack.c.l.b16 %v1222
        %v1287 = vunpack.c.l.b16 %v1223
        %v1288 = vunpack.c.l.b16 %v1224
        %v1289 = vunpack.c.l.b16 %v1225
        %v1290 = vpack.c.b16 %v1259, %v1258
        %v1291 = vpack.c.b16 %v1261, %v1260
        %v1292 = vpack.c.b16 %v1263, %v1262
        %v1293 = vpack.c.b16 %v1265, %v1264
        %v1294 = vpack.c.b16 %v1267, %v1266
        %v1295 = vpack.c.b16 %v1269, %v1268
        %v1296 = vpack.c.b16 %v1271, %v1270
        %v1297 = vpack.c.b16 %v1273, %v1272
        %v1298 = vpack.c.b16 %v1275, %v1274
        %v1299 = vpack.c.b16 %v1277, %v1276
        %v1300 = vpack.c.b16 %v1279, %v1278
        %v1301 = vpack.c.b16 %v1281, %v1280
        %v1302 = vpack.c.b16 %v1283, %v1282
        %v1303 = vpack.c.b16 %v1285, %v1284
        %v1304 = vpack.c.b16 %v1287, %v1286
        %v1305 = vpack.c.b16 %v1289, %v1288
        %1322 = vmatpush.bf16.msra.mxu0 %v1297
        %1323 = vmatpush.bf16.msra.mxu0 %v1296
        %1324 = vmatpush.bf16.msra.mxu0 %v1295
        %1325 = vmatpush.bf16.msra.mxu0 %v1294
        %1326 = vmatpush.bf16.msra.mxu0 %v1293
        %1327 = vmatpush.bf16.msra.mxu0 %v1292
        %1328 = vmatpush.bf16.msra.mxu0 %v1291
        %1329 = vmatpush.bf16.msra.mxu0 %v1290
        %1330 = vmatmul.bf16.gmra.mxu0 %v936
        %v1331 = vpop.f32.mrf.mxu0
        %v1332 = vadd.f32 0.0, %v1331
        %v1333 = vpop.f32.mrf.mxu0
        %v1334 = vadd.f32 0.0, %v1333
        %1335 = vmatmul.bf16.gmra.mxu0 %v938
        %v1336 = vpop.f32.mrf.mxu0
        %v1337 = vadd.f32 0.0, %v1336
        %v1338 = vpop.f32.mrf.mxu0
        %v1339 = vadd.f32 0.0, %v1338
        %1340 = vmatmul.bf16.gmra.mxu0 %v940
        %v1341 = vpop.f32.mrf.mxu0
        %v1342 = vadd.f32 0.0, %v1341
        %v1343 = vpop.f32.mrf.mxu0
        %v1344 = vadd.f32 0.0, %v1343
        %1345 = vmatmul.bf16.gmra.mxu0 %v942
        %v1346 = vpop.f32.mrf.mxu0
        %v1347 = vadd.f32 0.0, %v1346
        %v1348 = vpop.f32.mrf.mxu0
        %v1349 = vadd.f32 0.0, %v1348
        %1350 = vmatmul.bf16.gmra.mxu0 %v944
        %v1351 = vpop.f32.mrf.mxu0
        %v1352 = vadd.f32 0.0, %v1351
        %v1353 = vpop.f32.mrf.mxu0
        %v1354 = vadd.f32 0.0, %v1353
        %1355 = vmatmul.bf16.gmra.mxu0 %v946
        %v1356 = vpop.f32.mrf.mxu0
        %v1357 = vadd.f32 0.0, %v1356
        %v1358 = vpop.f32.mrf.mxu0
        %v1359 = vadd.f32 0.0, %v1358
        %1360 = vmatmul.bf16.gmra.mxu0 %v948
        %v1361 = vpop.f32.mrf.mxu0
        %v1362 = vadd.f32 0.0, %v1361
        %v1363 = vpop.f32.mrf.mxu0
        %v1364 = vadd.f32 0.0, %v1363
        %1365 = vmatmul.bf16.gmra.mxu0 %v950
        %v1366 = vpop.f32.mrf.mxu0
        %v1367 = vadd.f32 0.0, %v1366
        %v1368 = vpop.f32.mrf.mxu0
        %v1369 = vadd.f32 0.0, %v1368
        %1370 = vdwg.mxu0
        %1371 = vmatpush.bf16.msra.mxu0 %v1305
        %1372 = vmatpush.bf16.msra.mxu0 %v1304
        %1373 = vmatpush.bf16.msra.mxu0 %v1303
        %1374 = vmatpush.bf16.msra.mxu0 %v1302
        %1375 = vmatpush.bf16.msra.mxu0 %v1301
        %1376 = vmatpush.bf16.msra.mxu0 %v1300
        %1377 = vmatpush.bf16.msra.mxu0 %v1299
        %1378 = vmatpush.bf16.msra.mxu0 %v1298
        %1379 = vmatmul.bf16.gmra.mxu0 %v937
        %v1380 = vpop.f32.mrf.mxu0
        %v1381 = vadd.f32 %v1332, %v1380
        %v1382 = vpop.f32.mrf.mxu0
        %v1383 = vadd.f32 %v1334, %v1382
        %1384 = vmatmul.bf16.gmra.mxu0 %v939
        %v1385 = vpop.f32.mrf.mxu0
        %v1386 = vadd.f32 %v1337, %v1385
        %v1387 = vpop.f32.mrf.mxu0
        %v1388 = vadd.f32 %v1339, %v1387
        %1389 = vmatmul.bf16.gmra.mxu0 %v941
        %v1390 = vpop.f32.mrf.mxu0
        %v1391 = vadd.f32 %v1342, %v1390
        %v1392 = vpop.f32.mrf.mxu0
        %v1393 = vadd.f32 %v1344, %v1392
        %1394 = vmatmul.bf16.gmra.mxu0 %v943
        %v1395 = vpop.f32.mrf.mxu0
        %v1396 = vadd.f32 %v1347, %v1395
        %v1397 = vpop.f32.mrf.mxu0
        %v1398 = vadd.f32 %v1349, %v1397
        %1399 = vmatmul.bf16.gmra.mxu0 %v945
        %v1400 = vpop.f32.mrf.mxu0
        %v1401 = vadd.f32 %v1352, %v1400
        %v1402 = vpop.f32.mrf.mxu0
        %v1403 = vadd.f32 %v1354, %v1402
        %1404 = vmatmul.bf16.gmra.mxu0 %v947
        %v1405 = vpop.f32.mrf.mxu0
        %v1406 = vadd.f32 %v1357, %v1405
        %v1407 = vpop.f32.mrf.mxu0
        %v1408 = vadd.f32 %v1359, %v1407
        %1409 = vmatmul.bf16.gmra.mxu0 %v949
        %v1410 = vpop.f32.mrf.mxu0
        %v1411 = vadd.f32 %v1362, %v1410
        %v1412 = vpop.f32.mrf.mxu0
        %v1413 = vadd.f32 %v1364, %v1412
        %1414 = vmatmul.bf16.gmra.mxu0 %v951
        %v1415 = vpop.f32.mrf.mxu0
        %v1416 = vadd.f32 %v1367, %v1415
        %v1417 = vpop.f32.mrf.mxu0
        %v1418 = vadd.f32 %v1369, %v1417
        %1419 = vdwg.mxu0
        %v1420 = vld [vmem:[%s767] sm:$0xff]
        %v1421 = vld [vmem:[%s767 + $0x8] sm:$0xff]
        %v1422 = vld [vmem:[%s767 + $0x10] sm:$0xff]
        %v1423 = vld [vmem:[%s767 + $0x18] sm:$0xff]
        %v1424 = vld [vmem:[%s767 + $0x20] sm:$0xff]
        %v1425 = vld [vmem:[%s767 + $0x28] sm:$0xff]
        %v1426 = vld [vmem:[%s767 + $0x30] sm:$0xff]
        %v1427 = vld [vmem:[%s767 + $0x38] sm:$0xff]
        %v1428 = vld [vmem:[%s767 + $0x40] sm:$0xff]
        %v1429 = vld [vmem:[%s767 + $0x48] sm:$0xff]
        %v1430 = vld [vmem:[%s767 + $0x50] sm:$0xff]
        %v1431 = vld [vmem:[%s767 + $0x58] sm:$0xff]
        %v1432 = vld [vmem:[%s767 + $0x60] sm:$0xff]
        %v1433 = vld [vmem:[%s767 + $0x68] sm:$0xff]
        %v1434 = vld [vmem:[%s767 + $0x70] sm:$0xff]
        %v1435 = vld [vmem:[%s767 + $0x78] sm:$0xff]
        %v1436 = vmul.f32 %v1381, %v1420
        %v1437 = vmul.f32 %v1383, %v1421
        %v1438 = vmul.f32 %v1386, %v1422
        %v1439 = vmul.f32 %v1388, %v1423
        %v1440 = vmul.f32 %v1391, %v1424
        %v1441 = vmul.f32 %v1393, %v1425
        %v1442 = vmul.f32 %v1396, %v1426
        %v1443 = vmul.f32 %v1398, %v1427
        %v1444 = vmul.f32 %v1401, %v1428
        %v1445 = vmul.f32 %v1403, %v1429
        %v1446 = vmul.f32 %v1406, %v1430
        %v1447 = vmul.f32 %v1408, %v1431
        %v1448 = vmul.f32 %v1411, %v1432
        %v1449 = vmul.f32 %v1413, %v1433
        %v1450 = vmul.f32 %v1416, %v1434
        %v1451 = vmul.f32 %v1418, %v1435
        %v1452 = vpack.c.bf16 %v1437, %v1436
        %v1453 = vpack.c.bf16 %v1439, %v1438
        %v1454 = vpack.c.bf16 %v1441, %v1440
        %v1455 = vpack.c.bf16 %v1443, %v1442
        %v1456 = vpack.c.bf16 %v1445, %v1444
        %v1457 = vpack.c.bf16 %v1447, %v1446
        %v1458 = vpack.c.bf16 %v1449, %v1448
        %v1459 = vpack.c.bf16 %v1451, %v1450
        %v1460 = vld [vmem:[%s733] sm:$0xff]
        %v1461 = vld [vmem:[%s733 + $0x8] sm:$0xff]
        %v1462 = vld [vmem:[%s733 + $0x10] sm:$0xff]
        %v1463 = vld [vmem:[%s733 + $0x18] sm:$0xff]
        %v1464 = vld [vmem:[%s733 + $0x20] sm:$0xff]
        %v1465 = vld [vmem:[%s733 + $0x28] sm:$0xff]
        %v1466 = vld [vmem:[%s733 + $0x30] sm:$0xff]
        %v1467 = vld [vmem:[%s733 + $0x38] sm:$0xff]
        %v1468 = vld [vmem:[%s733 + $0x40] sm:$0xff]
        %v1469 = vld [vmem:[%s733 + $0x48] sm:$0xff]
        %v1470 = vld [vmem:[%s733 + $0x50] sm:$0xff]
        %v1471 = vld [vmem:[%s733 + $0x58] sm:$0xff]
        %v1472 = vld [vmem:[%s733 + $0x60] sm:$0xff]
        %v1473 = vld [vmem:[%s733 + $0x68] sm:$0xff]
        %v1474 = vld [vmem:[%s733 + $0x70] sm:$0xff]
        %v1475 = vld [vmem:[%s733 + $0x78] sm:$0xff]
        %v1476 = vld [vmem:[%s686] sm:$0xf]
        %v1477 = vld [vmem:[%s686 + $0x4] sm:$0xf]
        %v1478 = vld [vmem:[%s686 + $0x8] sm:$0xf]
        %v1479 = vld [vmem:[%s686 + $0xc] sm:$0xf]
        %v1484 = vunpack.c.l.b16 %v1476
        %v1485 = vunpack.c.l.b16 %v1477
        %v1486 = vunpack.c.l.b16 %v1478
        %v1487 = vunpack.c.l.b16 %v1479
        %v1488 = vpack.c.b16 %v1485, %v1484
        %v1489 = vpack.c.b16 %v1487, %v1486
        %vm1492 = vcmask 261120
        %v1494 = vsel %vm1492, %v1452, 0
        %v1497 = vsel %vm1492, %v1453, 0
        %v1500 = vsel %vm1492, %v1454, 0
        %v1503 = vsel %vm1492, %v1455, 0
        %v1506 = vsel %vm1492, %v1456, 0
        %v1509 = vsel %vm1492, %v1457, 0
        %v1512 = vsel %vm1492, %v1458, 0
        %v1515 = vsel %vm1492, %v1459, 0
        %1517 = vmatpush.bf16.msra.mxu0 0
        %1518 = vmatpush.bf16.msra.mxu0 0
        %1519 = vmatpush.bf16.msra.mxu0 0
        %1520 = vmatpush.bf16.msra.mxu0 0
        %1521 = vmatpush.bf16.msra.mxu0 0
        %1522 = vmatpush.bf16.msra.mxu0 0
        %1523 = vmatpush.bf16.msra.mxu0 %v1489
        %1524 = vmatpush.bf16.msra.mxu0 %v1488
        %1525 = vmatmul.bf16.gmra.mxu0 %v1494
        %v1526 = vpop.f32.mrf.mxu0
        %v1527 = vadd.f32 0.0, %v1526
        %v1528 = vpop.f32.mrf.mxu0
        %v1529 = vadd.f32 0.0, %v1528
        %1530 = vmatmul.bf16.gmra.mxu0 %v1497
        %v1531 = vpop.f32.mrf.mxu0
        %v1532 = vadd.f32 0.0, %v1531
        %v1533 = vpop.f32.mrf.mxu0
        %v1534 = vadd.f32 0.0, %v1533
        %1535 = vmatmul.bf16.gmra.mxu0 %v1500
        %v1536 = vpop.f32.mrf.mxu0
        %v1537 = vadd.f32 0.0, %v1536
        %v1538 = vpop.f32.mrf.mxu0
        %v1539 = vadd.f32 0.0, %v1538
        %1540 = vmatmul.bf16.gmra.mxu0 %v1503
        %v1541 = vpop.f32.mrf.mxu0
        %v1542 = vadd.f32 0.0, %v1541
        %v1543 = vpop.f32.mrf.mxu0
        %v1544 = vadd.f32 0.0, %v1543
        %1545 = vmatmul.bf16.gmra.mxu0 %v1506
        %v1546 = vpop.f32.mrf.mxu0
        %v1547 = vadd.f32 0.0, %v1546
        %v1548 = vpop.f32.mrf.mxu0
        %v1549 = vadd.f32 0.0, %v1548
        %1550 = vmatmul.bf16.gmra.mxu0 %v1509
        %v1551 = vpop.f32.mrf.mxu0
        %v1552 = vadd.f32 0.0, %v1551
        %v1553 = vpop.f32.mrf.mxu0
        %v1554 = vadd.f32 0.0, %v1553
        %1555 = vmatmul.bf16.gmra.mxu0 %v1512
        %v1556 = vpop.f32.mrf.mxu0
        %v1557 = vadd.f32 0.0, %v1556
        %v1558 = vpop.f32.mrf.mxu0
        %v1559 = vadd.f32 0.0, %v1558
        %1560 = vmatmul.bf16.gmra.mxu0 %v1515
        %v1561 = vpop.f32.mrf.mxu0
        %v1562 = vadd.f32 0.0, %v1561
        %v1563 = vpop.f32.mrf.mxu0
        %v1564 = vadd.f32 0.0, %v1563
        %1565 = vdwg.mxu0
        %v1566 = vadd.f32 %v1460, %v1527
        %v1567 = vadd.f32 %v1461, %v1529
        %v1568 = vadd.f32 %v1462, %v1532
        %v1569 = vadd.f32 %v1463, %v1534
        %v1570 = vadd.f32 %v1464, %v1537
        %v1571 = vadd.f32 %v1465, %v1539
        %v1572 = vadd.f32 %v1466, %v1542
        %v1573 = vadd.f32 %v1467, %v1544
        %v1574 = vadd.f32 %v1468, %v1547
        %v1575 = vadd.f32 %v1469, %v1549
        %v1576 = vadd.f32 %v1470, %v1552
        %v1577 = vadd.f32 %v1471, %v1554
        %v1578 = vadd.f32 %v1472, %v1557
        %v1579 = vadd.f32 %v1473, %v1559
        %v1580 = vadd.f32 %v1474, %v1562
        %v1581 = vadd.f32 %v1475, %v1564
        %1582 = vst [vmem:[%s733] sm:$0xff] %v1566
        %1583 = vst [vmem:[%s733 + $0x8] sm:$0xff] %v1567
        %1584 = vst [vmem:[%s733 + $0x10] sm:$0xff] %v1568
        %1585 = vst [vmem:[%s733 + $0x18] sm:$0xff] %v1569
        %1586 = vst [vmem:[%s733 + $0x20] sm:$0xff] %v1570
        %1587 = vst [vmem:[%s733 + $0x28] sm:$0xff] %v1571
        %1588 = vst [vmem:[%s733 + $0x30] sm:$0xff] %v1572
        %1589 = vst [vmem:[%s733 + $0x38] sm:$0xff] %v1573
        %1590 = vst [vmem:[%s733 + $0x40] sm:$0xff] %v1574
        %1591 = vst [vmem:[%s733 + $0x48] sm:$0xff] %v1575
        %1592 = vst [vmem:[%s733 + $0x50] sm:$0xff] %v1576
        %1593 = vst [vmem:[%s733 + $0x58] sm:$0xff] %v1577
        %1594 = vst [vmem:[%s733 + $0x60] sm:$0xff] %v1578
        %1595 = vst [vmem:[%s733 + $0x68] sm:$0xff] %v1579
        %1596 = vst [vmem:[%s733 + $0x70] sm:$0xff] %v1580
        %1597 = vst [vmem:[%s733 + $0x78] sm:$0xff] %v1581
        %p1598 = scmp.eq.s32.totalorder %s27, 1
        // Predicated region
        $region165: #{fused_linear_forward.2} parent=147 // pred_check
          %p1599 = pneg %p1598
        $region166: #{fused_linear_forward.2} parent=147 // pred_check_branch
          %1601 = sbr.rel (%p1599) target = $region168
        $region167: #{fused_linear_forward.2} parent=147 // pred_region
          %v1602 = vld [vmem:[%s727] sm:$0xff]
          %v1603 = vld [vmem:[%s727 + $0x8] sm:$0xff]
          %v1604 = vld [vmem:[%s727 + $0x10] sm:$0xff]
          %v1605 = vld [vmem:[%s727 + $0x18] sm:$0xff]
          %v1606 = vld [vmem:[%s727 + $0x20] sm:$0xff]
          %v1607 = vld [vmem:[%s727 + $0x28] sm:$0xff]
          %v1608 = vld [vmem:[%s727 + $0x30] sm:$0xff]
          %v1609 = vld [vmem:[%s727 + $0x38] sm:$0xff]
          %v1610 = vld [vmem:[%s727 + $0x40] sm:$0xff]
          %v1611 = vld [vmem:[%s727 + $0x48] sm:$0xff]
          %v1612 = vld [vmem:[%s727 + $0x50] sm:$0xff]
          %v1613 = vld [vmem:[%s727 + $0x58] sm:$0xff]
          %v1614 = vld [vmem:[%s727 + $0x60] sm:$0xff]
          %v1615 = vld [vmem:[%s727 + $0x68] sm:$0xff]
          %v1616 = vld [vmem:[%s727 + $0x70] sm:$0xff]
          %v1617 = vld [vmem:[%s727 + $0x78] sm:$0xff]
          %v1618 = vand.u32 2147483647, %v1602
          %v1619 = vand.u32 2147483647, %v1603
          %v1620 = vand.u32 2147483647, %v1604
          %v1621 = vand.u32 2147483647, %v1605
          %v1622 = vand.u32 2147483647, %v1606
          %v1623 = vand.u32 2147483647, %v1607
          %v1624 = vand.u32 2147483647, %v1608
          %v1625 = vand.u32 2147483647, %v1609
          %v1626 = vand.u32 2147483647, %v1610
          %v1627 = vand.u32 2147483647, %v1611
          %v1628 = vand.u32 2147483647, %v1612
          %v1629 = vand.u32 2147483647, %v1613
          %v1630 = vand.u32 2147483647, %v1614
          %v1631 = vand.u32 2147483647, %v1615
          %v1632 = vand.u32 2147483647, %v1616
          %v1633 = vand.u32 2147483647, %v1617
          %v1634 = vadd.f32 %v1618, %v1619
          %v1635 = vadd.f32 %v1634, %v1620
          %v1636 = vadd.f32 %v1635, %v1621
          %v1637 = vadd.f32 %v1636, %v1622
          %v1638 = vadd.f32 %v1637, %v1623
          %v1639 = vadd.f32 %v1638, %v1624
          %v1640 = vadd.f32 %v1639, %v1625
          %v1641 = vadd.f32 %v1640, %v1626
          %v1642 = vadd.f32 %v1641, %v1627
          %v1643 = vadd.f32 %v1642, %v1628
          %v1644 = vadd.f32 %v1643, %v1629
          %v1645 = vadd.f32 %v1644, %v1630
          %v1646 = vadd.f32 %v1645, %v1631
          %v1647 = vadd.f32 %v1646, %v1632
          %v1648 = vadd.f32 %v1647, %v1633
          %v1649 = vrot.slane %v1648, 4
          %v1650 = vadd.f32 %v1648, %v1649
          %v1651 = vrot.slane %v1650, 2
          %v1652 = vadd.f32 %v1650, %v1651
          %v1653 = vrot.slane %v1652, 1
          %v1654 = vadd.f32 %v1652, %v1653
          %v1655 = vmul.f32 %v1654, 0.00048828125
          %v1656 = vld [vmem:[%s733] sm:$0xff]
          %v1657 = vld [vmem:[%s733 + $0x8] sm:$0xff]
          %v1658 = vld [vmem:[%s733 + $0x10] sm:$0xff]
          %v1659 = vld [vmem:[%s733 + $0x18] sm:$0xff]
          %v1660 = vld [vmem:[%s733 + $0x20] sm:$0xff]
          %v1661 = vld [vmem:[%s733 + $0x28] sm:$0xff]
          %v1662 = vld [vmem:[%s733 + $0x30] sm:$0xff]
          %v1663 = vld [vmem:[%s733 + $0x38] sm:$0xff]
          %v1664 = vld [vmem:[%s733 + $0x40] sm:$0xff]
          %v1665 = vld [vmem:[%s733 + $0x48] sm:$0xff]
          %v1666 = vld [vmem:[%s733 + $0x50] sm:$0xff]
          %v1667 = vld [vmem:[%s733 + $0x58] sm:$0xff]
          %v1668 = vld [vmem:[%s733 + $0x60] sm:$0xff]
          %v1669 = vld [vmem:[%s733 + $0x68] sm:$0xff]
          %v1670 = vld [vmem:[%s733 + $0x70] sm:$0xff]
          %v1671 = vld [vmem:[%s733 + $0x78] sm:$0xff]
          %v1672 = vand.u32 2147483647, %v1656
          %v1673 = vand.u32 2147483647, %v1657
          %v1674 = vand.u32 2147483647, %v1658
          %v1675 = vand.u32 2147483647, %v1659
          %v1676 = vand.u32 2147483647, %v1660
          %v1677 = vand.u32 2147483647, %v1661
          %v1678 = vand.u32 2147483647, %v1662
          %v1679 = vand.u32 2147483647, %v1663
          %v1680 = vand.u32 2147483647, %v1664
          %v1681 = vand.u32 2147483647, %v1665
          %v1682 = vand.u32 2147483647, %v1666
          %v1683 = vand.u32 2147483647, %v1667
          %v1684 = vand.u32 2147483647, %v1668
          %v1685 = vand.u32 2147483647, %v1669
          %v1686 = vand.u32 2147483647, %v1670
          %v1687 = vand.u32 2147483647, %v1671
          %v1688 = vadd.f32 %v1672, %v1673
          %v1689 = vadd.f32 %v1688, %v1674
          %v1690 = vadd.f32 %v1689, %v1675
          %v1691 = vadd.f32 %v1690, %v1676
          %v1692 = vadd.f32 %v1691, %v1677
          %v1693 = vadd.f32 %v1692, %v1678
          %v1694 = vadd.f32 %v1693, %v1679
          %v1695 = vadd.f32 %v1694, %v1680
          %v1696 = vadd.f32 %v1695, %v1681
          %v1697 = vadd.f32 %v1696, %v1682
          %v1698 = vadd.f32 %v1697, %v1683
          %v1699 = vadd.f32 %v1698, %v1684
          %v1700 = vadd.f32 %v1699, %v1685
          %v1701 = vadd.f32 %v1700, %v1686
          %v1702 = vadd.f32 %v1701, %v1687
          %v1703 = vrot.slane %v1702, 4
          %v1704 = vadd.f32 %v1702, %v1703
          %v1705 = vrot.slane %v1704, 2
          %v1706 = vadd.f32 %v1704, %v1705
          %v1707 = vrot.slane %v1706, 1
          %v1708 = vadd.f32 %v1706, %v1707
          %v1709 = vmul.f32 %v1708, 0.00048828125
          %1710 = vst [vmem:[%s778] sm:$0xff] %v1655
          %1711 = vst [vmem:[%s786] sm:$0xff] %v1709
        $region168: #{fused_linear_forward.2} parent=147 // pred_fallthru
          _
        %s1712 = sand.u32 %s183, 1
        %s1713 = sand.u32 %s183, 1
        %s1714 = smul.addr %s1713, 128
        %s1715 = scalar_lea.vmem [#allocation5], %s1714
        %s1716 = sand.u32 %s211, 1
        %s1717 = sand.u32 %s211, 1
        %s1718 = smul.addr %s1717, 128
        %s1719 = scalar_lea.vmem [#allocation6], %s1718
        %p1720 = scmp.lt.s32.totalorder %s25, 1
        %s1721 = scalar_select %p1720, %s25, 1
        %p1722 = scmp.lt.s32.totalorder %s26, 1
        %s1723 = scalar_select %p1722, %s26, 1
        %s1724 = smul.addr %s1721, 2
        %s1725 = sadd.s32 %s1723, %s1724
        %s1726 = smul.addr %s1725, 8
        %s1727 = scalar_lea.vmem %s7, %s1726
        %p1728 = scmp.lt.s32.totalorder %s25, 1
        %s1729 = scalar_select %p1728, %s25, 1
        %p1730 = scmp.lt.s32.totalorder %s26, 1
        %s1731 = scalar_select %p1730, %s26, 1
        %s1732 = smul.addr %s1729, 2
        %s1733 = sadd.s32 %s1731, %s1732
        %s1734 = smul.addr %s1733, 8
        %s1735 = scalar_lea.vmem %s8, %s1734
        // Predicated region
        $region169: #{fused_linear_forward.2} parent=147 // pred_check
          %p1736 = pneg %p193
        $region170: #{fused_linear_forward.2} parent=147 // pred_check_branch
          %1738 = sbr.rel (%p1736) target = $region172
        $region171: #{fused_linear_forward.2} parent=147 // pred_region
          %s1739 = smul.u32 16, %s25
          %s1740 = smul.addr %s1739, 2
          %s1741 = sadd.s32 %s26, %s1740
          %s1742 = smul.addr %s1741, 8
          %s1743 = scalar_lea.vmem %s5, %s1742
          // Predicated region
          $region173: #{fused_linear_forward.2} parent=171 // pred_check
            _
          $region174: #{fused_linear_forward.2} parent=171 // pred_check_branch
            %1745 = sbr.rel (0) target = $region176
          $region175: #{fused_linear_forward.2} parent=171 // pred_region
            // Predicated region
            $region177: #{fused_linear_forward.2} parent=175 // pred_check
              _
            $region178: #{fused_linear_forward.2} parent=175 // pred_check_branch
              %1747 = sbr.rel (0) target = $region180
            $region179: #{fused_linear_forward.2} parent=175 // pred_region
              // Predicated region
              $region192: #{fused_linear_forward.2} parent=179 // pred_check
                _
              $region193: #{fused_linear_forward.2} parent=179 // pred_check_branch
                %1793 = sbr.rel (0) target = $region195
              $region194: #{fused_linear_forward.2} parent=179 // pred_region
                loop: start=0, step=1, limit=1
                $region196: #{fused_linear_forward.2} parent=194 // loop_pre_header
                  _
                $region197: #{fused_linear_forward.2} parent=194 // loop_header
                  %s1795 = sphi 0, %s1799
                  %p1796 = scmp.ge.s32.totalorder %s1795, 1
                  %s1800 = sphi %s1715, %s1715
                  %s1801 = sphi %s1743, %s1743
                $region198: #{fused_linear_forward.2} parent=194 // loop_header_branch
                  %1798 = sbr.rel (%p1796) target = $region202
                $region199: #{fused_linear_forward.2} parent=194 // loop_body
                  %v1802 = vld [vmem:[%s1800] sm:$0xff]
                  %1803 = vst [vmem:[%s1801] sm:$0xff] %v1802
                  %v1804 = vld [vmem:[%s1800 + $0x8] sm:$0xff]
                  %1805 = vst [vmem:[%s1801 + $0x10] sm:$0xff] %v1804
                  %v1806 = vld [vmem:[%s1800 + $0x10] sm:$0xff]
                  %1807 = vst [vmem:[%s1801 + $0x20] sm:$0xff] %v1806
                  %v1808 = vld [vmem:[%s1800 + $0x18] sm:$0xff]
                  %1809 = vst [vmem:[%s1801 + $0x30] sm:$0xff] %v1808
                  %v1810 = vld [vmem:[%s1800 + $0x20] sm:$0xff]
                  %1811 = vst [vmem:[%s1801 + $0x40] sm:$0xff] %v1810
                  %v1812 = vld [vmem:[%s1800 + $0x28] sm:$0xff]
                  %1813 = vst [vmem:[%s1801 + $0x50] sm:$0xff] %v1812
                  %v1814 = vld [vmem:[%s1800 + $0x30] sm:$0xff]
                  %1815 = vst [vmem:[%s1801 + $0x60] sm:$0xff] %v1814
                  %v1816 = vld [vmem:[%s1800 + $0x38] sm:$0xff]
                  %1817 = vst [vmem:[%s1801 + $0x70] sm:$0xff] %v1816
                  %v1818 = vld [vmem:[%s1800 + $0x40] sm:$0xff]
                  %1819 = vst [vmem:[%s1801 + $0x80] sm:$0xff] %v1818
                  %v1820 = vld [vmem:[%s1800 + $0x48] sm:$0xff]
                  %1821 = vst [vmem:[%s1801 + $0x90] sm:$0xff] %v1820
                  %v1822 = vld [vmem:[%s1800 + $0x50] sm:$0xff]
                  %1823 = vst [vmem:[%s1801 + $0xa0] sm:$0xff] %v1822
                  %v1824 = vld [vmem:[%s1800 + $0x58] sm:$0xff]
                  %1825 = vst [vmem:[%s1801 + $0xb0] sm:$0xff] %v1824
                  %v1826 = vld [vmem:[%s1800 + $0x60] sm:$0xff]
                  %1827 = vst [vmem:[%s1801 + $0xc0] sm:$0xff] %v1826
                  %v1828 = vld [vmem:[%s1800 + $0x68] sm:$0xff]
                  %1829 = vst [vmem:[%s1801 + $0xd0] sm:$0xff] %v1828
                  %v1830 = vld [vmem:[%s1800 + $0x70] sm:$0xff]
                  %1831 = vst [vmem:[%s1801 + $0xe0] sm:$0xff] %v1830
                  %v1832 = vld [vmem:[%s1800 + $0x78] sm:$0xff]
                  %1833 = vst [vmem:[%s1801 + $0xf0] sm:$0xff] %v1832
                $region200: #{fused_linear_forward.2} parent=194 // loop_footer
                  %s1799 = sadd.s32 1, %s1795
                $region201: #{fused_linear_forward.2} parent=194 // loop_footer_branch
                  %1794 = sbr.rel target = $region197
                $region202: #{fused_linear_forward.2} parent=194 // loop_exit
                  _
              $region195: #{fused_linear_forward.2} parent=179 // pred_fallthru
                _
              // Predicated region
              $region203: #{fused_linear_forward.2} parent=179 // pred_check
                _
              $region204: #{fused_linear_forward.2} parent=179 // pred_check_branch
                %1835 = sbr.rel target = $region206
              $region205: #{fused_linear_forward.2} parent=179 // pred_region
                _
              $region206: #{fused_linear_forward.2} parent=179 // pred_fallthru
                _
            $region180: #{fused_linear_forward.2} parent=175 // pred_fallthru
              _
            // Predicated region
            $region181: #{fused_linear_forward.2} parent=175 // pred_check
              _
            $region182: #{fused_linear_forward.2} parent=175 // pred_check_branch
              %1749 = sbr.rel target = $region184
            $region183: #{fused_linear_forward.2} parent=175 // pred_region
              %s1751 = ssub.s32 256, 1
              loop: start=0, step=1, limit=1
              $region185: #{fused_linear_forward.2} parent=183 // loop_pre_header
                _
              $region186: #{fused_linear_forward.2} parent=183 // loop_header
                %s1753 = sphi 0, %s1757
                %p1754 = scmp.ge.s32.totalorder %s1753, 1
                %s1758 = sphi %s1715, %s1715
                %s1759 = sphi %s1743, %s1743
              $region187: #{fused_linear_forward.2} parent=183 // loop_header_branch
                %1756 = sbr.rel (%p1754) target = $region191
              $region188: #{fused_linear_forward.2} parent=183 // loop_body
                %v1760 = vld [vmem:[%s1758] sm:%s1751]
                %1761 = vst [vmem:[%s1759] sm:%s1751] %v1760
                %v1762 = vld [vmem:[%s1758 + $0x8] sm:%s1751]
                %1763 = vst [vmem:[%s1759 + $0x10] sm:%s1751] %v1762
                %v1764 = vld [vmem:[%s1758 + $0x10] sm:%s1751]
                %1765 = vst [vmem:[%s1759 + $0x20] sm:%s1751] %v1764
                %v1766 = vld [vmem:[%s1758 + $0x18] sm:%s1751]
                %1767 = vst [vmem:[%s1759 + $0x30] sm:%s1751] %v1766
                %v1768 = vld [vmem:[%s1758 + $0x20] sm:%s1751]
                %1769 = vst [vmem:[%s1759 + $0x40] sm:%s1751] %v1768
                %v1770 = vld [vmem:[%s1758 + $0x28] sm:%s1751]
                %1771 = vst [vmem:[%s1759 + $0x50] sm:%s1751] %v1770
                %v1772 = vld [vmem:[%s1758 + $0x30] sm:%s1751]
                %1773 = vst [vmem:[%s1759 + $0x60] sm:%s1751] %v1772
                %v1774 = vld [vmem:[%s1758 + $0x38] sm:%s1751]
                %1775 = vst [vmem:[%s1759 + $0x70] sm:%s1751] %v1774
                %v1776 = vld [vmem:[%s1758 + $0x40] sm:%s1751]
                %1777 = vst [vmem:[%s1759 + $0x80] sm:%s1751] %v1776
                %v1778 = vld [vmem:[%s1758 + $0x48] sm:%s1751]
                %1779 = vst [vmem:[%s1759 + $0x90] sm:%s1751] %v1778
                %v1780 = vld [vmem:[%s1758 + $0x50] sm:%s1751]
                %1781 = vst [vmem:[%s1759 + $0xa0] sm:%s1751] %v1780
                %v1782 = vld [vmem:[%s1758 + $0x58] sm:%s1751]
                %1783 = vst [vmem:[%s1759 + $0xb0] sm:%s1751] %v1782
                %v1784 = vld [vmem:[%s1758 + $0x60] sm:%s1751]
                %1785 = vst [vmem:[%s1759 + $0xc0] sm:%s1751] %v1784
                %v1786 = vld [vmem:[%s1758 + $0x68] sm:%s1751]
                %1787 = vst [vmem:[%s1759 + $0xd0] sm:%s1751] %v1786
                %v1788 = vld [vmem:[%s1758 + $0x70] sm:%s1751]
                %1789 = vst [vmem:[%s1759 + $0xe0] sm:%s1751] %v1788
                %v1790 = vld [vmem:[%s1758 + $0x78] sm:%s1751]
                %1791 = vst [vmem:[%s1759 + $0xf0] sm:%s1751] %v1790
              $region189: #{fused_linear_forward.2} parent=183 // loop_footer
                %s1757 = sadd.s32 1, %s1753
              $region190: #{fused_linear_forward.2} parent=183 // loop_footer_branch
                %1752 = sbr.rel target = $region186
              $region191: #{fused_linear_forward.2} parent=183 // loop_exit
                _
            $region184: #{fused_linear_forward.2} parent=175 // pred_fallthru
              _
          $region176: #{fused_linear_forward.2} parent=171 // pred_fallthru
            _
          %1836 = vnop
        $region172: #{fused_linear_forward.2} parent=147 // pred_fallthru
          _
        // Predicated region
        $region207: #{fused_linear_forward.2} parent=147 // pred_check
          %p1837 = pneg %p221
        $region208: #{fused_linear_forward.2} parent=147 // pred_check_branch
          %1839 = sbr.rel (%p1837) target = $region210
        $region209: #{fused_linear_forward.2} parent=147 // pred_region
          %s1840 = smul.u32 16, %s25
          %s1841 = smul.addr %s1840, 2
          %s1842 = sadd.s32 %s26, %s1841
          %s1843 = smul.addr %s1842, 8
          %s1844 = scalar_lea.vmem %s6, %s1843
          // Predicated region
          $region211: #{fused_linear_forward.2} parent=209 // pred_check
            _
          $region212: #{fused_linear_forward.2} parent=209 // pred_check_branch
            %1846 = sbr.rel (0) target = $region214
          $region213: #{fused_linear_forward.2} parent=209 // pred_region
            // Predicated region
            $region215: #{fused_linear_forward.2} parent=213 // pred_check
              _
            $region216: #{fused_linear_forward.2} parent=213 // pred_check_branch
              %1848 = sbr.rel (0) target = $region218
            $region217: #{fused_linear_forward.2} parent=213 // pred_region
              // Predicated region
              $region230: #{fused_linear_forward.2} parent=217 // pred_check
                _
              $region231: #{fused_linear_forward.2} parent=217 // pred_check_branch
                %1894 = sbr.rel (0) target = $region233
              $region232: #{fused_linear_forward.2} parent=217 // pred_region
                loop: start=0, step=1, limit=1
                $region234: #{fused_linear_forward.2} parent=232 // loop_pre_header
                  _
                $region235: #{fused_linear_forward.2} parent=232 // loop_header
                  %s1896 = sphi 0, %s1900
                  %p1897 = scmp.ge.s32.totalorder %s1896, 1
                  %s1901 = sphi %s1719, %s1719
                  %s1902 = sphi %s1844, %s1844
                $region236: #{fused_linear_forward.2} parent=232 // loop_header_branch
                  %1899 = sbr.rel (%p1897) target = $region240
                $region237: #{fused_linear_forward.2} parent=232 // loop_body
                  %v1903 = vld [vmem:[%s1901] sm:$0xff]
                  %1904 = vst [vmem:[%s1902] sm:$0xff] %v1903
                  %v1905 = vld [vmem:[%s1901 + $0x8] sm:$0xff]
                  %1906 = vst [vmem:[%s1902 + $0x10] sm:$0xff] %v1905
                  %v1907 = vld [vmem:[%s1901 + $0x10] sm:$0xff]
                  %1908 = vst [vmem:[%s1902 + $0x20] sm:$0xff] %v1907
                  %v1909 = vld [vmem:[%s1901 + $0x18] sm:$0xff]
                  %1910 = vst [vmem:[%s1902 + $0x30] sm:$0xff] %v1909
                  %v1911 = vld [vmem:[%s1901 + $0x20] sm:$0xff]
                  %1912 = vst [vmem:[%s1902 + $0x40] sm:$0xff] %v1911
                  %v1913 = vld [vmem:[%s1901 + $0x28] sm:$0xff]
                  %1914 = vst [vmem:[%s1902 + $0x50] sm:$0xff] %v1913
                  %v1915 = vld [vmem:[%s1901 + $0x30] sm:$0xff]
                  %1916 = vst [vmem:[%s1902 + $0x60] sm:$0xff] %v1915
                  %v1917 = vld [vmem:[%s1901 + $0x38] sm:$0xff]
                  %1918 = vst [vmem:[%s1902 + $0x70] sm:$0xff] %v1917
                  %v1919 = vld [vmem:[%s1901 + $0x40] sm:$0xff]
                  %1920 = vst [vmem:[%s1902 + $0x80] sm:$0xff] %v1919
                  %v1921 = vld [vmem:[%s1901 + $0x48] sm:$0xff]
                  %1922 = vst [vmem:[%s1902 + $0x90] sm:$0xff] %v1921
                  %v1923 = vld [vmem:[%s1901 + $0x50] sm:$0xff]
                  %1924 = vst [vmem:[%s1902 + $0xa0] sm:$0xff] %v1923
                  %v1925 = vld [vmem:[%s1901 + $0x58] sm:$0xff]
                  %1926 = vst [vmem:[%s1902 + $0xb0] sm:$0xff] %v1925
                  %v1927 = vld [vmem:[%s1901 + $0x60] sm:$0xff]
                  %1928 = vst [vmem:[%s1902 + $0xc0] sm:$0xff] %v1927
                  %v1929 = vld [vmem:[%s1901 + $0x68] sm:$0xff]
                  %1930 = vst [vmem:[%s1902 + $0xd0] sm:$0xff] %v1929
                  %v1931 = vld [vmem:[%s1901 + $0x70] sm:$0xff]
                  %1932 = vst [vmem:[%s1902 + $0xe0] sm:$0xff] %v1931
                  %v1933 = vld [vmem:[%s1901 + $0x78] sm:$0xff]
                  %1934 = vst [vmem:[%s1902 + $0xf0] sm:$0xff] %v1933
                $region238: #{fused_linear_forward.2} parent=232 // loop_footer
                  %s1900 = sadd.s32 1, %s1896
                $region239: #{fused_linear_forward.2} parent=232 // loop_footer_branch
                  %1895 = sbr.rel target = $region235
                $region240: #{fused_linear_forward.2} parent=232 // loop_exit
                  _
              $region233: #{fused_linear_forward.2} parent=217 // pred_fallthru
                _
              // Predicated region
              $region241: #{fused_linear_forward.2} parent=217 // pred_check
                _
              $region242: #{fused_linear_forward.2} parent=217 // pred_check_branch
                %1936 = sbr.rel target = $region244
              $region243: #{fused_linear_forward.2} parent=217 // pred_region
                _
              $region244: #{fused_linear_forward.2} parent=217 // pred_fallthru
                _
            $region218: #{fused_linear_forward.2} parent=213 // pred_fallthru
              _
            // Predicated region
            $region219: #{fused_linear_forward.2} parent=213 // pred_check
              _
            $region220: #{fused_linear_forward.2} parent=213 // pred_check_branch
              %1850 = sbr.rel target = $region222
            $region221: #{fused_linear_forward.2} parent=213 // pred_region
              %s1852 = ssub.s32 256, 1
              loop: start=0, step=1, limit=1
              $region223: #{fused_linear_forward.2} parent=221 // loop_pre_header
                _
              $region224: #{fused_linear_forward.2} parent=221 // loop_header
                %s1854 = sphi 0, %s1858
                %p1855 = scmp.ge.s32.totalorder %s1854, 1
                %s1859 = sphi %s1719, %s1719
                %s1860 = sphi %s1844, %s1844
              $region225: #{fused_linear_forward.2} parent=221 // loop_header_branch
                %1857 = sbr.rel (%p1855) target = $region229
              $region226: #{fused_linear_forward.2} parent=221 // loop_body
                %v1861 = vld [vmem:[%s1859] sm:%s1852]
                %1862 = vst [vmem:[%s1860] sm:%s1852] %v1861
                %v1863 = vld [vmem:[%s1859 + $0x8] sm:%s1852]
                %1864 = vst [vmem:[%s1860 + $0x10] sm:%s1852] %v1863
                %v1865 = vld [vmem:[%s1859 + $0x10] sm:%s1852]
                %1866 = vst [vmem:[%s1860 + $0x20] sm:%s1852] %v1865
                %v1867 = vld [vmem:[%s1859 + $0x18] sm:%s1852]
                %1868 = vst [vmem:[%s1860 + $0x30] sm:%s1852] %v1867
                %v1869 = vld [vmem:[%s1859 + $0x20] sm:%s1852]
                %1870 = vst [vmem:[%s1860 + $0x40] sm:%s1852] %v1869
                %v1871 = vld [vmem:[%s1859 + $0x28] sm:%s1852]
                %1872 = vst [vmem:[%s1860 + $0x50] sm:%s1852] %v1871
                %v1873 = vld [vmem:[%s1859 + $0x30] sm:%s1852]
                %1874 = vst [vmem:[%s1860 + $0x60] sm:%s1852] %v1873
                %v1875 = vld [vmem:[%s1859 + $0x38] sm:%s1852]
                %1876 = vst [vmem:[%s1860 + $0x70] sm:%s1852] %v1875
                %v1877 = vld [vmem:[%s1859 + $0x40] sm:%s1852]
                %1878 = vst [vmem:[%s1860 + $0x80] sm:%s1852] %v1877
                %v1879 = vld [vmem:[%s1859 + $0x48] sm:%s1852]
                %1880 = vst [vmem:[%s1860 + $0x90] sm:%s1852] %v1879
                %v1881 = vld [vmem:[%s1859 + $0x50] sm:%s1852]
                %1882 = vst [vmem:[%s1860 + $0xa0] sm:%s1852] %v1881
                %v1883 = vld [vmem:[%s1859 + $0x58] sm:%s1852]
                %1884 = vst [vmem:[%s1860 + $0xb0] sm:%s1852] %v1883
                %v1885 = vld [vmem:[%s1859 + $0x60] sm:%s1852]
                %1886 = vst [vmem:[%s1860 + $0xc0] sm:%s1852] %v1885
                %v1887 = vld [vmem:[%s1859 + $0x68] sm:%s1852]
                %1888 = vst [vmem:[%s1860 + $0xd0] sm:%s1852] %v1887
                %v1889 = vld [vmem:[%s1859 + $0x70] sm:%s1852]
                %1890 = vst [vmem:[%s1860 + $0xe0] sm:%s1852] %v1889
                %v1891 = vld [vmem:[%s1859 + $0x78] sm:%s1852]
                %1892 = vst [vmem:[%s1860 + $0xf0] sm:%s1852] %v1891
              $region227: #{fused_linear_forward.2} parent=221 // loop_footer
                %s1858 = sadd.s32 1, %s1854
              $region228: #{fused_linear_forward.2} parent=221 // loop_footer_branch
                %1853 = sbr.rel target = $region224
              $region229: #{fused_linear_forward.2} parent=221 // loop_exit
                _
            $region222: #{fused_linear_forward.2} parent=213 // pred_fallthru
              _
          $region214: #{fused_linear_forward.2} parent=209 // pred_fallthru
            _
          %1937 = vnop
        $region210: #{fused_linear_forward.2} parent=147 // pred_fallthru
          _
        // Predicated region
        $region245: #{fused_linear_forward.2} parent=147 // pred_check
          %p1938 = pneg %p249
        $region246: #{fused_linear_forward.2} parent=147 // pred_check_branch
          %1940 = sbr.rel (%p1938) target = $region248
        $region247: #{fused_linear_forward.2} parent=147 // pred_region
          _
        $region248: #{fused_linear_forward.2} parent=147 // pred_fallthru
          _
        // Predicated region
        $region249: #{fused_linear_forward.2} parent=147 // pred_check
          %p1941 = pneg %p277
        $region250: #{fused_linear_forward.2} parent=147 // pred_check_branch
          %1943 = sbr.rel (%p1941) target = $region252
        $region251: #{fused_linear_forward.2} parent=147 // pred_region
          _
        $region252: #{fused_linear_forward.2} parent=147 // pred_fallthru
          _
      $region148: #{fused_linear_forward.2} parent=5 // pred_fallthru
        _
      %p1944 = scmp.le.s32.totalorder 2, %s15
      // Predicated region
      $region253: #{fused_linear_forward.2} parent=5 // pred_check
        %p1945 = pneg %p1944
      $region254: #{fused_linear_forward.2} parent=5 // pred_check_branch
        %1947 = sbr.rel (%p1945) target = $region256
      $region255: #{fused_linear_forward.2} parent=5 // pred_region
        %s1948 = ssub.s32 %s15, 2
        // Predicated region
        $region257: #{fused_linear_forward.2} parent=255 // pred_check
          %p1949 = pneg %p199
        $region258: #{fused_linear_forward.2} parent=255 // pred_check_branch
          %1951 = sbr.rel (%p1949) target = $region260
        $region259: #{fused_linear_forward.2} parent=255 // pred_region
          %s1952 = sand.u32 %s184, 1
          %s1953 = sand.u32 %s184, 1
          %s1954 = smul.addr %s1953, 128
          %s1955 = scalar_lea.vmem [#allocation5], %s1954
        $region260: #{fused_linear_forward.2} parent=255 // pred_fallthru
          _
        // Predicated region
        $region261: #{fused_linear_forward.2} parent=255 // pred_check
          %p1956 = pneg %p227
        $region262: #{fused_linear_forward.2} parent=255 // pred_check_branch
          %1958 = sbr.rel (%p1956) target = $region264
        $region263: #{fused_linear_forward.2} parent=255 // pred_region
          %s1959 = sand.u32 %s212, 1
          %s1960 = sand.u32 %s212, 1
          %s1961 = smul.addr %s1960, 128
          %s1962 = scalar_lea.vmem [#allocation6], %s1961
        $region264: #{fused_linear_forward.2} parent=255 // pred_fallthru
          _
        // Predicated region
        $region265: #{fused_linear_forward.2} parent=255 // pred_check
          %p1963 = pneg %p255
        $region266: #{fused_linear_forward.2} parent=255 // pred_check_branch
          %1965 = sbr.rel (%p1963) target = $region268
        $region267: #{fused_linear_forward.2} parent=255 // pred_region
          %p1966 = scmp.lt.s32.totalorder %s28, 1
          %s1967 = scalar_select %p1966, %s28, 1
          %p1968 = scmp.lt.s32.totalorder %s29, 1
          %s1969 = scalar_select %p1968, %s29, 1
          %s1970 = smul.addr %s1967, 2
          %s1971 = sadd.s32 %s1969, %s1970
          %s1972 = smul.addr %s1971, 8
          %s1973 = scalar_lea.vmem %s7, %s1972
        $region268: #{fused_linear_forward.2} parent=255 // pred_fallthru
          _
        // Predicated region
        $region269: #{fused_linear_forward.2} parent=255 // pred_check
          %p1974 = pneg %p283
        $region270: #{fused_linear_forward.2} parent=255 // pred_check_branch
          %1976 = sbr.rel (%p1974) target = $region272
        $region271: #{fused_linear_forward.2} parent=255 // pred_region
          %p1977 = scmp.lt.s32.totalorder %s28, 1
          %s1978 = scalar_select %p1977, %s28, 1
          %p1979 = scmp.lt.s32.totalorder %s29, 1
          %s1980 = scalar_select %p1979, %s29, 1
          %s1981 = smul.addr %s1978, 2
          %s1982 = sadd.s32 %s1980, %s1981
          %s1983 = smul.addr %s1982, 8
          %s1984 = scalar_lea.vmem %s8, %s1983
        $region272: #{fused_linear_forward.2} parent=255 // pred_fallthru
          _
      $region256: #{fused_linear_forward.2} parent=5 // pred_fallthru
        _
    $region6: #{fused_linear_forward.2} parent=1 // loop_footer
      %s19 = sadd.s32 1, %s15
    $region7: #{fused_linear_forward.2} parent=1 // loop_footer_branch
      %14 = sbr.rel target = $region3
    $region8: #{fused_linear_forward.2} parent=1 // loop_exit
      _

</llo_original>
